<compile_context>
chip_gen: v6e
topology: v6e:2x2x1
jax: 0.10.0
libtpu: 0.0.40
codegen_flags: <defaults>
</compile_context>

<pallas_src>
import functools

import jax
import jax.numpy as jnp
from jax.experimental import pallas as pl
from jax.experimental.pallas import tpu as pltpu

DEPTH = 5
LN_EPS = 1e-5


# ----------------------------------------------------------------------------
# Fused Pallas kernel: the whole dense block for one batch tile.
# ----------------------------------------------------------------------------
def dense_block_kernel(x_ref, w0_ref, w1_ref, w2_ref, w3_ref, w4_ref,
                       alpha_ref, ln_ref, mask_ref, avg_ref,
                       o_ref, act_ref, *, C, W, L, eps):
    # x_ref    : (1, C, L)          B_TILE lane-concatenated images, lane-dense
    # w*_ref   : (6*C, (i+1)*C)     conv weights, taps stacked along M (t=kh*3+kw)
    # alpha_ref: (C, DEPTH)         per-layer PReLU alpha  (conv bias is dead:
    #                               constant over the LN axis -> cancelled exactly)
    # ln_ref   : (2*DEPTH, L)       row 2i = gamma_i tiled, row 2i+1 = beta_i tiled
    # mask_ref : (6*DEPTH, L)       0/1 conv-tap boundary masks, row i*6 + kh*3+kw
    # avg_ref  : (L, L)             block-averaging matrix: 1/W iff same W-group
    # o_ref    : (1, C, L)          output of the last layer
    # act_ref  : VMEM (DEPTH*C, L)  growing activation (x + all previous tmp_i)
    w_refs = (w0_ref, w1_ref, w2_ref, w3_ref, w4_ref)

    # Layer-i input is [tmp_{i-1}, ..., tmp_0, x]: keep x in the highest C rows of
    # the scratch and write every new tmp just below the current base, so each
    # layer reads ONE contiguous (cin, L) slice (this is the channel "concat").
    act_ref[(DEPTH - 1) * C:DEPTH * C, :] = x_ref[0]

    for i in range(DEPTH):
        dil = 2 ** i
        base = (DEPTH - 1 - i) * C
        x_in = act_ref[base:DEPTH * C, :]                    # (cin, L)

        # Single MXU matmul per layer: (6*C, cin) x (cin, L) -> all 6 per-tap
        # partial outputs stacked along M.
        p = jnp.dot(w_refs[i][...], x_in, preferred_element_type=jnp.float32)

        # conv(2,3, dilation=(dil,1)) tap (kh,kw) reads x[c, h-(1-kh)*dil, w+kw-1]
        # (zero outside); realized as a cyclic roll of the OUTPUT slice plus a
        # precomputed 0/1 boundary mask (lane-only ops commute with the matmul).
        y = p[4 * C:5 * C, :]                                # identity tap kh=1,kw=1
        for kh in range(2):
            for kw in range(3):
                if kh == 1 and kw == 1:
                    continue
                t = kh * 3 + kw
                shift = ((1 - kh) * dil * W - (kw - 1)) % L
                pt = pltpu.roll(p[t * C:(t + 1) * C, :], shift=shift, axis=1)
                y = y + pt * mask_ref[i * 6 + t:i * 6 + t + 1, :]

        # LayerNorm over W (per (channel, h) group of W lanes): group means via
        # MXU matmuls against the constant averaging matrix; two-pass variance.
        mean = jnp.dot(y, avg_ref[...], preferred_element_type=jnp.float32)
        d = y - mean
        var = jnp.dot(d * d, avg_ref[...], preferred_element_type=jnp.float32)
        yn = d * jax.lax.rsqrt(var + eps)
        yn = yn * ln_ref[2 * i:2 * i + 1, :] + ln_ref[2 * i + 1:2 * i + 2, :]

        # Per-channel PReLU.
        alpha = alpha_ref[:, i:i + 1]
        out_i = jnp.where(yn > 0, yn, alpha * yn)

        if i < DEPTH - 1:
            act_ref[base - C:base, :] = out_i                # prepend tmp_i (concat)
        else:
            o_ref[0] = out_i.astype(o_ref.dtype)


# ----------------------------------------------------------------------------
# Wrapper: parameter packing + a single pallas_call over the batch.
# ----------------------------------------------------------------------------
def dense_block_forward(x, params, *, b_tile=1):
    N, C, H, W = x.shape
    HW = H * W
    assert N % b_tile == 0, "batch must be divisible by b_tile"
    NB = N // b_tile
    L = b_tile * HW

    # Lane-concatenate b_tile images per grid step (channel-major, lane-dense).
    x_flat = (x.reshape(NB, b_tile, C, HW)
               .transpose(0, 2, 1, 3)
               .reshape(NB, C, L))

    # ---- pack parameters (host-side glue; constant-folded under jit) --------
    w_alls, alpha_cols, ln_rows = [], [], []
    for i in range(DEPTH):
        w, b, g, beta, a = params[i]          # conv bias b cancels in LayerNorm
        cout, cin = w.shape[0], w.shape[1]
        # Taps stacked along M: rows t*C:(t+1)*C hold w[:, :, kh, kw].
        w_alls.append(jnp.transpose(w, (2, 3, 0, 1)).reshape(6 * cout, cin))
        alpha_cols.append(a)
        ln_rows.append(jnp.tile(g, b_tile * H))      # gamma tiled -> (L,)
        ln_rows.append(jnp.tile(beta, b_tile * H))
    alpha = jnp.stack(alpha_cols, axis=1)     # (C, DEPTH)
    ln = jnp.stack(ln_rows, axis=0)           # (2*DEPTH, L)

    # ---- constant masks / averaging matrix (shape/dilation-derived only) ----
    lane = jnp.arange(L)
    w_idx = lane % W
    h_idx = (lane % HW) // W
    mask_rows = []
    for i in range(DEPTH):
        dil = 2 ** i
        for kh in range(2):
            for kw in range(3):
                ok = jnp.ones((L,), jnp.bool_)
                if kw == 0:
                    ok = ok & (w_idx >= 1)           # reads w-1
                if kw == 2:
                    ok = ok & (w_idx <= W - 2)       # reads w+1
                if kh == 0:
                    ok = ok & (h_idx >= dil)         # reads h-dil (causal pad)
                mask_rows.append(ok.astype(jnp.float32))
    masks = jnp.stack(mask_rows, axis=0)             # (6*DEPTH, L)

    group = lane // W                                # same group <=> same (img, h)
    avg = (group[:, None] == group[None, :]).astype(jnp.float32) / W   # (L, L)

    kernel = functools.partial(dense_block_kernel, C=C, W=W, L=L, eps=LN_EPS)
    const2 = lambda n: (0, 0)

    out = pl.pallas_call(
        kernel,
        out_shape=jax.ShapeDtypeStruct((NB, C, L), x.dtype),
        grid=(NB,),
        in_specs=[pl.BlockSpec((1, C, L), lambda n: (n, 0, 0))]
                 + [pl.BlockSpec(w_alls[i].shape, const2) for i in range(DEPTH)]
                 + [pl.BlockSpec(alpha.shape, const2),
                    pl.BlockSpec(ln.shape, const2),
                    pl.BlockSpec(masks.shape, const2),
                    pl.BlockSpec(avg.shape, const2)],
        out_specs=pl.BlockSpec((1, C, L), lambda n: (n, 0, 0)),
        scratch_shapes=[pltpu.VMEM((DEPTH * C, L), jnp.float32)],   # growing concat
        compiler_params=pltpu.CompilerParams(dimension_semantics=("parallel",)),
    )(x_flat, *w_alls, alpha, ln, masks, avg)

    return (out.reshape(NB, C, b_tile, HW)
               .transpose(0, 2, 1, 3)
               .reshape(N, C, H, W))


# ----------------------------------------------------------------------------
# Pure-JAX reference (for correctness check only).
# ----------------------------------------------------------------------------
def ref_layer(o, w, b, g, beta, a, dil):
    xpad = jnp.pad(o, ((0, 0), (0, 0), (dil, 0), (1, 1)))
    y = jax.lax.conv_general_dilated(
        xpad, w, window_strides=(1, 1), padding="VALID",
        rhs_dilation=(dil, 1), dimension_numbers=("NCHW", "OIHW", "NCHW"))
    y = y + b.reshape(1, -1, 1, 1)
    mean = jnp.mean(y, axis=-1, keepdims=True)
    var = jnp.mean((y - mean) ** 2, axis=-1, keepdims=True)
    yn = (y - mean) / jnp.sqrt(var + LN_EPS)
    yn = yn * g.reshape(1, 1, 1, -1) + beta.reshape(1, 1, 1, -1)
    return jnp.where(yn > 0, yn, a.reshape(1, -1, 1, 1) * yn)


def dense_block_ref(x, params):
    o = x
    tmp = None
    for i in range(DEPTH):
        w, b, g, beta, a = params[i]
        tmp = ref_layer(o, w, b, g, beta, a, dil=2 ** i)
        o = jnp.concatenate([tmp, o], axis=1)
    return tmp


# ----------------------------------------------------------------------------
# Deterministic parameter init (shapes follow the module's __init__).
# ----------------------------------------------------------------------------
def init_params(key, in_channels, input_size):
    params = []
    for i in range(DEPTH):
        cin = in_channels * (i + 1)
        key, k1, k2, k3, k4 = jax.random.split(key, 5)
        scale = 1.0 / jnp.sqrt(jnp.float32(cin * 2 * 3))
        w = jax.random.normal(k1, (in_channels, cin, 2, 3), jnp.float32) * scale
        b = jax.random.normal(k2, (in_channels,), jnp.float32) * 0.1
        g = 1.0 + 0.1 * jax.random.normal(k3, (input_size,), jnp.float32)
        beta = 0.1 * jax.random.normal(k4, (input_size,), jnp.float32)
        a = jnp.full((in_channels,), 0.25, jnp.float32)   # PReLU default init
        params.append((w, b, g, beta, a))
    return params


if __name__ == "__main__":
    N, C, H, W = 2, 8, 16, 16          # batch, in_channels, H, W (input_size = W)
    key = jax.random.PRNGKey(0)
    key, kx = jax.random.split(key)
    x = jax.random.normal(kx, (N, C, H, W), jnp.float32)
    params = init_params(key, in_channels=C, input_size=W)

    # b_tile=1 keeps the parallel grid extent at 2 (one step per v7x TensorCore);
    # raise b_tile at larger batch to amortize per-step overhead.
    fwd = jax.jit(functools.partial(dense_block_forward, b_tile=1))
    out = jax.block_until_ready(fwd(x, params))

    ref = dense_block_ref(x, params)
    assert out.shape == (N, C, H, W), out.shape
    if not jnp.allclose(out, ref, atol=1e-4, rtol=1e-4):
        raise AssertionError("Pallas output does not match JAX reference")
    print("KERNEL_OK")
</pallas_src>

<mosaic_0001>
module attributes {stable_mosaic.version = 11 : i64} {
  func.func @dense_block_kernel(%arg0: i32, %arg1: memref<1x8x256xf32, #tpu.memory_space<vmem>>, %arg2: memref<48x8xf32, #tpu.memory_space<vmem>>, %arg3: memref<48x16xf32, #tpu.memory_space<vmem>>, %arg4: memref<48x24xf32, #tpu.memory_space<vmem>>, %arg5: memref<48x32xf32, #tpu.memory_space<vmem>>, %arg6: memref<48x40xf32, #tpu.memory_space<vmem>>, %arg7: memref<8x5xf32, #tpu.memory_space<vmem>>, %arg8: memref<10x256xf32, #tpu.memory_space<vmem>>, %arg9: memref<30x256xf32, #tpu.memory_space<vmem>>, %arg10: memref<256x256xf32, #tpu.memory_space<vmem>>, %arg11: memref<1x8x256xf32, #tpu.memory_space<vmem>>, %arg12: memref<40x256xf32, #tpu.memory_space<vmem>>) attributes {dimension_semantics = [#tpu.dimension_semantics<parallel>], iteration_bounds = array<i64: 2>, scalar_prefetch = 0 : i64, scratch_operands = 1 : i64, tpu.core_type = #tpu.core_type<tc>, window_params = [{transform_indices = @transform_0, window_bounds = array<i64: 1, 8, 256>}, {pipeline_mode = #tpu.pipeline_mode<synchronous>, transform_indices = @transform_1, window_bounds = array<i64: 48, 8>}, {pipeline_mode = #tpu.pipeline_mode<synchronous>, transform_indices = @transform_2, window_bounds = array<i64: 48, 16>}, {pipeline_mode = #tpu.pipeline_mode<synchronous>, transform_indices = @transform_3, window_bounds = array<i64: 48, 24>}, {pipeline_mode = #tpu.pipeline_mode<synchronous>, transform_indices = @transform_4, window_bounds = array<i64: 48, 32>}, {pipeline_mode = #tpu.pipeline_mode<synchronous>, transform_indices = @transform_5, window_bounds = array<i64: 48, 40>}, {pipeline_mode = #tpu.pipeline_mode<synchronous>, transform_indices = @transform_6, window_bounds = array<i64: 8, 5>}, {pipeline_mode = #tpu.pipeline_mode<synchronous>, transform_indices = @transform_7, window_bounds = array<i64: 10, 256>}, {pipeline_mode = #tpu.pipeline_mode<synchronous>, transform_indices = @transform_8, window_bounds = array<i64: 30, 256>}, {pipeline_mode = #tpu.pipeline_mode<synchronous>, transform_indices = @transform_9, window_bounds = array<i64: 256, 256>}, {transform_indices = @transform_10, window_bounds = array<i64: 1, 8, 256>}]} {
    %c0 = arith.constant 0 : index
    %c0_0 = arith.constant 0 : index
    %c0_1 = arith.constant 0 : index
    %0 = vector.load %arg1[%c0, %c0_0, %c0_1] : memref<1x8x256xf32, #tpu.memory_space<vmem>>, vector<1x8x256xf32>
    %1 = vector.shape_cast %0 : vector<1x8x256xf32> to vector<8x256xf32>
    %c32 = arith.constant 32 : index
    %c0_2 = arith.constant 0 : index
    %2 = vector.load %arg12[%c32, %c0_2] : memref<40x256xf32, #tpu.memory_space<vmem>>, vector<8x256xf32>
    tpu.vector_store %arg12[%c32, %c0_2], %1 {strides = array<i32>} : memref<40x256xf32, #tpu.memory_space<vmem>>, vector<8x256xf32>,
    %c32_3 = arith.constant 32 : index
    %c0_4 = arith.constant 0 : index
    %3 = vector.load %arg12[%c32_3, %c0_4] : memref<40x256xf32, #tpu.memory_space<vmem>>, vector<8x256xf32>
    %c0_5 = arith.constant 0 : index
    %c0_6 = arith.constant 0 : index
    %4 = vector.load %arg2[%c0_5, %c0_6] : memref<48x8xf32, #tpu.memory_space<vmem>>, vector<48x8xf32>
    %cst = arith.constant dense<0.000000e+00> : vector<48x256xf32>
    %5 = tpu.matmul %4, %3, %cst {dimension_numbers = #tpu.dot_dimension_numbers<[1], [0], [0], [1], [0, 0, 1, 1], [], []>} : vector<48x8xf32>, vector<8x256xf32>, vector<48x256xf32> -> vector<48x256xf32>
    %6 = vector.extract_strided_slice %5 {offsets = [32, 0], sizes = [8, 256], strides = [1, 1]} : vector<48x256xf32> to vector<8x256xf32>
    %7 = vector.extract_strided_slice %5 {offsets = [0, 0], sizes = [8, 256], strides = [1, 1]} : vector<48x256xf32> to vector<8x256xf32>
    %c17_i32 = arith.constant 17 : i32
    %8 = tpu.dynamic_rotate %7 by %c17_i32 dim 1 : vector<8x256xf32>, i32 -> vector<8x256xf32>
    %c0_7 = arith.constant 0 : index
    %c0_8 = arith.constant 0 : index
    %9 = vector.load %arg9[%c0_7, %c0_8] : memref<30x256xf32, #tpu.memory_space<vmem>>, vector<1x256xf32>
    %10 = vector.broadcast %9 : vector<1x256xf32> to vector<8x256xf32>
    %11 = arith.mulf %8, %10 : vector<8x256xf32>
    %12 = arith.addf %6, %11 : vector<8x256xf32>
    %13 = vector.extract_strided_slice %5 {offsets = [8, 0], sizes = [8, 256], strides = [1, 1]} : vector<48x256xf32> to vector<8x256xf32>
    %c16_i32 = arith.constant 16 : i32
    %14 = tpu.dynamic_rotate %13 by %c16_i32 dim 1 : vector<8x256xf32>, i32 -> vector<8x256xf32>
    %c1 = arith.constant 1 : index
    %c0_9 = arith.constant 0 : index
    %15 = vector.load %arg9[%c1, %c0_9] : memref<30x256xf32, #tpu.memory_space<vmem>>, vector<1x256xf32>
    %16 = vector.broadcast %15 : vector<1x256xf32> to vector<8x256xf32>
    %17 = arith.mulf %14, %16 : vector<8x256xf32>
    %18 = arith.addf %12, %17 : vector<8x256xf32>
    %19 = vector.extract_strided_slice %5 {offsets = [16, 0], sizes = [8, 256], strides = [1, 1]} : vector<48x256xf32> to vector<8x256xf32>
    %c15_i32 = arith.constant 15 : i32
    %20 = tpu.dynamic_rotate %19 by %c15_i32 dim 1 : vector<8x256xf32>, i32 -> vector<8x256xf32>
    %c2 = arith.constant 2 : index
    %c0_10 = arith.constant 0 : index
    %21 = vector.load %arg9[%c2, %c0_10] : memref<30x256xf32, #tpu.memory_space<vmem>>, vector<1x256xf32>
    %22 = vector.broadcast %21 : vector<1x256xf32> to vector<8x256xf32>
    %23 = arith.mulf %20, %22 : vector<8x256xf32>
    %24 = arith.addf %18, %23 : vector<8x256xf32>
    %25 = vector.extract_strided_slice %5 {offsets = [24, 0], sizes = [8, 256], strides = [1, 1]} : vector<48x256xf32> to vector<8x256xf32>
    %c1_i32 = arith.constant 1 : i32
    %26 = tpu.dynamic_rotate %25 by %c1_i32 dim 1 : vector<8x256xf32>, i32 -> vector<8x256xf32>
    %c3 = arith.constant 3 : index
    %c0_11 = arith.constant 0 : index
    %27 = vector.load %arg9[%c3, %c0_11] : memref<30x256xf32, #tpu.memory_space<vmem>>, vector<1x256xf32>
    %28 = vector.broadcast %27 : vector<1x256xf32> to vector<8x256xf32>
    %29 = arith.mulf %26, %28 : vector<8x256xf32>
    %30 = arith.addf %24, %29 : vector<8x256xf32>
    %31 = vector.extract_strided_slice %5 {offsets = [40, 0], sizes = [8, 256], strides = [1, 1]} : vector<48x256xf32> to vector<8x256xf32>
    %c255_i32 = arith.constant 255 : i32
    %32 = tpu.dynamic_rotate %31 by %c255_i32 dim 1 : vector<8x256xf32>, i32 -> vector<8x256xf32>
    %c5 = arith.constant 5 : index
    %c0_12 = arith.constant 0 : index
    %33 = vector.load %arg9[%c5, %c0_12] : memref<30x256xf32, #tpu.memory_space<vmem>>, vector<1x256xf32>
    %34 = vector.broadcast %33 : vector<1x256xf32> to vector<8x256xf32>
    %35 = arith.mulf %32, %34 : vector<8x256xf32>
    %36 = arith.addf %30, %35 : vector<8x256xf32>
    %c0_13 = arith.constant 0 : index
    %c0_14 = arith.constant 0 : index
    %37 = vector.load %arg10[%c0_13, %c0_14] : memref<256x256xf32, #tpu.memory_space<vmem>>, vector<256x256xf32>
    %cst_15 = arith.constant dense<0.000000e+00> : vector<8x256xf32>
    %38 = tpu.matmul %36, %37, %cst_15 {dimension_numbers = #tpu.dot_dimension_numbers<[1], [0], [0], [1], [0, 0, 1, 1], [], []>} : vector<8x256xf32>, vector<256x256xf32>, vector<8x256xf32> -> vector<8x256xf32>
    %39 = arith.subf %36, %38 : vector<8x256xf32>
    %40 = arith.mulf %39, %39 : vector<8x256xf32>
    %c0_16 = arith.constant 0 : index
    %c0_17 = arith.constant 0 : index
    %41 = vector.load %arg10[%c0_16, %c0_17] : memref<256x256xf32, #tpu.memory_space<vmem>>, vector<256x256xf32>
    %cst_18 = arith.constant dense<0.000000e+00> : vector<8x256xf32>
    %42 = tpu.matmul %40, %41, %cst_18 {dimension_numbers = #tpu.dot_dimension_numbers<[1], [0], [0], [1], [0, 0, 1, 1], [], []>} : vector<8x256xf32>, vector<256x256xf32>, vector<8x256xf32> -> vector<8x256xf32>
    %cst_19 = arith.constant 9.99999974E-6 : f32
    %43 = vector.broadcast %cst_19 : f32 to vector<8x256xf32>
    %44 = arith.addf %42, %43 : vector<8x256xf32>
    %45 = math.rsqrt %44 : vector<8x256xf32>
    %46 = arith.mulf %39, %45 : vector<8x256xf32>
    %c0_20 = arith.constant 0 : index
    %c0_21 = arith.constant 0 : index
    %47 = vector.load %arg8[%c0_20, %c0_21] : memref<10x256xf32, #tpu.memory_space<vmem>>, vector<1x256xf32>
    %48 = vector.broadcast %47 : vector<1x256xf32> to vector<8x256xf32>
    %49 = arith.mulf %46, %48 : vector<8x256xf32>
    %c1_22 = arith.constant 1 : index
    %c0_23 = arith.constant 0 : index
    %50 = vector.load %arg8[%c1_22, %c0_23] : memref<10x256xf32, #tpu.memory_space<vmem>>, vector<1x256xf32>
    %51 = vector.broadcast %50 : vector<1x256xf32> to vector<8x256xf32>
    %52 = arith.addf %49, %51 : vector<8x256xf32>
    %c0_24 = arith.constant 0 : index
    %c0_25 = arith.constant 0 : index
    %53 = vector.load %arg7[%c0_24, %c0_25] : memref<8x5xf32, #tpu.memory_space<vmem>>, vector<8x1xf32>
    %cst_26 = arith.constant 0.000000e+00 : f32
    %54 = vector.broadcast %cst_26 : f32 to vector<8x256xf32>
    %55 = arith.cmpf ogt, %52, %54 : vector<8x256xf32>
    %56 = vector.broadcast %53 : vector<8x1xf32> to vector<8x256xf32>
    %57 = arith.mulf %56, %52 : vector<8x256xf32>
    %58 = arith.select %55, %52, %57 : vector<8x256xi1>, vector<8x256xf32>
    %c24 = arith.constant 24 : index
    %c0_27 = arith.constant 0 : index
    %59 = vector.load %arg12[%c24, %c0_27] : memref<40x256xf32, #tpu.memory_space<vmem>>, vector<8x256xf32>
    tpu.vector_store %arg12[%c24, %c0_27], %58 {strides = array<i32>} : memref<40x256xf32, #tpu.memory_space<vmem>>, vector<8x256xf32>,
    %c24_28 = arith.constant 24 : index
    %c0_29 = arith.constant 0 : index
    %60 = vector.load %arg12[%c24_28, %c0_29] : memref<40x256xf32, #tpu.memory_space<vmem>>, vector<16x256xf32>
    %c0_30 = arith.constant 0 : index
    %c0_31 = arith.constant 0 : index
    %61 = vector.load %arg3[%c0_30, %c0_31] : memref<48x16xf32, #tpu.memory_space<vmem>>, vector<48x16xf32>
    %cst_32 = arith.constant dense<0.000000e+00> : vector<48x256xf32>
    %62 = tpu.matmul %61, %60, %cst_32 {dimension_numbers = #tpu.dot_dimension_numbers<[1], [0], [0], [1], [0, 0, 1, 1], [], []>} : vector<48x16xf32>, vector<16x256xf32>, vector<48x256xf32> -> vector<48x256xf32>
    %63 = vector.extract_strided_slice %62 {offsets = [32, 0], sizes = [8, 256], strides = [1, 1]} : vector<48x256xf32> to vector<8x256xf32>
    %64 = vector.extract_strided_slice %62 {offsets = [0, 0], sizes = [8, 256], strides = [1, 1]} : vector<48x256xf32> to vector<8x256xf32>
    %c33_i32 = arith.constant 33 : i32
    %65 = tpu.dynamic_rotate %64 by %c33_i32 dim 1 : vector<8x256xf32>, i32 -> vector<8x256xf32>
    %c6 = arith.constant 6 : index
    %c0_33 = arith.constant 0 : index
    %66 = vector.load %arg9[%c6, %c0_33] : memref<30x256xf32, #tpu.memory_space<vmem>>, vector<1x256xf32>
    %67 = vector.broadcast %66 : vector<1x256xf32> to vector<8x256xf32>
    %68 = arith.mulf %65, %67 : vector<8x256xf32>
    %69 = arith.addf %63, %68 : vector<8x256xf32>
    %70 = vector.extract_strided_slice %62 {offsets = [8, 0], sizes = [8, 256], strides = [1, 1]} : vector<48x256xf32> to vector<8x256xf32>
    %c32_i32 = arith.constant 32 : i32
    %71 = tpu.dynamic_rotate %70 by %c32_i32 dim 1 : vector<8x256xf32>, i32 -> vector<8x256xf32>
    %c7 = arith.constant 7 : index
    %c0_34 = arith.constant 0 : index
    %72 = vector.load %arg9[%c7, %c0_34] : memref<30x256xf32, #tpu.memory_space<vmem>>, vector<1x256xf32>
    %73 = vector.broadcast %72 : vector<1x256xf32> to vector<8x256xf32>
    %74 = arith.mulf %71, %73 : vector<8x256xf32>
    %75 = arith.addf %69, %74 : vector<8x256xf32>
    %76 = vector.extract_strided_slice %62 {offsets = [16, 0], sizes = [8, 256], strides = [1, 1]} : vector<48x256xf32> to vector<8x256xf32>
    %c31_i32 = arith.constant 31 : i32
    %77 = tpu.dynamic_rotate %76 by %c31_i32 dim 1 : vector<8x256xf32>, i32 -> vector<8x256xf32>
    %c8 = arith.constant 8 : index
    %c0_35 = arith.constant 0 : index
    %78 = vector.load %arg9[%c8, %c0_35] : memref<30x256xf32, #tpu.memory_space<vmem>>, vector<1x256xf32>
    %79 = vector.broadcast %78 : vector<1x256xf32> to vector<8x256xf32>
    %80 = arith.mulf %77, %79 : vector<8x256xf32>
    %81 = arith.addf %75, %80 : vector<8x256xf32>
    %82 = vector.extract_strided_slice %62 {offsets = [24, 0], sizes = [8, 256], strides = [1, 1]} : vector<48x256xf32> to vector<8x256xf32>
    %c1_i32_36 = arith.constant 1 : i32
    %83 = tpu.dynamic_rotate %82 by %c1_i32_36 dim 1 : vector<8x256xf32>, i32 -> vector<8x256xf32>
    %c9 = arith.constant 9 : index
    %c0_37 = arith.constant 0 : index
    %84 = vector.load %arg9[%c9, %c0_37] : memref<30x256xf32, #tpu.memory_space<vmem>>, vector<1x256xf32>
    %85 = vector.broadcast %84 : vector<1x256xf32> to vector<8x256xf32>
    %86 = arith.mulf %83, %85 : vector<8x256xf32>
    %87 = arith.addf %81, %86 : vector<8x256xf32>
    %88 = vector.extract_strided_slice %62 {offsets = [40, 0], sizes = [8, 256], strides = [1, 1]} : vector<48x256xf32> to vector<8x256xf32>
    %c255_i32_38 = arith.constant 255 : i32
    %89 = tpu.dynamic_rotate %88 by %c255_i32_38 dim 1 : vector<8x256xf32>, i32 -> vector<8x256xf32>
    %c11 = arith.constant 11 : index
    %c0_39 = arith.constant 0 : index
    %90 = vector.load %arg9[%c11, %c0_39] : memref<30x256xf32, #tpu.memory_space<vmem>>, vector<1x256xf32>
    %91 = vector.broadcast %90 : vector<1x256xf32> to vector<8x256xf32>
    %92 = arith.mulf %89, %91 : vector<8x256xf32>
    %93 = arith.addf %87, %92 : vector<8x256xf32>
    %c0_40 = arith.constant 0 : index
    %c0_41 = arith.constant 0 : index
    %94 = vector.load %arg10[%c0_40, %c0_41] : memref<256x256xf32, #tpu.memory_space<vmem>>, vector<256x256xf32>
    %cst_42 = arith.constant dense<0.000000e+00> : vector<8x256xf32>
    %95 = tpu.matmul %93, %94, %cst_42 {dimension_numbers = #tpu.dot_dimension_numbers<[1], [0], [0], [1], [0, 0, 1, 1], [], []>} : vector<8x256xf32>, vector<256x256xf32>, vector<8x256xf32> -> vector<8x256xf32>
    %96 = arith.subf %93, %95 : vector<8x256xf32>
    %97 = arith.mulf %96, %96 : vector<8x256xf32>
    %c0_43 = arith.constant 0 : index
    %c0_44 = arith.constant 0 : index
    %98 = vector.load %arg10[%c0_43, %c0_44] : memref<256x256xf32, #tpu.memory_space<vmem>>, vector<256x256xf32>
    %cst_45 = arith.constant dense<0.000000e+00> : vector<8x256xf32>
    %99 = tpu.matmul %97, %98, %cst_45 {dimension_numbers = #tpu.dot_dimension_numbers<[1], [0], [0], [1], [0, 0, 1, 1], [], []>} : vector<8x256xf32>, vector<256x256xf32>, vector<8x256xf32> -> vector<8x256xf32>
    %cst_46 = arith.constant 9.99999974E-6 : f32
    %100 = vector.broadcast %cst_46 : f32 to vector<8x256xf32>
    %101 = arith.addf %99, %100 : vector<8x256xf32>
    %102 = math.rsqrt %101 : vector<8x256xf32>
    %103 = arith.mulf %96, %102 : vector<8x256xf32>
    %c2_47 = arith.constant 2 : index
    %c0_48 = arith.constant 0 : index
    %104 = vector.load %arg8[%c2_47, %c0_48] : memref<10x256xf32, #tpu.memory_space<vmem>>, vector<1x256xf32>
    %105 = vector.broadcast %104 : vector<1x256xf32> to vector<8x256xf32>
    %106 = arith.mulf %103, %105 : vector<8x256xf32>
    %c3_49 = arith.constant 3 : index
    %c0_50 = arith.constant 0 : index
    %107 = vector.load %arg8[%c3_49, %c0_50] : memref<10x256xf32, #tpu.memory_space<vmem>>, vector<1x256xf32>
    %108 = vector.broadcast %107 : vector<1x256xf32> to vector<8x256xf32>
    %109 = arith.addf %106, %108 : vector<8x256xf32>
    %c0_51 = arith.constant 0 : index
    %c1_52 = arith.constant 1 : index
    %110 = vector.load %arg7[%c0_51, %c1_52] : memref<8x5xf32, #tpu.memory_space<vmem>>, vector<8x1xf32>
    %cst_53 = arith.constant 0.000000e+00 : f32
    %111 = vector.broadcast %cst_53 : f32 to vector<8x256xf32>
    %112 = arith.cmpf ogt, %109, %111 : vector<8x256xf32>
    %113 = vector.broadcast %110 : vector<8x1xf32> to vector<8x256xf32>
    %114 = arith.mulf %113, %109 : vector<8x256xf32>
    %115 = arith.select %112, %109, %114 : vector<8x256xi1>, vector<8x256xf32>
    %c16 = arith.constant 16 : index
    %c0_54 = arith.constant 0 : index
    %116 = vector.load %arg12[%c16, %c0_54] : memref<40x256xf32, #tpu.memory_space<vmem>>, vector<8x256xf32>
    tpu.vector_store %arg12[%c16, %c0_54], %115 {strides = array<i32>} : memref<40x256xf32, #tpu.memory_space<vmem>>, vector<8x256xf32>,
    %c16_55 = arith.constant 16 : index
    %c0_56 = arith.constant 0 : index
    %117 = vector.load %arg12[%c16_55, %c0_56] : memref<40x256xf32, #tpu.memory_space<vmem>>, vector<24x256xf32>
    %c0_57 = arith.constant 0 : index
    %c0_58 = arith.constant 0 : index
    %118 = vector.load %arg4[%c0_57, %c0_58] : memref<48x24xf32, #tpu.memory_space<vmem>>, vector<48x24xf32>
    %cst_59 = arith.constant dense<0.000000e+00> : vector<48x256xf32>
    %119 = tpu.matmul %118, %117, %cst_59 {dimension_numbers = #tpu.dot_dimension_numbers<[1], [0], [0], [1], [0, 0, 1, 1], [], []>} : vector<48x24xf32>, vector<24x256xf32>, vector<48x256xf32> -> vector<48x256xf32>
    %120 = vector.extract_strided_slice %119 {offsets = [32, 0], sizes = [8, 256], strides = [1, 1]} : vector<48x256xf32> to vector<8x256xf32>
    %121 = vector.extract_strided_slice %119 {offsets = [0, 0], sizes = [8, 256], strides = [1, 1]} : vector<48x256xf32> to vector<8x256xf32>
    %c65_i32 = arith.constant 65 : i32
    %122 = tpu.dynamic_rotate %121 by %c65_i32 dim 1 : vector<8x256xf32>, i32 -> vector<8x256xf32>
    %c12 = arith.constant 12 : index
    %c0_60 = arith.constant 0 : index
    %123 = vector.load %arg9[%c12, %c0_60] : memref<30x256xf32, #tpu.memory_space<vmem>>, vector<1x256xf32>
    %124 = vector.broadcast %123 : vector<1x256xf32> to vector<8x256xf32>
    %125 = arith.mulf %122, %124 : vector<8x256xf32>
    %126 = arith.addf %120, %125 : vector<8x256xf32>
    %127 = vector.extract_strided_slice %119 {offsets = [8, 0], sizes = [8, 256], strides = [1, 1]} : vector<48x256xf32> to vector<8x256xf32>
    %c64_i32 = arith.constant 64 : i32
    %128 = tpu.dynamic_rotate %127 by %c64_i32 dim 1 : vector<8x256xf32>, i32 -> vector<8x256xf32>
    %c13 = arith.constant 13 : index
    %c0_61 = arith.constant 0 : index
    %129 = vector.load %arg9[%c13, %c0_61] : memref<30x256xf32, #tpu.memory_space<vmem>>, vector<1x256xf32>
    %130 = vector.broadcast %129 : vector<1x256xf32> to vector<8x256xf32>
    %131 = arith.mulf %128, %130 : vector<8x256xf32>
    %132 = arith.addf %126, %131 : vector<8x256xf32>
    %133 = vector.extract_strided_slice %119 {offsets = [16, 0], sizes = [8, 256], strides = [1, 1]} : vector<48x256xf32> to vector<8x256xf32>
    %c63_i32 = arith.constant 63 : i32
    %134 = tpu.dynamic_rotate %133 by %c63_i32 dim 1 : vector<8x256xf32>, i32 -> vector<8x256xf32>
    %c14 = arith.constant 14 : index
    %c0_62 = arith.constant 0 : index
    %135 = vector.load %arg9[%c14, %c0_62] : memref<30x256xf32, #tpu.memory_space<vmem>>, vector<1x256xf32>
    %136 = vector.broadcast %135 : vector<1x256xf32> to vector<8x256xf32>
    %137 = arith.mulf %134, %136 : vector<8x256xf32>
    %138 = arith.addf %132, %137 : vector<8x256xf32>
    %139 = vector.extract_strided_slice %119 {offsets = [24, 0], sizes = [8, 256], strides = [1, 1]} : vector<48x256xf32> to vector<8x256xf32>
    %c1_i32_63 = arith.constant 1 : i32
    %140 = tpu.dynamic_rotate %139 by %c1_i32_63 dim 1 : vector<8x256xf32>, i32 -> vector<8x256xf32>
    %c15 = arith.constant 15 : index
    %c0_64 = arith.constant 0 : index
    %141 = vector.load %arg9[%c15, %c0_64] : memref<30x256xf32, #tpu.memory_space<vmem>>, vector<1x256xf32>
    %142 = vector.broadcast %141 : vector<1x256xf32> to vector<8x256xf32>
    %143 = arith.mulf %140, %142 : vector<8x256xf32>
    %144 = arith.addf %138, %143 : vector<8x256xf32>
    %145 = vector.extract_strided_slice %119 {offsets = [40, 0], sizes = [8, 256], strides = [1, 1]} : vector<48x256xf32> to vector<8x256xf32>
    %c255_i32_65 = arith.constant 255 : i32
    %146 = tpu.dynamic_rotate %145 by %c255_i32_65 dim 1 : vector<8x256xf32>, i32 -> vector<8x256xf32>
    %c17 = arith.constant 17 : index
    %c0_66 = arith.constant 0 : index
    %147 = vector.load %arg9[%c17, %c0_66] : memref<30x256xf32, #tpu.memory_space<vmem>>, vector<1x256xf32>
    %148 = vector.broadcast %147 : vector<1x256xf32> to vector<8x256xf32>
    %149 = arith.mulf %146, %148 : vector<8x256xf32>
    %150 = arith.addf %144, %149 : vector<8x256xf32>
    %c0_67 = arith.constant 0 : index
    %c0_68 = arith.constant 0 : index
    %151 = vector.load %arg10[%c0_67, %c0_68] : memref<256x256xf32, #tpu.memory_space<vmem>>, vector<256x256xf32>
    %cst_69 = arith.constant dense<0.000000e+00> : vector<8x256xf32>
    %152 = tpu.matmul %150, %151, %cst_69 {dimension_numbers = #tpu.dot_dimension_numbers<[1], [0], [0], [1], [0, 0, 1, 1], [], []>} : vector<8x256xf32>, vector<256x256xf32>, vector<8x256xf32> -> vector<8x256xf32>
    %153 = arith.subf %150, %152 : vector<8x256xf32>
    %154 = arith.mulf %153, %153 : vector<8x256xf32>
    %c0_70 = arith.constant 0 : index
    %c0_71 = arith.constant 0 : index
    %155 = vector.load %arg10[%c0_70, %c0_71] : memref<256x256xf32, #tpu.memory_space<vmem>>, vector<256x256xf32>
    %cst_72 = arith.constant dense<0.000000e+00> : vector<8x256xf32>
    %156 = tpu.matmul %154, %155, %cst_72 {dimension_numbers = #tpu.dot_dimension_numbers<[1], [0], [0], [1], [0, 0, 1, 1], [], []>} : vector<8x256xf32>, vector<256x256xf32>, vector<8x256xf32> -> vector<8x256xf32>
    %cst_73 = arith.constant 9.99999974E-6 : f32
    %157 = vector.broadcast %cst_73 : f32 to vector<8x256xf32>
    %158 = arith.addf %156, %157 : vector<8x256xf32>
    %159 = math.rsqrt %158 : vector<8x256xf32>
    %160 = arith.mulf %153, %159 : vector<8x256xf32>
    %c4 = arith.constant 4 : index
    %c0_74 = arith.constant 0 : index
    %161 = vector.load %arg8[%c4, %c0_74] : memref<10x256xf32, #tpu.memory_space<vmem>>, vector<1x256xf32>
    %162 = vector.broadcast %161 : vector<1x256xf32> to vector<8x256xf32>
    %163 = arith.mulf %160, %162 : vector<8x256xf32>
    %c5_75 = arith.constant 5 : index
    %c0_76 = arith.constant 0 : index
    %164 = vector.load %arg8[%c5_75, %c0_76] : memref<10x256xf32, #tpu.memory_space<vmem>>, vector<1x256xf32>
    %165 = vector.broadcast %164 : vector<1x256xf32> to vector<8x256xf32>
    %166 = arith.addf %163, %165 : vector<8x256xf32>
    %c0_77 = arith.constant 0 : index
    %c2_78 = arith.constant 2 : index
    %167 = vector.load %arg7[%c0_77, %c2_78] : memref<8x5xf32, #tpu.memory_space<vmem>>, vector<8x1xf32>
    %cst_79 = arith.constant 0.000000e+00 : f32
    %168 = vector.broadcast %cst_79 : f32 to vector<8x256xf32>
    %169 = arith.cmpf ogt, %166, %168 : vector<8x256xf32>
    %170 = vector.broadcast %167 : vector<8x1xf32> to vector<8x256xf32>
    %171 = arith.mulf %170, %166 : vector<8x256xf32>
    %172 = arith.select %169, %166, %171 : vector<8x256xi1>, vector<8x256xf32>
    %c8_80 = arith.constant 8 : index
    %c0_81 = arith.constant 0 : index
    %173 = vector.load %arg12[%c8_80, %c0_81] : memref<40x256xf32, #tpu.memory_space<vmem>>, vector<8x256xf32>
    tpu.vector_store %arg12[%c8_80, %c0_81], %172 {strides = array<i32>} : memref<40x256xf32, #tpu.memory_space<vmem>>, vector<8x256xf32>,
    %c8_82 = arith.constant 8 : index
    %c0_83 = arith.constant 0 : index
    %174 = vector.load %arg12[%c8_82, %c0_83] : memref<40x256xf32, #tpu.memory_space<vmem>>, vector<32x256xf32>
    %c0_84 = arith.constant 0 : index
    %c0_85 = arith.constant 0 : index
    %175 = vector.load %arg5[%c0_84, %c0_85] : memref<48x32xf32, #tpu.memory_space<vmem>>, vector<48x32xf32>
    %cst_86 = arith.constant dense<0.000000e+00> : vector<48x256xf32>
    %176 = tpu.matmul %175, %174, %cst_86 {dimension_numbers = #tpu.dot_dimension_numbers<[1], [0], [0], [1], [0, 0, 1, 1], [], []>} : vector<48x32xf32>, vector<32x256xf32>, vector<48x256xf32> -> vector<48x256xf32>
    %177 = vector.extract_strided_slice %176 {offsets = [32, 0], sizes = [8, 256], strides = [1, 1]} : vector<48x256xf32> to vector<8x256xf32>
    %178 = vector.extract_strided_slice %176 {offsets = [0, 0], sizes = [8, 256], strides = [1, 1]} : vector<48x256xf32> to vector<8x256xf32>
    %c129_i32 = arith.constant 129 : i32
    %179 = tpu.dynamic_rotate %178 by %c129_i32 dim 1 : vector<8x256xf32>, i32 -> vector<8x256xf32>
    %c18 = arith.constant 18 : index
    %c0_87 = arith.constant 0 : index
    %180 = vector.load %arg9[%c18, %c0_87] : memref<30x256xf32, #tpu.memory_space<vmem>>, vector<1x256xf32>
    %181 = vector.broadcast %180 : vector<1x256xf32> to vector<8x256xf32>
    %182 = arith.mulf %179, %181 : vector<8x256xf32>
    %183 = arith.addf %177, %182 : vector<8x256xf32>
    %184 = vector.extract_strided_slice %176 {offsets = [8, 0], sizes = [8, 256], strides = [1, 1]} : vector<48x256xf32> to vector<8x256xf32>
    %c128_i32 = arith.constant 128 : i32
    %185 = tpu.dynamic_rotate %184 by %c128_i32 dim 1 : vector<8x256xf32>, i32 -> vector<8x256xf32>
    %c19 = arith.constant 19 : index
    %c0_88 = arith.constant 0 : index
    %186 = vector.load %arg9[%c19, %c0_88] : memref<30x256xf32, #tpu.memory_space<vmem>>, vector<1x256xf32>
    %187 = vector.broadcast %186 : vector<1x256xf32> to vector<8x256xf32>
    %188 = arith.mulf %185, %187 : vector<8x256xf32>
    %189 = arith.addf %183, %188 : vector<8x256xf32>
    %190 = vector.extract_strided_slice %176 {offsets = [16, 0], sizes = [8, 256], strides = [1, 1]} : vector<48x256xf32> to vector<8x256xf32>
    %c127_i32 = arith.constant 127 : i32
    %191 = tpu.dynamic_rotate %190 by %c127_i32 dim 1 : vector<8x256xf32>, i32 -> vector<8x256xf32>
    %c20 = arith.constant 20 : index
    %c0_89 = arith.constant 0 : index
    %192 = vector.load %arg9[%c20, %c0_89] : memref<30x256xf32, #tpu.memory_space<vmem>>, vector<1x256xf32>
    %193 = vector.broadcast %192 : vector<1x256xf32> to vector<8x256xf32>
    %194 = arith.mulf %191, %193 : vector<8x256xf32>
    %195 = arith.addf %189, %194 : vector<8x256xf32>
    %196 = vector.extract_strided_slice %176 {offsets = [24, 0], sizes = [8, 256], strides = [1, 1]} : vector<48x256xf32> to vector<8x256xf32>
    %c1_i32_90 = arith.constant 1 : i32
    %197 = tpu.dynamic_rotate %196 by %c1_i32_90 dim 1 : vector<8x256xf32>, i32 -> vector<8x256xf32>
    %c21 = arith.constant 21 : index
    %c0_91 = arith.constant 0 : index
    %198 = vector.load %arg9[%c21, %c0_91] : memref<30x256xf32, #tpu.memory_space<vmem>>, vector<1x256xf32>
    %199 = vector.broadcast %198 : vector<1x256xf32> to vector<8x256xf32>
    %200 = arith.mulf %197, %199 : vector<8x256xf32>
    %201 = arith.addf %195, %200 : vector<8x256xf32>
    %202 = vector.extract_strided_slice %176 {offsets = [40, 0], sizes = [8, 256], strides = [1, 1]} : vector<48x256xf32> to vector<8x256xf32>
    %c255_i32_92 = arith.constant 255 : i32
    %203 = tpu.dynamic_rotate %202 by %c255_i32_92 dim 1 : vector<8x256xf32>, i32 -> vector<8x256xf32>
    %c23 = arith.constant 23 : index
    %c0_93 = arith.constant 0 : index
    %204 = vector.load %arg9[%c23, %c0_93] : memref<30x256xf32, #tpu.memory_space<vmem>>, vector<1x256xf32>
    %205 = vector.broadcast %204 : vector<1x256xf32> to vector<8x256xf32>
    %206 = arith.mulf %203, %205 : vector<8x256xf32>
    %207 = arith.addf %201, %206 : vector<8x256xf32>
    %c0_94 = arith.constant 0 : index
    %c0_95 = arith.constant 0 : index
    %208 = vector.load %arg10[%c0_94, %c0_95] : memref<256x256xf32, #tpu.memory_space<vmem>>, vector<256x256xf32>
    %cst_96 = arith.constant dense<0.000000e+00> : vector<8x256xf32>
    %209 = tpu.matmul %207, %208, %cst_96 {dimension_numbers = #tpu.dot_dimension_numbers<[1], [0], [0], [1], [0, 0, 1, 1], [], []>} : vector<8x256xf32>, vector<256x256xf32>, vector<8x256xf32> -> vector<8x256xf32>
    %210 = arith.subf %207, %209 : vector<8x256xf32>
    %211 = arith.mulf %210, %210 : vector<8x256xf32>
    %c0_97 = arith.constant 0 : index
    %c0_98 = arith.constant 0 : index
    %212 = vector.load %arg10[%c0_97, %c0_98] : memref<256x256xf32, #tpu.memory_space<vmem>>, vector<256x256xf32>
    %cst_99 = arith.constant dense<0.000000e+00> : vector<8x256xf32>
    %213 = tpu.matmul %211, %212, %cst_99 {dimension_numbers = #tpu.dot_dimension_numbers<[1], [0], [0], [1], [0, 0, 1, 1], [], []>} : vector<8x256xf32>, vector<256x256xf32>, vector<8x256xf32> -> vector<8x256xf32>
    %cst_100 = arith.constant 9.99999974E-6 : f32
    %214 = vector.broadcast %cst_100 : f32 to vector<8x256xf32>
    %215 = arith.addf %213, %214 : vector<8x256xf32>
    %216 = math.rsqrt %215 : vector<8x256xf32>
    %217 = arith.mulf %210, %216 : vector<8x256xf32>
    %c6_101 = arith.constant 6 : index
    %c0_102 = arith.constant 0 : index
    %218 = vector.load %arg8[%c6_101, %c0_102] : memref<10x256xf32, #tpu.memory_space<vmem>>, vector<1x256xf32>
    %219 = vector.broadcast %218 : vector<1x256xf32> to vector<8x256xf32>
    %220 = arith.mulf %217, %219 : vector<8x256xf32>
    %c7_103 = arith.constant 7 : index
    %c0_104 = arith.constant 0 : index
    %221 = vector.load %arg8[%c7_103, %c0_104] : memref<10x256xf32, #tpu.memory_space<vmem>>, vector<1x256xf32>
    %222 = vector.broadcast %221 : vector<1x256xf32> to vector<8x256xf32>
    %223 = arith.addf %220, %222 : vector<8x256xf32>
    %c0_105 = arith.constant 0 : index
    %c3_106 = arith.constant 3 : index
    %224 = vector.load %arg7[%c0_105, %c3_106] : memref<8x5xf32, #tpu.memory_space<vmem>>, vector<8x1xf32>
    %cst_107 = arith.constant 0.000000e+00 : f32
    %225 = vector.broadcast %cst_107 : f32 to vector<8x256xf32>
    %226 = arith.cmpf ogt, %223, %225 : vector<8x256xf32>
    %227 = vector.broadcast %224 : vector<8x1xf32> to vector<8x256xf32>
    %228 = arith.mulf %227, %223 : vector<8x256xf32>
    %229 = arith.select %226, %223, %228 : vector<8x256xi1>, vector<8x256xf32>
    %c0_108 = arith.constant 0 : index
    %c0_109 = arith.constant 0 : index
    %230 = vector.load %arg12[%c0_108, %c0_109] : memref<40x256xf32, #tpu.memory_space<vmem>>, vector<8x256xf32>
    tpu.vector_store %arg12[%c0_108, %c0_109], %229 {strides = array<i32>} : memref<40x256xf32, #tpu.memory_space<vmem>>, vector<8x256xf32>,
    %c0_110 = arith.constant 0 : index
    %c0_111 = arith.constant 0 : index
    %231 = vector.load %arg12[%c0_110, %c0_111] : memref<40x256xf32, #tpu.memory_space<vmem>>, vector<40x256xf32>
    %c0_112 = arith.constant 0 : index
    %c0_113 = arith.constant 0 : index
    %232 = vector.load %arg6[%c0_112, %c0_113] : memref<48x40xf32, #tpu.memory_space<vmem>>, vector<48x40xf32>
    %cst_114 = arith.constant dense<0.000000e+00> : vector<48x256xf32>
    %233 = tpu.matmul %232, %231, %cst_114 {dimension_numbers = #tpu.dot_dimension_numbers<[1], [0], [0], [1], [0, 0, 1, 1], [], []>} : vector<48x40xf32>, vector<40x256xf32>, vector<48x256xf32> -> vector<48x256xf32>
    %234 = vector.extract_strided_slice %233 {offsets = [32, 0], sizes = [8, 256], strides = [1, 1]} : vector<48x256xf32> to vector<8x256xf32>
    %235 = vector.extract_strided_slice %233 {offsets = [0, 0], sizes = [8, 256], strides = [1, 1]} : vector<48x256xf32> to vector<8x256xf32>
    %c1_i32_115 = arith.constant 1 : i32
    %236 = tpu.dynamic_rotate %235 by %c1_i32_115 dim 1 : vector<8x256xf32>, i32 -> vector<8x256xf32>
    %c24_116 = arith.constant 24 : index
    %c0_117 = arith.constant 0 : index
    %237 = vector.load %arg9[%c24_116, %c0_117] : memref<30x256xf32, #tpu.memory_space<vmem>>, vector<1x256xf32>
    %238 = vector.broadcast %237 : vector<1x256xf32> to vector<8x256xf32>
    %239 = arith.mulf %236, %238 : vector<8x256xf32>
    %240 = arith.addf %234, %239 : vector<8x256xf32>
    %241 = vector.extract_strided_slice %233 {offsets = [8, 0], sizes = [8, 256], strides = [1, 1]} : vector<48x256xf32> to vector<8x256xf32>
    %c0_i32 = arith.constant 0 : i32
    %242 = tpu.dynamic_rotate %241 by %c0_i32 dim 1 : vector<8x256xf32>, i32 -> vector<8x256xf32>
    %c25 = arith.constant 25 : index
    %c0_118 = arith.constant 0 : index
    %243 = vector.load %arg9[%c25, %c0_118] : memref<30x256xf32, #tpu.memory_space<vmem>>, vector<1x256xf32>
    %244 = vector.broadcast %243 : vector<1x256xf32> to vector<8x256xf32>
    %245 = arith.mulf %242, %244 : vector<8x256xf32>
    %246 = arith.addf %240, %245 : vector<8x256xf32>
    %247 = vector.extract_strided_slice %233 {offsets = [16, 0], sizes = [8, 256], strides = [1, 1]} : vector<48x256xf32> to vector<8x256xf32>
    %c255_i32_119 = arith.constant 255 : i32
    %248 = tpu.dynamic_rotate %247 by %c255_i32_119 dim 1 : vector<8x256xf32>, i32 -> vector<8x256xf32>
    %c26 = arith.constant 26 : index
    %c0_120 = arith.constant 0 : index
    %249 = vector.load %arg9[%c26, %c0_120] : memref<30x256xf32, #tpu.memory_space<vmem>>, vector<1x256xf32>
    %250 = vector.broadcast %249 : vector<1x256xf32> to vector<8x256xf32>
    %251 = arith.mulf %248, %250 : vector<8x256xf32>
    %252 = arith.addf %246, %251 : vector<8x256xf32>
    %253 = vector.extract_strided_slice %233 {offsets = [24, 0], sizes = [8, 256], strides = [1, 1]} : vector<48x256xf32> to vector<8x256xf32>
    %c1_i32_121 = arith.constant 1 : i32
    %254 = tpu.dynamic_rotate %253 by %c1_i32_121 dim 1 : vector<8x256xf32>, i32 -> vector<8x256xf32>
    %c27 = arith.constant 27 : index
    %c0_122 = arith.constant 0 : index
    %255 = vector.load %arg9[%c27, %c0_122] : memref<30x256xf32, #tpu.memory_space<vmem>>, vector<1x256xf32>
    %256 = vector.broadcast %255 : vector<1x256xf32> to vector<8x256xf32>
    %257 = arith.mulf %254, %256 : vector<8x256xf32>
    %258 = arith.addf %252, %257 : vector<8x256xf32>
    %259 = vector.extract_strided_slice %233 {offsets = [40, 0], sizes = [8, 256], strides = [1, 1]} : vector<48x256xf32> to vector<8x256xf32>
    %c255_i32_123 = arith.constant 255 : i32
    %260 = tpu.dynamic_rotate %259 by %c255_i32_123 dim 1 : vector<8x256xf32>, i32 -> vector<8x256xf32>
    %c29 = arith.constant 29 : index
    %c0_124 = arith.constant 0 : index
    %261 = vector.load %arg9[%c29, %c0_124] : memref<30x256xf32, #tpu.memory_space<vmem>>, vector<1x256xf32>
    %262 = vector.broadcast %261 : vector<1x256xf32> to vector<8x256xf32>
    %263 = arith.mulf %260, %262 : vector<8x256xf32>
    %264 = arith.addf %258, %263 : vector<8x256xf32>
    %c0_125 = arith.constant 0 : index
    %c0_126 = arith.constant 0 : index
    %265 = vector.load %arg10[%c0_125, %c0_126] : memref<256x256xf32, #tpu.memory_space<vmem>>, vector<256x256xf32>
    %cst_127 = arith.constant dense<0.000000e+00> : vector<8x256xf32>
    %266 = tpu.matmul %264, %265, %cst_127 {dimension_numbers = #tpu.dot_dimension_numbers<[1], [0], [0], [1], [0, 0, 1, 1], [], []>} : vector<8x256xf32>, vector<256x256xf32>, vector<8x256xf32> -> vector<8x256xf32>
    %267 = arith.subf %264, %266 : vector<8x256xf32>
    %268 = arith.mulf %267, %267 : vector<8x256xf32>
    %c0_128 = arith.constant 0 : index
    %c0_129 = arith.constant 0 : index
    %269 = vector.load %arg10[%c0_128, %c0_129] : memref<256x256xf32, #tpu.memory_space<vmem>>, vector<256x256xf32>
    %cst_130 = arith.constant dense<0.000000e+00> : vector<8x256xf32>
    %270 = tpu.matmul %268, %269, %cst_130 {dimension_numbers = #tpu.dot_dimension_numbers<[1], [0], [0], [1], [0, 0, 1, 1], [], []>} : vector<8x256xf32>, vector<256x256xf32>, vector<8x256xf32> -> vector<8x256xf32>
    %cst_131 = arith.constant 9.99999974E-6 : f32
    %271 = vector.broadcast %cst_131 : f32 to vector<8x256xf32>
    %272 = arith.addf %270, %271 : vector<8x256xf32>
    %273 = math.rsqrt %272 : vector<8x256xf32>
    %274 = arith.mulf %267, %273 : vector<8x256xf32>
    %c8_132 = arith.constant 8 : index
    %c0_133 = arith.constant 0 : index
    %275 = vector.load %arg8[%c8_132, %c0_133] : memref<10x256xf32, #tpu.memory_space<vmem>>, vector<1x256xf32>
    %276 = vector.broadcast %275 : vector<1x256xf32> to vector<8x256xf32>
    %277 = arith.mulf %274, %276 : vector<8x256xf32>
    %c9_134 = arith.constant 9 : index
    %c0_135 = arith.constant 0 : index
    %278 = vector.load %arg8[%c9_134, %c0_135] : memref<10x256xf32, #tpu.memory_space<vmem>>, vector<1x256xf32>
    %279 = vector.broadcast %278 : vector<1x256xf32> to vector<8x256xf32>
    %280 = arith.addf %277, %279 : vector<8x256xf32>
    %c0_136 = arith.constant 0 : index
    %c4_137 = arith.constant 4 : index
    %281 = vector.load %arg7[%c0_136, %c4_137] : memref<8x5xf32, #tpu.memory_space<vmem>>, vector<8x1xf32>
    %cst_138 = arith.constant 0.000000e+00 : f32
    %282 = vector.broadcast %cst_138 : f32 to vector<8x256xf32>
    %283 = arith.cmpf ogt, %280, %282 : vector<8x256xf32>
    %284 = vector.broadcast %281 : vector<8x1xf32> to vector<8x256xf32>
    %285 = arith.mulf %284, %280 : vector<8x256xf32>
    %286 = arith.select %283, %280, %285 : vector<8x256xi1>, vector<8x256xf32>
    %c0_139 = arith.constant 0 : index
    %c0_140 = arith.constant 0 : index
    %c0_141 = arith.constant 0 : index
    %287 = vector.load %arg11[%c0_139, %c0_140, %c0_141] : memref<1x8x256xf32, #tpu.memory_space<vmem>>, vector<1x8x256xf32>
    %288 = vector.shape_cast %287 : vector<1x8x256xf32> to vector<8x256xf32>
    %289 = vector.shape_cast %286 : vector<8x256xf32> to vector<1x8x256xf32>
    tpu.vector_store %arg11[%c0_139, %c0_140, %c0_141], %289 {strides = array<i32>} : memref<1x8x256xf32, #tpu.memory_space<vmem>>, vector<1x8x256xf32>,
    return
  }
  func.func @transform_0(%arg0: i32) -> (i32, i32, i32) {
    %c0_i32 = arith.constant 0 : i32
    %c0_i32_0 = arith.constant 0 : i32
    %c0_i32_1 = arith.constant 0 : i32
    return %arg0, %c0_i32, %c0_i32_0 : i32, i32, i32
  }
  func.func @transform_1(%arg0: i32) -> (i32, i32) {
    %c0_i32 = arith.constant 0 : i32
    %c0_i32_0 = arith.constant 0 : i32
    %c0_i32_1 = arith.constant 0 : i32
    return %c0_i32, %c0_i32_0 : i32, i32
  }
  func.func @transform_2(%arg0: i32) -> (i32, i32) {
    %c0_i32 = arith.constant 0 : i32
    %c0_i32_0 = arith.constant 0 : i32
    %c0_i32_1 = arith.constant 0 : i32
    return %c0_i32, %c0_i32_0 : i32, i32
  }
  func.func @transform_3(%arg0: i32) -> (i32, i32) {
    %c0_i32 = arith.constant 0 : i32
    %c0_i32_0 = arith.constant 0 : i32
    %c0_i32_1 = arith.constant 0 : i32
    return %c0_i32, %c0_i32_0 : i32, i32
  }
  func.func @transform_4(%arg0: i32) -> (i32, i32) {
    %c0_i32 = arith.constant 0 : i32
    %c0_i32_0 = arith.constant 0 : i32
    %c0_i32_1 = arith.constant 0 : i32
    return %c0_i32, %c0_i32_0 : i32, i32
  }
  func.func @transform_5(%arg0: i32) -> (i32, i32) {
    %c0_i32 = arith.constant 0 : i32
    %c0_i32_0 = arith.constant 0 : i32
    %c0_i32_1 = arith.constant 0 : i32
    return %c0_i32, %c0_i32_0 : i32, i32
  }
  func.func @transform_6(%arg0: i32) -> (i32, i32) {
    %c0_i32 = arith.constant 0 : i32
    %c0_i32_0 = arith.constant 0 : i32
    %c0_i32_1 = arith.constant 0 : i32
    return %c0_i32, %c0_i32_0 : i32, i32
  }
  func.func @transform_7(%arg0: i32) -> (i32, i32) {
    %c0_i32 = arith.constant 0 : i32
    %c0_i32_0 = arith.constant 0 : i32
    %c0_i32_1 = arith.constant 0 : i32
    return %c0_i32, %c0_i32_0 : i32, i32
  }
  func.func @transform_8(%arg0: i32) -> (i32, i32) {
    %c0_i32 = arith.constant 0 : i32
    %c0_i32_0 = arith.constant 0 : i32
    %c0_i32_1 = arith.constant 0 : i32
    return %c0_i32, %c0_i32_0 : i32, i32
  }
  func.func @transform_9(%arg0: i32) -> (i32, i32) {
    %c0_i32 = arith.constant 0 : i32
    %c0_i32_0 = arith.constant 0 : i32
    %c0_i32_1 = arith.constant 0 : i32
    return %c0_i32, %c0_i32_0 : i32, i32
  }
  func.func @transform_10(%arg0: i32) -> (i32, i32, i32) {
    %c0_i32 = arith.constant 0 : i32
    %c0_i32_0 = arith.constant 0 : i32
    %c0_i32_1 = arith.constant 0 : i32
    return %arg0, %c0_i32, %c0_i32_0 : i32, i32, i32
  }
}

</mosaic_0001>

<llo_original>
// kernel: tile.53
$region0: #{tile.53}
  #allocation0 [shape = 's32[1]{0}', space=sflag, size = 0x4, scoped, tag = 'scoped memory for tile.53']
  %s0 = inlined_call_operand.vmem [shape: f32[16], index: 0, kind: input, shape index: {}]
  %s1 = inlined_call_operand.vmem [shape: f32[16,16], index: 1, kind: output, shape index: {}]
  // Predicated region
  $region2: #{tile.53} parent=0 // pred_check
    _
  $region3: #{tile.53} parent=0 // pred_check_branch
    %3 = sbr.rel (0) target = $region5
  $region4: #{tile.53} parent=0 // pred_region
    _
  $region5: #{tile.53} parent=0 // pred_fallthru
    _
  %v4 = vld [vmem:[%s0] ss:$0 sm:$0xff]
  %5 = vst [vmem:[%s1] sm:$0xff] %v4
  %s6 = scalar_lea.vmem %s1, 8
  %7 = vst [vmem:[%s6] sm:$0xff] %v4

// kernel: tile.90
$region0: #{tile.90}
  %s0 = inlined_call_operand.vmem [shape: f32[16,16], index: 0, kind: input, shape index: {}]
  %s1 = inlined_call_operand.vmem [shape: f32[1,256], index: 1, kind: output, shape index: {}]
  $region1: #{tile.90} parent=0
    #allocation0 [shape = 'u8[8192]{0}', space=vmem, size = 0x2000, scoped, tag = 'scoped mem for output reshape']
    %s2 = smov 3
    %v3 = vld [vmem:[%s0] ss:$8 sm:%s2]
    %vm4 = vcmask 130048
    %5 = vst.msk [vmem:[#allocation0] ss:$8 sm:$0x3] %vm4, %v3
    %s6 = scalar_lea.vmem %s0, 7
    %s7 = smov 3
    %v8 = vld [vmem:[%s6] ss:$8 sm:%s7]
    %9 = vrot.lane.b32.xlu0 %v8, 112
    %v10 = vpop.permute.xlu0 %9
    %vm11 = vcmask 1048448
    %12 = vst.msk [vmem:[#allocation0] ss:$8 sm:$0x3] %vm11, %v10
    %s13 = scalar_lea.vmem %s0, 6
    %s14 = smov 3
    %v15 = vld [vmem:[%s13] ss:$8 sm:%s14]
    %16 = vrot.lane.b32.xlu0 %v15, 96
    %v17 = vpop.permute.xlu0 %16
    %vm18 = vcmask 917248
    %19 = vst.msk [vmem:[#allocation0] ss:$8 sm:$0x3] %vm18, %v17
    %s20 = scalar_lea.vmem %s0, 5
    %s21 = smov 3
    %v22 = vld [vmem:[%s20] ss:$8 sm:%s21]
    %23 = vrot.lane.b32.xlu0 %v22, 80
    %v24 = vpop.permute.xlu0 %23
    %vm25 = vcmask 786048
    %26 = vst.msk [vmem:[#allocation0] ss:$8 sm:$0x3] %vm25, %v24
    %s27 = scalar_lea.vmem %s0, 4
    %s28 = smov 3
    %v29 = vld [vmem:[%s27] ss:$8 sm:%s28]
    %30 = vrot.lane.b32.xlu0 %v29, 64
    %v31 = vpop.permute.xlu0 %30
    %vm32 = vcmask 654848
    %33 = vst.msk [vmem:[#allocation0] ss:$8 sm:$0x3] %vm32, %v31
    %s34 = scalar_lea.vmem %s0, 3
    %s35 = smov 3
    %v36 = vld [vmem:[%s34] ss:$8 sm:%s35]
    %37 = vrot.lane.b32.xlu0 %v36, 48
    %v38 = vpop.permute.xlu0 %37
    %vm39 = vcmask 523648
    %40 = vst.msk [vmem:[#allocation0] ss:$8 sm:$0x3] %vm39, %v38
    %s41 = scalar_lea.vmem %s0, 2
    %s42 = smov 3
    %v43 = vld [vmem:[%s41] ss:$8 sm:%s42]
    %44 = vrot.lane.b32.xlu0 %v43, 32
    %v45 = vpop.permute.xlu0 %44
    %vm46 = vcmask 392448
    %47 = vst.msk [vmem:[#allocation0] ss:$8 sm:$0x3] %vm46, %v45
    %s48 = scalar_lea.vmem %s0, 1
    %s49 = smov 3
    %v50 = vld [vmem:[%s48] ss:$8 sm:%s49]
    %51 = vrot.lane.b32.xlu0 %v50, 16
    %v52 = vpop.permute.xlu0 %51
    %vm53 = vcmask 261248
    %54 = vst.msk [vmem:[#allocation0] ss:$8 sm:$0x3] %vm53, %v52
    %s56 = sshll.u32 1, 1
    %s57 = ssub.s32 %s56, 1
    %v59 = vld [vmem:[#allocation0] sm:%s57]
    %s60 = sshll.u32 1, 1
    %s61 = ssub.s32 %s60, 1
    %62 = vst [vmem:[%s1] sm:%s61] %v59
    %s63 = scalar_lea.vmem [#allocation0], 8
    %v64 = vld [vmem:[%s63] sm:%s57]
    %s65 = sshll.u32 1, 1
    %s66 = ssub.s32 %s65, 1
    %s67 = scalar_lea.vmem %s1, 1
    %68 = vst [vmem:[%s67] sm:%s66] %v64

// kernel: dense_block_forward.1
$region0: #{dense_block_forward.1}
  #allocation0 [shape = 'u32[]', space=smem, size = 0x4, offset = 0x4, fixed_abs, tag = 'smem constant byte address 0x4 - core index']
  #allocation1 [shape = 'u32[144,128]{1,0:T(1,128)}', space=vmem, size = 0x12000, scoped, tag = 'internal scratch']
  #allocation2 [shape = 'f32[40,256]{1,0:T(8,128)}', space=vmem, size = 0xa000, scoped, tag = 'scratch operand']
  %s0 = inlined_call_operand.vmem [shape: f32[2,8,256], index: 0, kind: input, shape index: {}]
  %s1 = inlined_call_operand.vmem [shape: f32[48,8], index: 1, kind: input, shape index: {}]
  %s2 = inlined_call_operand.vmem [shape: f32[48,16], index: 2, kind: input, shape index: {}]
  %s3 = inlined_call_operand.vmem [shape: f32[48,24], index: 3, kind: input, shape index: {}]
  %s4 = inlined_call_operand.vmem [shape: f32[48,32], index: 4, kind: input, shape index: {}]
  %s5 = inlined_call_operand.vmem [shape: f32[48,40], index: 5, kind: input, shape index: {}]
  %s6 = inlined_call_operand.vmem [shape: f32[8,5], index: 6, kind: input, shape index: {}]
  %s7 = inlined_call_operand.vmem [shape: f32[10,256], index: 7, kind: input, shape index: {}]
  %s8 = inlined_call_operand.vmem [shape: f32[30,256], index: 8, kind: input, shape index: {}]
  %s9 = inlined_call_operand.vmem [shape: f32[256,256], index: 9, kind: input, shape index: {}]
  %s10 = inlined_call_operand.vmem [shape: f32[2,8,256], index: 10, kind: output, shape index: {}]
  %s11 = sld [smem:[#allocation0]]
  $region73: #{dense_block_forward.1} parent=0
    _
  %s13 = ssub.s32 1, %s11
  %s14 = scalar_select 0, %s13, %s11
  loop: start=0, step=1, limit=4
  $region2: #{dense_block_forward.1} parent=0 // loop_pre_header
    _
  $region3: #{dense_block_forward.1} parent=0 // loop_header
    %s16 = sphi 0, %s20
    %p17 = scmp.ge.s32.totalorder %s16, 4
    %s26 = sphi 0, %s28
    %s29 = sphi 0, %s26
    %s30 = sphi 0, %s29
    %s46 = sphi 0, %s30
    %s50 = sphi 0, %s50
    %s52 = sphi 0, %s50
    %s53 = sphi 0, %s52
    %s67 = sphi 0, %s53
    %s71 = sphi 0, %s71
    %s73 = sphi 0, %s71
    %s74 = sphi 0, %s73
    %s88 = sphi 0, %s74
    %s92 = sphi 0, %s92
    %s94 = sphi 0, %s92
    %s95 = sphi 0, %s94
    %s109 = sphi 0, %s95
    %s113 = sphi 0, %s113
    %s115 = sphi 0, %s113
    %s116 = sphi 0, %s115
    %s130 = sphi 0, %s116
    %s134 = sphi 0, %s134
    %s136 = sphi 0, %s134
    %s137 = sphi 0, %s136
    %s151 = sphi 0, %s137
    %s155 = sphi 0, %s155
    %s157 = sphi 0, %s155
    %s158 = sphi 0, %s157
    %s172 = sphi 0, %s158
    %s176 = sphi 0, %s176
    %s178 = sphi 0, %s176
    %s179 = sphi 0, %s178
    %s193 = sphi 0, %s179
    %s197 = sphi 0, %s197
    %s199 = sphi 0, %s197
    %s200 = sphi 0, %s199
    %s214 = sphi 0, %s200
    %s218 = sphi 0, %s218
    %s220 = sphi 0, %s218
    %s221 = sphi 0, %s220
    %s235 = sphi 0, %s221
    %s241 = sphi 0, %s243
    %s244 = sphi 0, %s241
    %s245 = sphi 0, %s244
    %s261 = sphi 0, %s245
  $region4: #{dense_block_forward.1} parent=0 // loop_header_branch
    %19 = sbr.rel (%p17) target = $region8
  $region5: #{dense_block_forward.1} parent=0 // loop_body
    %s21 = ssub.s32 %s16, 1
    %s22 = ssub.s32 %s16, 2
    %s23 = sadd.s32 %s16, 1
    %s24 = ssub.s32 %s16, %s23
    %p25 = scmp.eq.s32.totalorder %s24, 0
    %s27 = sadd.s32 %s26, 1
    %s28 = scalar_select %p25, %s26, %s27
    %p31 = pneg %p25
    %p32 = scmp.eq.s32.totalorder %s16, 1
    %p33 = por %p31, %p32
    %p34 = scmp.ne.s32.totalorder %s26, %s29
    %p35 = scmp.eq.s32.totalorder %s16, 0
    %p36 = por %p34, %p35
    %p37 = scmp.ne.s32.totalorder %s26, %s29
    %p38 = scmp.eq.s32.totalorder %s21, 1
    %p39 = por %p37, %p38
    %p40 = scmp.ne.s32.totalorder %s29, %s30
    %p41 = scmp.eq.s32.totalorder %s21, 0
    %p42 = por %p40, %p41
    %p43 = scmp.ne.s32.totalorder %s29, %s30
    %p44 = scmp.eq.s32.totalorder %s22, 1
    %p45 = por %p43, %p44
    %p47 = scmp.ne.s32.totalorder %s30, %s46
    %p48 = scmp.eq.s32.totalorder %s22, 0
    %p49 = por %p47, %p48
    %s51 = sadd.s32 %s50, 1
    %p54 = scmp.eq.s32.totalorder %s16, 1
    %p55 = scmp.ne.s32.totalorder %s50, %s52
    %p56 = scmp.eq.s32.totalorder %s16, 0
    %p57 = por %p55, %p56
    %p58 = scmp.ne.s32.totalorder %s50, %s52
    %p59 = scmp.eq.s32.totalorder %s21, 1
    %p60 = por %p58, %p59
    %p61 = scmp.ne.s32.totalorder %s52, %s53
    %p62 = scmp.eq.s32.totalorder %s21, 0
    %p63 = por %p61, %p62
    %p64 = scmp.ne.s32.totalorder %s52, %s53
    %p65 = scmp.eq.s32.totalorder %s22, 1
    %p66 = por %p64, %p65
    %p68 = scmp.ne.s32.totalorder %s53, %s67
    %p69 = scmp.eq.s32.totalorder %s22, 0
    %p70 = por %p68, %p69
    %s72 = sadd.s32 %s71, 1
    %p75 = scmp.eq.s32.totalorder %s16, 1
    %p76 = scmp.ne.s32.totalorder %s71, %s73
    %p77 = scmp.eq.s32.totalorder %s16, 0
    %p78 = por %p76, %p77
    %p79 = scmp.ne.s32.totalorder %s71, %s73
    %p80 = scmp.eq.s32.totalorder %s21, 1
    %p81 = por %p79, %p80
    %p82 = scmp.ne.s32.totalorder %s73, %s74
    %p83 = scmp.eq.s32.totalorder %s21, 0
    %p84 = por %p82, %p83
    %p85 = scmp.ne.s32.totalorder %s73, %s74
    %p86 = scmp.eq.s32.totalorder %s22, 1
    %p87 = por %p85, %p86
    %p89 = scmp.ne.s32.totalorder %s74, %s88
    %p90 = scmp.eq.s32.totalorder %s22, 0
    %p91 = por %p89, %p90
    %s93 = sadd.s32 %s92, 1
    %p96 = scmp.eq.s32.totalorder %s16, 1
    %p97 = scmp.ne.s32.totalorder %s92, %s94
    %p98 = scmp.eq.s32.totalorder %s16, 0
    %p99 = por %p97, %p98
    %p100 = scmp.ne.s32.totalorder %s92, %s94
    %p101 = scmp.eq.s32.totalorder %s21, 1
    %p102 = por %p100, %p101
    %p103 = scmp.ne.s32.totalorder %s94, %s95
    %p104 = scmp.eq.s32.totalorder %s21, 0
    %p105 = por %p103, %p104
    %p106 = scmp.ne.s32.totalorder %s94, %s95
    %p107 = scmp.eq.s32.totalorder %s22, 1
    %p108 = por %p106, %p107
    %p110 = scmp.ne.s32.totalorder %s95, %s109
    %p111 = scmp.eq.s32.totalorder %s22, 0
    %p112 = por %p110, %p111
    %s114 = sadd.s32 %s113, 1
    %p117 = scmp.eq.s32.totalorder %s16, 1
    %p118 = scmp.ne.s32.totalorder %s113, %s115
    %p119 = scmp.eq.s32.totalorder %s16, 0
    %p120 = por %p118, %p119
    %p121 = scmp.ne.s32.totalorder %s113, %s115
    %p122 = scmp.eq.s32.totalorder %s21, 1
    %p123 = por %p121, %p122
    %p124 = scmp.ne.s32.totalorder %s115, %s116
    %p125 = scmp.eq.s32.totalorder %s21, 0
    %p126 = por %p124, %p125
    %p127 = scmp.ne.s32.totalorder %s115, %s116
    %p128 = scmp.eq.s32.totalorder %s22, 1
    %p129 = por %p127, %p128
    %p131 = scmp.ne.s32.totalorder %s116, %s130
    %p132 = scmp.eq.s32.totalorder %s22, 0
    %p133 = por %p131, %p132
    %s135 = sadd.s32 %s134, 1
    %p138 = scmp.eq.s32.totalorder %s16, 1
    %p139 = scmp.ne.s32.totalorder %s134, %s136
    %p140 = scmp.eq.s32.totalorder %s16, 0
    %p141 = por %p139, %p140
    %p142 = scmp.ne.s32.totalorder %s134, %s136
    %p143 = scmp.eq.s32.totalorder %s21, 1
    %p144 = por %p142, %p143
    %p145 = scmp.ne.s32.totalorder %s136, %s137
    %p146 = scmp.eq.s32.totalorder %s21, 0
    %p147 = por %p145, %p146
    %p148 = scmp.ne.s32.totalorder %s136, %s137
    %p149 = scmp.eq.s32.totalorder %s22, 1
    %p150 = por %p148, %p149
    %p152 = scmp.ne.s32.totalorder %s137, %s151
    %p153 = scmp.eq.s32.totalorder %s22, 0
    %p154 = por %p152, %p153
    %s156 = sadd.s32 %s155, 1
    %p159 = scmp.eq.s32.totalorder %s16, 1
    %p160 = scmp.ne.s32.totalorder %s155, %s157
    %p161 = scmp.eq.s32.totalorder %s16, 0
    %p162 = por %p160, %p161
    %p163 = scmp.ne.s32.totalorder %s155, %s157
    %p164 = scmp.eq.s32.totalorder %s21, 1
    %p165 = por %p163, %p164
    %p166 = scmp.ne.s32.totalorder %s157, %s158
    %p167 = scmp.eq.s32.totalorder %s21, 0
    %p168 = por %p166, %p167
    %p169 = scmp.ne.s32.totalorder %s157, %s158
    %p170 = scmp.eq.s32.totalorder %s22, 1
    %p171 = por %p169, %p170
    %p173 = scmp.ne.s32.totalorder %s158, %s172
    %p174 = scmp.eq.s32.totalorder %s22, 0
    %p175 = por %p173, %p174
    %s177 = sadd.s32 %s176, 1
    %p180 = scmp.eq.s32.totalorder %s16, 1
    %p181 = scmp.ne.s32.totalorder %s176, %s178
    %p182 = scmp.eq.s32.totalorder %s16, 0
    %p183 = por %p181, %p182
    %p184 = scmp.ne.s32.totalorder %s176, %s178
    %p185 = scmp.eq.s32.totalorder %s21, 1
    %p186 = por %p184, %p185
    %p187 = scmp.ne.s32.totalorder %s178, %s179
    %p188 = scmp.eq.s32.totalorder %s21, 0
    %p189 = por %p187, %p188
    %p190 = scmp.ne.s32.totalorder %s178, %s179
    %p191 = scmp.eq.s32.totalorder %s22, 1
    %p192 = por %p190, %p191
    %p194 = scmp.ne.s32.totalorder %s179, %s193
    %p195 = scmp.eq.s32.totalorder %s22, 0
    %p196 = por %p194, %p195
    %s198 = sadd.s32 %s197, 1
    %p201 = scmp.eq.s32.totalorder %s16, 1
    %p202 = scmp.ne.s32.totalorder %s197, %s199
    %p203 = scmp.eq.s32.totalorder %s16, 0
    %p204 = por %p202, %p203
    %p205 = scmp.ne.s32.totalorder %s197, %s199
    %p206 = scmp.eq.s32.totalorder %s21, 1
    %p207 = por %p205, %p206
    %p208 = scmp.ne.s32.totalorder %s199, %s200
    %p209 = scmp.eq.s32.totalorder %s21, 0
    %p210 = por %p208, %p209
    %p211 = scmp.ne.s32.totalorder %s199, %s200
    %p212 = scmp.eq.s32.totalorder %s22, 1
    %p213 = por %p211, %p212
    %p215 = scmp.ne.s32.totalorder %s200, %s214
    %p216 = scmp.eq.s32.totalorder %s22, 0
    %p217 = por %p215, %p216
    %s219 = sadd.s32 %s218, 1
    %p222 = scmp.eq.s32.totalorder %s16, 1
    %p223 = scmp.ne.s32.totalorder %s218, %s220
    %p224 = scmp.eq.s32.totalorder %s16, 0
    %p225 = por %p223, %p224
    %p226 = scmp.ne.s32.totalorder %s218, %s220
    %p227 = scmp.eq.s32.totalorder %s21, 1
    %p228 = por %p226, %p227
    %p229 = scmp.ne.s32.totalorder %s220, %s221
    %p230 = scmp.eq.s32.totalorder %s21, 0
    %p231 = por %p229, %p230
    %p232 = scmp.ne.s32.totalorder %s220, %s221
    %p233 = scmp.eq.s32.totalorder %s22, 1
    %p234 = por %p232, %p233
    %p236 = scmp.ne.s32.totalorder %s221, %s235
    %p237 = scmp.eq.s32.totalorder %s22, 0
    %p238 = por %p236, %p237
    %s239 = ssub.s32 %s16, %s23
    %p240 = scmp.eq.s32.totalorder %s239, 0
    %s242 = sadd.s32 %s241, 1
    %s243 = scalar_select %p240, %s241, %s242
    %p246 = pneg %p240
    %p247 = scmp.eq.s32.totalorder %s16, 1
    %p248 = por %p246, %p247
    %p249 = scmp.ne.s32.totalorder %s241, %s244
    %p250 = scmp.eq.s32.totalorder %s16, 0
    %p251 = por %p249, %p250
    %p252 = scmp.ne.s32.totalorder %s241, %s244
    %p253 = scmp.eq.s32.totalorder %s21, 1
    %p254 = por %p252, %p253
    %p255 = scmp.ne.s32.totalorder %s244, %s245
    %p256 = scmp.eq.s32.totalorder %s21, 0
    %p257 = por %p255, %p256
    %p258 = scmp.ne.s32.totalorder %s244, %s245
    %p259 = scmp.eq.s32.totalorder %s22, 1
    %p260 = por %p258, %p259
    %p262 = scmp.ne.s32.totalorder %s245, %s261
    %p263 = scmp.eq.s32.totalorder %s22, 0
    %p264 = por %p262, %p263
    %p265 = scmp.le.s32.totalorder 1, %s16
    %p266 = scmp.lt.s32.totalorder %s16, 3
    %p267 = pnand %p265, %p266
    %p268 = pneg %p267
    // Predicated region
    $region9: #{dense_block_forward.1} parent=5 // pred_check
      _
    $region10: #{dense_block_forward.1} parent=5 // pred_check_branch
      %270 = sbr.rel (%p267) target = $region12
    $region11: #{dense_block_forward.1} parent=5 // pred_region
      %s271 = ssub.s32 %s16, 1
      // Predicated region
      $region13: #{dense_block_forward.1} parent=11 // pred_check
        %p272 = pneg %p63
      $region14: #{dense_block_forward.1} parent=11 // pred_check_branch
        %274 = sbr.rel (%p272) target = $region16
      $region15: #{dense_block_forward.1} parent=11 // pred_region
        _
      $region16: #{dense_block_forward.1} parent=11 // pred_fallthru
        _
      // Predicated region
      $region17: #{dense_block_forward.1} parent=11 // pred_check
        %p275 = pneg %p84
      $region18: #{dense_block_forward.1} parent=11 // pred_check_branch
        %277 = sbr.rel (%p275) target = $region20
      $region19: #{dense_block_forward.1} parent=11 // pred_region
        _
      $region20: #{dense_block_forward.1} parent=11 // pred_fallthru
        _
      // Predicated region
      $region21: #{dense_block_forward.1} parent=11 // pred_check
        %p278 = pneg %p105
      $region22: #{dense_block_forward.1} parent=11 // pred_check_branch
        %280 = sbr.rel (%p278) target = $region24
      $region23: #{dense_block_forward.1} parent=11 // pred_region
        _
      $region24: #{dense_block_forward.1} parent=11 // pred_fallthru
        _
      // Predicated region
      $region25: #{dense_block_forward.1} parent=11 // pred_check
        %p281 = pneg %p126
      $region26: #{dense_block_forward.1} parent=11 // pred_check_branch
        %283 = sbr.rel (%p281) target = $region28
      $region27: #{dense_block_forward.1} parent=11 // pred_region
        _
      $region28: #{dense_block_forward.1} parent=11 // pred_fallthru
        _
      // Predicated region
      $region29: #{dense_block_forward.1} parent=11 // pred_check
        %p284 = pneg %p147
      $region30: #{dense_block_forward.1} parent=11 // pred_check_branch
        %286 = sbr.rel (%p284) target = $region32
      $region31: #{dense_block_forward.1} parent=11 // pred_region
        _
      $region32: #{dense_block_forward.1} parent=11 // pred_fallthru
        _
      // Predicated region
      $region33: #{dense_block_forward.1} parent=11 // pred_check
        %p287 = pneg %p168
      $region34: #{dense_block_forward.1} parent=11 // pred_check_branch
        %289 = sbr.rel (%p287) target = $region36
      $region35: #{dense_block_forward.1} parent=11 // pred_region
        _
      $region36: #{dense_block_forward.1} parent=11 // pred_fallthru
        _
      // Predicated region
      $region37: #{dense_block_forward.1} parent=11 // pred_check
        %p290 = pneg %p189
      $region38: #{dense_block_forward.1} parent=11 // pred_check_branch
        %292 = sbr.rel (%p290) target = $region40
      $region39: #{dense_block_forward.1} parent=11 // pred_region
        _
      $region40: #{dense_block_forward.1} parent=11 // pred_fallthru
        _
      // Predicated region
      $region41: #{dense_block_forward.1} parent=11 // pred_check
        %p293 = pneg %p210
      $region42: #{dense_block_forward.1} parent=11 // pred_check_branch
        %295 = sbr.rel (%p293) target = $region44
      $region43: #{dense_block_forward.1} parent=11 // pred_region
        _
      $region44: #{dense_block_forward.1} parent=11 // pred_fallthru
        _
      // Predicated region
      $region45: #{dense_block_forward.1} parent=11 // pred_check
        %p296 = pneg %p231
      $region46: #{dense_block_forward.1} parent=11 // pred_check_branch
        %298 = sbr.rel (%p296) target = $region48
      $region47: #{dense_block_forward.1} parent=11 // pred_region
        _
      $region48: #{dense_block_forward.1} parent=11 // pred_fallthru
        _
    $region12: #{dense_block_forward.1} parent=5 // pred_fallthru
      _
    %p299 = scmp.lt.s32.totalorder %s16, 2
    // Predicated region
    $region49: #{dense_block_forward.1} parent=5 // pred_check
      %p300 = pneg %p299
    $region50: #{dense_block_forward.1} parent=5 // pred_check_branch
      %302 = sbr.rel (%p300) target = $region52
    $region51: #{dense_block_forward.1} parent=5 // pred_region
      // Predicated region
      $region53: #{dense_block_forward.1} parent=51 // pred_check
        %p303 = pneg %p36
      $region54: #{dense_block_forward.1} parent=51 // pred_check_branch
        %305 = sbr.rel (%p303) target = $region56
      $region55: #{dense_block_forward.1} parent=51 // pred_region
        %p306 = scmp.lt.s32.totalorder %s16, 1
        %s307 = scalar_select %p306, %s16, 1
        %s308 = smul.addr %s307, 2
        %s309 = smul.addr %s308, 8
        %s310 = scalar_lea.vmem %s0, %s309
      $region56: #{dense_block_forward.1} parent=51 // pred_fallthru
        _
    $region52: #{dense_block_forward.1} parent=5 // pred_fallthru
      _
    %p311 = scmp.le.s32.totalorder 1, %s16
    %p312 = scmp.lt.s32.totalorder %s16, 3
    %p313 = pnand %p311, %p312
    %p314 = pneg %p313
    // Predicated region
    $region57: #{dense_block_forward.1} parent=5 // pred_check
      _
    $region58: #{dense_block_forward.1} parent=5 // pred_check_branch
      %316 = sbr.rel (%p313) target = $region60
    $region59: #{dense_block_forward.1} parent=5 // pred_region
      %s317 = ssub.s32 %s16, 1
      %p318 = scmp.lt.s32.totalorder %s21, 1
      %s319 = scalar_select %p318, %s21, 1
      %s320 = smul.addr %s319, 2
      %s321 = smul.addr %s320, 8
      %s322 = scalar_lea.vmem %s0, %s321
      %p323 = pneg %p42
      %p324 = pneg %p39
      %p325 = pneg %p63
      %p326 = pneg %p60
      %p327 = pneg %p84
      %p328 = pneg %p81
      %p329 = pneg %p105
      %p330 = pneg %p102
      %p331 = pneg %p126
      %p332 = pneg %p123
      %p333 = pneg %p147
      %p334 = pneg %p144
      %p335 = pneg %p168
      %p336 = pneg %p165
      %p337 = pneg %p189
      %p338 = pneg %p186
      %p339 = pneg %p210
      %p340 = pneg %p207
      %p341 = pneg %p231
      %p342 = pneg %p228
      %p343 = pneg %p257
      %p344 = pneg %p254
      %p345 = scmp.lt.s32.totalorder %s21, 1
      %s346 = scalar_select %p345, %s21, 1
      %s347 = smul.addr %s346, 2
      %s348 = smul.addr %s347, 8
      %s349 = scalar_lea.vmem %s10, %s348
      %p350 = scmp.lt.s32.totalorder %s21, 1
      %s351 = scalar_select %p350, %s21, 1
      %s352 = smul.addr %s351, 2
      %s353 = smul.addr %s352, 8
      %s354 = scalar_lea.vmem %s0, %s353
      %p355 = scmp.lt.s32.totalorder %s21, 1
      %s356 = scalar_select %p355, %s21, 1
      %s357 = smul.addr %s356, 2
      %s358 = smul.addr %s357, 8
      %s359 = scalar_lea.vmem %s10, %s358
      %v360 = vld [vmem:[%s354] sm:$0xff]
      %v361 = vld [vmem:[%s354 + $0x8] sm:$0xff]
      %362 = vst [vmem:[#allocation2 + $0x40] sm:$0xff] %v360
      %363 = vst [vmem:[#allocation2 + $0x48] sm:$0xff] %v361
      %v364 = vld [vmem:[#allocation2 + $0x40] sm:$0xff]
      %v365 = vld [vmem:[#allocation2 + $0x48] sm:$0xff]
      %v366 = vld [vmem:[%s1] sm:$0xff]
      %v367 = vld [vmem:[%s1 + $0x8] sm:$0xff]
      %v368 = vld [vmem:[%s1 + $0x10] sm:$0xff]
      %v369 = vld [vmem:[%s1 + $0x18] sm:$0xff]
      %v370 = vld [vmem:[%s1 + $0x20] sm:$0xff]
      %v371 = vld [vmem:[%s1 + $0x28] sm:$0xff]
      %vm372 = vcmask 64512
      %v374 = vsel %vm372, %v366, 0
      %v377 = vsel %vm372, %v367, 0
      %v380 = vsel %vm372, %v368, 0
      %v383 = vsel %vm372, %v369, 0
      %v386 = vsel %vm372, %v370, 0
      %v389 = vsel %vm372, %v371, 0
      %391 = vmatprep.subr.mxu0 0.0
      %392 = vmatpush1.msra.mxu0 0.0
      %393 = vmatprep.subr.mxu0 0.0
      %394 = vmatpush1.msra.mxu0 0.0
      %395 = vmatprep.subr.mxu0 0.0
      %396 = vmatpush1.msra.mxu0 0.0
      %397 = vmatprep.subr.mxu0 0.0
      %398 = vmatpush1.msra.mxu0 0.0
      %399 = vmatprep.subr.mxu0 0.0
      %400 = vmatpush1.msra.mxu0 0.0
      %401 = vmatprep.subr.mxu0 0.0
      %402 = vmatpush1.msra.mxu0 0.0
      %403 = vmatprep.subr.mxu0 0.0
      %404 = vmatpush1.msra.mxu0 0.0
      %405 = vmatprep.subr.mxu0 0.0
      %406 = vmatpush1.msra.mxu0 0.0
      %407 = vmatprep.subr.mxu0 0.0
      %408 = vmatpush1.msra.mxu0 0.0
      %409 = vmatprep.subr.mxu0 0.0
      %410 = vmatpush1.msra.mxu0 0.0
      %411 = vmatprep.subr.mxu0 0.0
      %412 = vmatpush1.msra.mxu0 0.0
      %413 = vmatprep.subr.mxu0 0.0
      %414 = vmatpush1.msra.mxu0 0.0
      %415 = vmatprep.subr.mxu0 0.0
      %416 = vmatpush1.msra.mxu0 0.0
      %417 = vmatprep.subr.mxu0 0.0
      %418 = vmatpush1.msra.mxu0 0.0
      %419 = vmatprep.subr.mxu0 0.0
      %420 = vmatpush1.msra.mxu0 0.0
      %421 = vmatprep.subr.mxu0 %v365
      %422 = vmatpush1.msra.mxu0 %v364
      %423 = vmatprep.subr.mxu0 0.0
      %424 = vmatpush2.msra.mxu0 0.0
      %425 = vmatprep.subr.mxu0 0.0
      %426 = vmatpush2.msra.mxu0 0.0
      %427 = vmatprep.subr.mxu0 0.0
      %428 = vmatpush2.msra.mxu0 0.0
      %429 = vmatprep.subr.mxu0 0.0
      %430 = vmatpush2.msra.mxu0 0.0
      %431 = vmatprep.subr.mxu0 0.0
      %432 = vmatpush2.msra.mxu0 0.0
      %433 = vmatprep.subr.mxu0 0.0
      %434 = vmatpush2.msra.mxu0 0.0
      %435 = vmatprep.subr.mxu0 0.0
      %436 = vmatpush2.msra.mxu0 0.0
      %437 = vmatprep.subr.mxu0 0.0
      %438 = vmatpush2.msra.mxu0 0.0
      %439 = vmatprep.subr.mxu0 0.0
      %440 = vmatpush2.msra.mxu0 0.0
      %441 = vmatprep.subr.mxu0 0.0
      %442 = vmatpush2.msra.mxu0 0.0
      %443 = vmatprep.subr.mxu0 0.0
      %444 = vmatpush2.msra.mxu0 0.0
      %445 = vmatprep.subr.mxu0 0.0
      %446 = vmatpush2.msra.mxu0 0.0
      %447 = vmatprep.subr.mxu0 0.0
      %448 = vmatpush2.msra.mxu0 0.0
      %449 = vmatprep.subr.mxu0 0.0
      %450 = vmatpush2.msra.mxu0 0.0
      %451 = vmatprep.subr.mxu0 0.0
      %452 = vmatpush2.msra.mxu0 0.0
      %453 = vmatprep.subr.mxu0 0.0
      %454 = vmatpush2.msra.mxu0 0.0
      %455 = vmatprep.mubr.f32.mxu0 0.0
      %456 = vmatmul.mubr.f32.gmra.mxu0 %v374
      %v457 = vpop.f32.mrf.mxu0
      %v458 = vadd.f32 0.0, %v457
      %v459 = vpop.f32.mrf.mxu0
      %v460 = vadd.f32 0.0, %v459
      %461 = vmatprep.mubr.f32.mxu0 0.0
      %462 = vmatmul.mubr.f32.gmra.mxu0 %v377
      %v463 = vpop.f32.mrf.mxu0
      %v464 = vadd.f32 0.0, %v463
      %v465 = vpop.f32.mrf.mxu0
      %v466 = vadd.f32 0.0, %v465
      %467 = vmatprep.mubr.f32.mxu0 0.0
      %468 = vmatmul.mubr.f32.gmra.mxu0 %v380
      %v469 = vpop.f32.mrf.mxu0
      %v470 = vadd.f32 0.0, %v469
      %v471 = vpop.f32.mrf.mxu0
      %v472 = vadd.f32 0.0, %v471
      %473 = vmatprep.mubr.f32.mxu0 0.0
      %474 = vmatmul.mubr.f32.gmra.mxu0 %v383
      %v475 = vpop.f32.mrf.mxu0
      %v476 = vadd.f32 0.0, %v475
      %v477 = vpop.f32.mrf.mxu0
      %v478 = vadd.f32 0.0, %v477
      %479 = vmatprep.mubr.f32.mxu0 0.0
      %480 = vmatmul.mubr.f32.gmra.mxu0 %v386
      %v481 = vpop.f32.mrf.mxu0
      %v482 = vadd.f32 0.0, %v481
      %v483 = vpop.f32.mrf.mxu0
      %v484 = vadd.f32 0.0, %v483
      %485 = vmatprep.mubr.f32.mxu0 0.0
      %486 = vmatmul.mubr.f32.gmra.mxu0 %v389
      %v487 = vpop.f32.mrf.mxu0
      %v488 = vadd.f32 0.0, %v487
      %v489 = vpop.f32.mrf.mxu0
      %v490 = vadd.f32 0.0, %v489
      %491 = vdwg.mxu0
      %492 = vrot.lane.b32.xlu0 %v458, 17
      %v493 = vpop.permute.xlu0 %492
      %494 = vrot.lane.b32.xlu0 %v460, 17
      %v495 = vpop.permute.xlu0 %494
      %v496 = vlaneseq
      %v497 = vand.u32 %v496, 127
      %vm498 = vcmp.lt.s32.totalorder %v497, 17
      %v499 = vsel %vm498, %v493, %v495
      %v500 = vsel %vm498, %v495, %v493
      %v501 = vld [vmem:[%s8] ss:$8 sm:$0x3]
      %v503 = vlaneseq
      %v504 = vshrl.u32 %v503, 7
      %v505 = vsub.s32 0, %v504
      %v506 = vrot.slane %v501, %v505
      %v507 = vlaneseq
      %v508 = vshrl.u32 %v507, 7
      %v509 = vsub.s32 1, %v508
      %v510 = vrot.slane %v501, %v509
      %v513 = vmul.f32 %v500, %v506
      %v514 = vmul.f32 %v499, %v510
      %v515 = vadd.f32 %v482, %v513
      %v516 = vadd.f32 %v484, %v514
      %517 = vrot.lane.b32.xlu0 %v464, 16
      %v518 = vpop.permute.xlu0 %517
      %519 = vrot.lane.b32.xlu0 %v466, 16
      %v520 = vpop.permute.xlu0 %519
      %vm521 = vcmp.lt.s32.totalorder %v497, 16
      %v522 = vsel %vm521, %v518, %v520
      %v523 = vsel %vm521, %v520, %v518
      %s524 = scalar_lea.vmem %s8, 1
      %v525 = vld [vmem:[%s524] ss:$8 sm:$0x3]
      %v527 = vlaneseq
      %v528 = vshrl.u32 %v527, 7
      %v529 = vsub.s32 0, %v528
      %v530 = vrot.slane %v525, %v529
      %v531 = vlaneseq
      %v532 = vshrl.u32 %v531, 7
      %v533 = vsub.s32 1, %v532
      %v534 = vrot.slane %v525, %v533
      %v537 = vmul.f32 %v523, %v530
      %v538 = vmul.f32 %v522, %v534
      %v539 = vadd.f32 %v515, %v537
      %v540 = vadd.f32 %v516, %v538
      %541 = vrot.lane.b32.xlu0 %v470, 15
      %v542 = vpop.permute.xlu0 %541
      %543 = vrot.lane.b32.xlu0 %v472, 15
      %v544 = vpop.permute.xlu0 %543
      %vm545 = vcmp.lt.s32.totalorder %v497, 15
      %v546 = vsel %vm545, %v542, %v544
      %v547 = vsel %vm545, %v544, %v542
      %s548 = scalar_lea.vmem %s8, 2
      %v549 = vld [vmem:[%s548] ss:$8 sm:$0x3]
      %v551 = vlaneseq
      %v552 = vshrl.u32 %v551, 7
      %v553 = vsub.s32 0, %v552
      %v554 = vrot.slane %v549, %v553
      %v555 = vlaneseq
      %v556 = vshrl.u32 %v555, 7
      %v557 = vsub.s32 1, %v556
      %v558 = vrot.slane %v549, %v557
      %v561 = vmul.f32 %v547, %v554
      %v562 = vmul.f32 %v546, %v558
      %v563 = vadd.f32 %v539, %v561
      %v564 = vadd.f32 %v540, %v562
      %565 = vrot.lane.b32.xlu0 %v476, 1
      %v566 = vpop.permute.xlu0 %565
      %567 = vrot.lane.b32.xlu0 %v478, 1
      %v568 = vpop.permute.xlu0 %567
      %vm569 = vcmp.lt.s32.totalorder %v497, 1
      %v570 = vsel %vm569, %v566, %v568
      %v571 = vsel %vm569, %v568, %v566
      %s572 = scalar_lea.vmem %s8, 3
      %v573 = vld [vmem:[%s572] ss:$8 sm:$0x3]
      %v575 = vlaneseq
      %v576 = vshrl.u32 %v575, 7
      %v577 = vsub.s32 0, %v576
      %v578 = vrot.slane %v573, %v577
      %v579 = vlaneseq
      %v580 = vshrl.u32 %v579, 7
      %v581 = vsub.s32 1, %v580
      %v582 = vrot.slane %v573, %v581
      %v585 = vmul.f32 %v571, %v578
      %v586 = vmul.f32 %v570, %v582
      %v587 = vadd.f32 %v563, %v585
      %v588 = vadd.f32 %v564, %v586
      %589 = vrot.lane.b32.xlu0 %v488, 127
      %v590 = vpop.permute.xlu0 %589
      %591 = vrot.lane.b32.xlu0 %v490, 127
      %v592 = vpop.permute.xlu0 %591
      %vm593 = vcmp.lt.s32.totalorder %v497, 127
      %v594 = vsel %vm593, %v590, %v592
      %v595 = vsel %vm593, %v592, %v590
      %s596 = scalar_lea.vmem %s8, 5
      %v597 = vld [vmem:[%s596] ss:$8 sm:$0x3]
      %v599 = vlaneseq
      %v600 = vshrl.u32 %v599, 7
      %v601 = vsub.s32 0, %v600
      %v602 = vrot.slane %v597, %v601
      %v603 = vlaneseq
      %v604 = vshrl.u32 %v603, 7
      %v605 = vsub.s32 1, %v604
      %v606 = vrot.slane %v597, %v605
      %v609 = vmul.f32 %v594, %v602
      %v610 = vmul.f32 %v595, %v606
      %v611 = vadd.f32 %v587, %v609
      %v612 = vadd.f32 %v588, %v610
      %v613 = vld [vmem:[%s9] sm:$0xff]
      %v614 = vld [vmem:[%s9 + $0x8] sm:$0xff]
      %v615 = vld [vmem:[%s9 + $0x10] sm:$0xff]
      %v616 = vld [vmem:[%s9 + $0x18] sm:$0xff]
      %v617 = vld [vmem:[%s9 + $0x20] sm:$0xff]
      %v618 = vld [vmem:[%s9 + $0x28] sm:$0xff]
      %v619 = vld [vmem:[%s9 + $0x30] sm:$0xff]
      %v620 = vld [vmem:[%s9 + $0x38] sm:$0xff]
      %v621 = vld [vmem:[%s9 + $0x40] sm:$0xff]
      %v622 = vld [vmem:[%s9 + $0x48] sm:$0xff]
      %v623 = vld [vmem:[%s9 + $0x50] sm:$0xff]
      %v624 = vld [vmem:[%s9 + $0x58] sm:$0xff]
      %v625 = vld [vmem:[%s9 + $0x60] sm:$0xff]
      %v626 = vld [vmem:[%s9 + $0x68] sm:$0xff]
      %v627 = vld [vmem:[%s9 + $0x70] sm:$0xff]
      %v628 = vld [vmem:[%s9 + $0x78] sm:$0xff]
      %v629 = vld [vmem:[%s9 + $0x80] sm:$0xff]
      %v630 = vld [vmem:[%s9 + $0x88] sm:$0xff]
      %v631 = vld [vmem:[%s9 + $0x90] sm:$0xff]
      %v632 = vld [vmem:[%s9 + $0x98] sm:$0xff]
      %v633 = vld [vmem:[%s9 + $0xa0] sm:$0xff]
      %v634 = vld [vmem:[%s9 + $0xa8] sm:$0xff]
      %v635 = vld [vmem:[%s9 + $0xb0] sm:$0xff]
      %v636 = vld [vmem:[%s9 + $0xb8] sm:$0xff]
      %v637 = vld [vmem:[%s9 + $0xc0] sm:$0xff]
      %v638 = vld [vmem:[%s9 + $0xc8] sm:$0xff]
      %v639 = vld [vmem:[%s9 + $0xd0] sm:$0xff]
      %v640 = vld [vmem:[%s9 + $0xd8] sm:$0xff]
      %v641 = vld [vmem:[%s9 + $0xe0] sm:$0xff]
      %v642 = vld [vmem:[%s9 + $0xe8] sm:$0xff]
      %v643 = vld [vmem:[%s9 + $0xf0] sm:$0xff]
      %v644 = vld [vmem:[%s9 + $0xf8] sm:$0xff]
      %v645 = vld [vmem:[%s9 + $0x100] sm:$0xff]
      %v646 = vld [vmem:[%s9 + $0x108] sm:$0xff]
      %v647 = vld [vmem:[%s9 + $0x110] sm:$0xff]
      %v648 = vld [vmem:[%s9 + $0x118] sm:$0xff]
      %v649 = vld [vmem:[%s9 + $0x120] sm:$0xff]
      %v650 = vld [vmem:[%s9 + $0x128] sm:$0xff]
      %v651 = vld [vmem:[%s9 + $0x130] sm:$0xff]
      %v652 = vld [vmem:[%s9 + $0x138] sm:$0xff]
      %v653 = vld [vmem:[%s9 + $0x140] sm:$0xff]
      %v654 = vld [vmem:[%s9 + $0x148] sm:$0xff]
      %v655 = vld [vmem:[%s9 + $0x150] sm:$0xff]
      %v656 = vld [vmem:[%s9 + $0x158] sm:$0xff]
      %v657 = vld [vmem:[%s9 + $0x160] sm:$0xff]
      %v658 = vld [vmem:[%s9 + $0x168] sm:$0xff]
      %v659 = vld [vmem:[%s9 + $0x170] sm:$0xff]
      %v660 = vld [vmem:[%s9 + $0x178] sm:$0xff]
      %v661 = vld [vmem:[%s9 + $0x180] sm:$0xff]
      %v662 = vld [vmem:[%s9 + $0x188] sm:$0xff]
      %v663 = vld [vmem:[%s9 + $0x190] sm:$0xff]
      %v664 = vld [vmem:[%s9 + $0x198] sm:$0xff]
      %v665 = vld [vmem:[%s9 + $0x1a0] sm:$0xff]
      %v666 = vld [vmem:[%s9 + $0x1a8] sm:$0xff]
      %v667 = vld [vmem:[%s9 + $0x1b0] sm:$0xff]
      %v668 = vld [vmem:[%s9 + $0x1b8] sm:$0xff]
      %v669 = vld [vmem:[%s9 + $0x1c0] sm:$0xff]
      %v670 = vld [vmem:[%s9 + $0x1c8] sm:$0xff]
      %v671 = vld [vmem:[%s9 + $0x1d0] sm:$0xff]
      %v672 = vld [vmem:[%s9 + $0x1d8] sm:$0xff]
      %v673 = vld [vmem:[%s9 + $0x1e0] sm:$0xff]
      %v674 = vld [vmem:[%s9 + $0x1e8] sm:$0xff]
      %v675 = vld [vmem:[%s9 + $0x1f0] sm:$0xff]
      %v676 = vld [vmem:[%s9 + $0x1f8] sm:$0xff]
      %677 = vmatprep.subr.mxu0 %v644
      %678 = vmatpush1.msra.mxu0 %v643
      %679 = vmatprep.subr.mxu0 %v642
      %680 = vmatpush1.msra.mxu0 %v641
      %681 = vmatprep.subr.mxu0 %v640
      %682 = vmatpush1.msra.mxu0 %v639
      %683 = vmatprep.subr.mxu0 %v638
      %684 = vmatpush1.msra.mxu0 %v637
      %685 = vmatprep.subr.mxu0 %v636
      %686 = vmatpush1.msra.mxu0 %v635
      %687 = vmatprep.subr.mxu0 %v634
      %688 = vmatpush1.msra.mxu0 %v633
      %689 = vmatprep.subr.mxu0 %v632
      %690 = vmatpush1.msra.mxu0 %v631
      %691 = vmatprep.subr.mxu0 %v630
      %692 = vmatpush1.msra.mxu0 %v629
      %693 = vmatprep.subr.mxu0 %v628
      %694 = vmatpush1.msra.mxu0 %v627
      %695 = vmatprep.subr.mxu0 %v626
      %696 = vmatpush1.msra.mxu0 %v625
      %697 = vmatprep.subr.mxu0 %v624
      %698 = vmatpush1.msra.mxu0 %v623
      %699 = vmatprep.subr.mxu0 %v622
      %700 = vmatpush1.msra.mxu0 %v621
      %701 = vmatprep.subr.mxu0 %v620
      %702 = vmatpush1.msra.mxu0 %v619
      %703 = vmatprep.subr.mxu0 %v618
      %704 = vmatpush1.msra.mxu0 %v617
      %705 = vmatprep.subr.mxu0 %v616
      %706 = vmatpush1.msra.mxu0 %v615
      %707 = vmatprep.subr.mxu0 %v614
      %708 = vmatpush1.msra.mxu0 %v613
      %709 = vmatprep.subr.mxu0 %v676
      %710 = vmatpush2.msra.mxu0 %v675
      %711 = vmatprep.subr.mxu0 %v674
      %712 = vmatpush2.msra.mxu0 %v673
      %713 = vmatprep.subr.mxu0 %v672
      %714 = vmatpush2.msra.mxu0 %v671
      %715 = vmatprep.subr.mxu0 %v670
      %716 = vmatpush2.msra.mxu0 %v669
      %717 = vmatprep.subr.mxu0 %v668
      %718 = vmatpush2.msra.mxu0 %v667
      %719 = vmatprep.subr.mxu0 %v666
      %720 = vmatpush2.msra.mxu0 %v665
      %721 = vmatprep.subr.mxu0 %v664
      %722 = vmatpush2.msra.mxu0 %v663
      %723 = vmatprep.subr.mxu0 %v662
      %724 = vmatpush2.msra.mxu0 %v661
      %725 = vmatprep.subr.mxu0 %v660
      %726 = vmatpush2.msra.mxu0 %v659
      %727 = vmatprep.subr.mxu0 %v658
      %728 = vmatpush2.msra.mxu0 %v657
      %729 = vmatprep.subr.mxu0 %v656
      %730 = vmatpush2.msra.mxu0 %v655
      %731 = vmatprep.subr.mxu0 %v654
      %732 = vmatpush2.msra.mxu0 %v653
      %733 = vmatprep.subr.mxu0 %v652
      %734 = vmatpush2.msra.mxu0 %v651
      %735 = vmatprep.subr.mxu0 %v650
      %736 = vmatpush2.msra.mxu0 %v649
      %737 = vmatprep.subr.mxu0 %v648
      %738 = vmatpush2.msra.mxu0 %v647
      %739 = vmatprep.subr.mxu0 %v646
      %740 = vmatpush2.msra.mxu0 %v645
      %741 = vmatprep.mubr.f32.mxu0 %v612
      %742 = vmatmul.mubr.f32.gmra.mxu0 %v611
      %v743 = vpop.f32.mrf.mxu0
      %v744 = vadd.f32 0.0, %v743
      %v745 = vpop.f32.mrf.mxu0
      %v746 = vadd.f32 0.0, %v745
      %747 = vdwg.mxu0
      %v748 = vsub.f32 %v611, %v744
      %v749 = vsub.f32 %v612, %v746
      %v750 = vmul.f32 %v748, %v748
      %v751 = vmul.f32 %v749, %v749
      %752 = vmatprep.subr.mxu0 %v644
      %753 = vmatpush1.msra.mxu0 %v643
      %754 = vmatprep.subr.mxu0 %v642
      %755 = vmatpush1.msra.mxu0 %v641
      %756 = vmatprep.subr.mxu0 %v640
      %757 = vmatpush1.msra.mxu0 %v639
      %758 = vmatprep.subr.mxu0 %v638
      %759 = vmatpush1.msra.mxu0 %v637
      %760 = vmatprep.subr.mxu0 %v636
      %761 = vmatpush1.msra.mxu0 %v635
      %762 = vmatprep.subr.mxu0 %v634
      %763 = vmatpush1.msra.mxu0 %v633
      %764 = vmatprep.subr.mxu0 %v632
      %765 = vmatpush1.msra.mxu0 %v631
      %766 = vmatprep.subr.mxu0 %v630
      %767 = vmatpush1.msra.mxu0 %v629
      %768 = vmatprep.subr.mxu0 %v628
      %769 = vmatpush1.msra.mxu0 %v627
      %770 = vmatprep.subr.mxu0 %v626
      %771 = vmatpush1.msra.mxu0 %v625
      %772 = vmatprep.subr.mxu0 %v624
      %773 = vmatpush1.msra.mxu0 %v623
      %774 = vmatprep.subr.mxu0 %v622
      %775 = vmatpush1.msra.mxu0 %v621
      %776 = vmatprep.subr.mxu0 %v620
      %777 = vmatpush1.msra.mxu0 %v619
      %778 = vmatprep.subr.mxu0 %v618
      %779 = vmatpush1.msra.mxu0 %v617
      %780 = vmatprep.subr.mxu0 %v616
      %781 = vmatpush1.msra.mxu0 %v615
      %782 = vmatprep.subr.mxu0 %v614
      %783 = vmatpush1.msra.mxu0 %v613
      %784 = vmatprep.subr.mxu0 %v676
      %785 = vmatpush2.msra.mxu0 %v675
      %786 = vmatprep.subr.mxu0 %v674
      %787 = vmatpush2.msra.mxu0 %v673
      %788 = vmatprep.subr.mxu0 %v672
      %789 = vmatpush2.msra.mxu0 %v671
      %790 = vmatprep.subr.mxu0 %v670
      %791 = vmatpush2.msra.mxu0 %v669
      %792 = vmatprep.subr.mxu0 %v668
      %793 = vmatpush2.msra.mxu0 %v667
      %794 = vmatprep.subr.mxu0 %v666
      %795 = vmatpush2.msra.mxu0 %v665
      %796 = vmatprep.subr.mxu0 %v664
      %797 = vmatpush2.msra.mxu0 %v663
      %798 = vmatprep.subr.mxu0 %v662
      %799 = vmatpush2.msra.mxu0 %v661
      %800 = vmatprep.subr.mxu0 %v660
      %801 = vmatpush2.msra.mxu0 %v659
      %802 = vmatprep.subr.mxu0 %v658
      %803 = vmatpush2.msra.mxu0 %v657
      %804 = vmatprep.subr.mxu0 %v656
      %805 = vmatpush2.msra.mxu0 %v655
      %806 = vmatprep.subr.mxu0 %v654
      %807 = vmatpush2.msra.mxu0 %v653
      %808 = vmatprep.subr.mxu0 %v652
      %809 = vmatpush2.msra.mxu0 %v651
      %810 = vmatprep.subr.mxu0 %v650
      %811 = vmatpush2.msra.mxu0 %v649
      %812 = vmatprep.subr.mxu0 %v648
      %813 = vmatpush2.msra.mxu0 %v647
      %814 = vmatprep.subr.mxu0 %v646
      %815 = vmatpush2.msra.mxu0 %v645
      %816 = vmatprep.mubr.f32.mxu0 %v751
      %817 = vmatmul.mubr.f32.gmra.mxu0 %v750
      %v818 = vpop.f32.mrf.mxu0
      %v819 = vadd.f32 1e-05, %v818
      %v820 = vpop.f32.mrf.mxu0
      %v821 = vadd.f32 1e-05, %v820
      %822 = vdwg.mxu0
      %v823 = vrsqrt.pop %v819
      %v824 = vrsqrt.pop %v821
      %v825 = vmul.f32 %v748, %v823
      %v826 = vmul.f32 %v749, %v824
      %v827 = vld [vmem:[%s7] ss:$8 sm:$0x3]
      %v829 = vlaneseq
      %v830 = vshrl.u32 %v829, 7
      %v831 = vsub.s32 0, %v830
      %v832 = vrot.slane %v827, %v831
      %v833 = vlaneseq
      %v834 = vshrl.u32 %v833, 7
      %v835 = vsub.s32 1, %v834
      %v836 = vrot.slane %v827, %v835
      %v839 = vmul.f32 %v825, %v832
      %v840 = vmul.f32 %v826, %v836
      %s841 = scalar_lea.vmem %s7, 1
      %v842 = vld [vmem:[%s841] ss:$8 sm:$0x3]
      %v844 = vlaneseq
      %v845 = vshrl.u32 %v844, 7
      %v846 = vsub.s32 0, %v845
      %v847 = vrot.slane %v842, %v846
      %v848 = vlaneseq
      %v849 = vshrl.u32 %v848, 7
      %v850 = vsub.s32 1, %v849
      %v851 = vrot.slane %v842, %v850
      %v854 = vadd.f32 %v839, %v847
      %v855 = vadd.f32 %v840, %v851
      %v856 = vld [vmem:[%s6] sm:$0xff]
      %vm857 = vcmp.gt.f32.partialorder %v854, 0.0
      %vm858 = vcmp.gt.f32.partialorder %v855, 0.0
      %860 = vset.pattern.permute.xlu0 0
      %861 = vperm.xlu0 %860, %v856
      %v862 = vpop.permute.xlu0 %861
      %v864 = vmul.f32 %v862, %v854
      %v865 = vmul.f32 %v862, %v855
      %v866 = vsel %vm857, %v854, %v864
      %v867 = vsel %vm858, %v855, %v865
      %868 = vst [vmem:[#allocation2 + $0x30] sm:$0xff] %v866
      %869 = vst [vmem:[#allocation2 + $0x38] sm:$0xff] %v867
      %v870 = vld [vmem:[#allocation2 + $0x30] sm:$0xff]
      %v871 = vld [vmem:[#allocation2 + $0x38] sm:$0xff]
      %v872 = vld [vmem:[#allocation2 + $0x40] sm:$0xff]
      %v873 = vld [vmem:[#allocation2 + $0x48] sm:$0xff]
      %v874 = vld [vmem:[%s2] sm:$0xff]
      %v875 = vld [vmem:[%s2 + $0x8] sm:$0xff]
      %v876 = vld [vmem:[%s2 + $0x10] sm:$0xff]
      %v877 = vld [vmem:[%s2 + $0x18] sm:$0xff]
      %v878 = vld [vmem:[%s2 + $0x20] sm:$0xff]
      %v879 = vld [vmem:[%s2 + $0x28] sm:$0xff]
      %vm880 = vcmask 130048
      %v882 = vsel %vm880, %v874, 0
      %v885 = vsel %vm880, %v875, 0
      %v888 = vsel %vm880, %v876, 0
      %v891 = vsel %vm880, %v877, 0
      %v894 = vsel %vm880, %v878, 0
      %v897 = vsel %vm880, %v879, 0
      %899 = vmatprep.subr.mxu0 0.0
      %900 = vmatpush1.msra.mxu0 0.0
      %901 = vmatprep.subr.mxu0 0.0
      %902 = vmatpush1.msra.mxu0 0.0
      %903 = vmatprep.subr.mxu0 0.0
      %904 = vmatpush1.msra.mxu0 0.0
      %905 = vmatprep.subr.mxu0 0.0
      %906 = vmatpush1.msra.mxu0 0.0
      %907 = vmatprep.subr.mxu0 0.0
      %908 = vmatpush1.msra.mxu0 0.0
      %909 = vmatprep.subr.mxu0 0.0
      %910 = vmatpush1.msra.mxu0 0.0
      %911 = vmatprep.subr.mxu0 0.0
      %912 = vmatpush1.msra.mxu0 0.0
      %913 = vmatprep.subr.mxu0 0.0
      %914 = vmatpush1.msra.mxu0 0.0
      %915 = vmatprep.subr.mxu0 0.0
      %916 = vmatpush1.msra.mxu0 0.0
      %917 = vmatprep.subr.mxu0 0.0
      %918 = vmatpush1.msra.mxu0 0.0
      %919 = vmatprep.subr.mxu0 0.0
      %920 = vmatpush1.msra.mxu0 0.0
      %921 = vmatprep.subr.mxu0 0.0
      %922 = vmatpush1.msra.mxu0 0.0
      %923 = vmatprep.subr.mxu0 0.0
      %924 = vmatpush1.msra.mxu0 0.0
      %925 = vmatprep.subr.mxu0 0.0
      %926 = vmatpush1.msra.mxu0 0.0
      %927 = vmatprep.subr.mxu0 %v873
      %928 = vmatpush1.msra.mxu0 %v872
      %929 = vmatprep.subr.mxu0 %v871
      %930 = vmatpush1.msra.mxu0 %v870
      %931 = vmatprep.subr.mxu0 0.0
      %932 = vmatpush2.msra.mxu0 0.0
      %933 = vmatprep.subr.mxu0 0.0
      %934 = vmatpush2.msra.mxu0 0.0
      %935 = vmatprep.subr.mxu0 0.0
      %936 = vmatpush2.msra.mxu0 0.0
      %937 = vmatprep.subr.mxu0 0.0
      %938 = vmatpush2.msra.mxu0 0.0
      %939 = vmatprep.subr.mxu0 0.0
      %940 = vmatpush2.msra.mxu0 0.0
      %941 = vmatprep.subr.mxu0 0.0
      %942 = vmatpush2.msra.mxu0 0.0
      %943 = vmatprep.subr.mxu0 0.0
      %944 = vmatpush2.msra.mxu0 0.0
      %945 = vmatprep.subr.mxu0 0.0
      %946 = vmatpush2.msra.mxu0 0.0
      %947 = vmatprep.subr.mxu0 0.0
      %948 = vmatpush2.msra.mxu0 0.0
      %949 = vmatprep.subr.mxu0 0.0
      %950 = vmatpush2.msra.mxu0 0.0
      %951 = vmatprep.subr.mxu0 0.0
      %952 = vmatpush2.msra.mxu0 0.0
      %953 = vmatprep.subr.mxu0 0.0
      %954 = vmatpush2.msra.mxu0 0.0
      %955 = vmatprep.subr.mxu0 0.0
      %956 = vmatpush2.msra.mxu0 0.0
      %957 = vmatprep.subr.mxu0 0.0
      %958 = vmatpush2.msra.mxu0 0.0
      %959 = vmatprep.subr.mxu0 0.0
      %960 = vmatpush2.msra.mxu0 0.0
      %961 = vmatprep.subr.mxu0 0.0
      %962 = vmatpush2.msra.mxu0 0.0
      %963 = vmatprep.mubr.f32.mxu0 0.0
      %964 = vmatmul.mubr.f32.gmra.mxu0 %v882
      %v965 = vpop.f32.mrf.mxu0
      %v966 = vadd.f32 0.0, %v965
      %v967 = vpop.f32.mrf.mxu0
      %v968 = vadd.f32 0.0, %v967
      %969 = vmatprep.mubr.f32.mxu0 0.0
      %970 = vmatmul.mubr.f32.gmra.mxu0 %v885
      %v971 = vpop.f32.mrf.mxu0
      %v972 = vadd.f32 0.0, %v971
      %v973 = vpop.f32.mrf.mxu0
      %v974 = vadd.f32 0.0, %v973
      %975 = vmatprep.mubr.f32.mxu0 0.0
      %976 = vmatmul.mubr.f32.gmra.mxu0 %v888
      %v977 = vpop.f32.mrf.mxu0
      %v978 = vadd.f32 0.0, %v977
      %v979 = vpop.f32.mrf.mxu0
      %v980 = vadd.f32 0.0, %v979
      %981 = vmatprep.mubr.f32.mxu0 0.0
      %982 = vmatmul.mubr.f32.gmra.mxu0 %v891
      %v983 = vpop.f32.mrf.mxu0
      %v984 = vadd.f32 0.0, %v983
      %v985 = vpop.f32.mrf.mxu0
      %v986 = vadd.f32 0.0, %v985
      %987 = vmatprep.mubr.f32.mxu0 0.0
      %988 = vmatmul.mubr.f32.gmra.mxu0 %v894
      %v989 = vpop.f32.mrf.mxu0
      %v990 = vadd.f32 0.0, %v989
      %v991 = vpop.f32.mrf.mxu0
      %v992 = vadd.f32 0.0, %v991
      %993 = vmatprep.mubr.f32.mxu0 0.0
      %994 = vmatmul.mubr.f32.gmra.mxu0 %v897
      %v995 = vpop.f32.mrf.mxu0
      %v996 = vadd.f32 0.0, %v995
      %v997 = vpop.f32.mrf.mxu0
      %v998 = vadd.f32 0.0, %v997
      %999 = vdwg.mxu0
      %1000 = vrot.lane.b32.xlu0 %v966, 33
      %v1001 = vpop.permute.xlu0 %1000
      %1002 = vrot.lane.b32.xlu0 %v968, 33
      %v1003 = vpop.permute.xlu0 %1002
      %vm1004 = vcmp.lt.s32.totalorder %v497, 33
      %v1005 = vsel %vm1004, %v1001, %v1003
      %v1006 = vsel %vm1004, %v1003, %v1001
      %s1007 = scalar_lea.vmem %s8, 6
      %v1008 = vld [vmem:[%s1007] ss:$8 sm:$0x3]
      %v1010 = vlaneseq
      %v1011 = vshrl.u32 %v1010, 7
      %v1012 = vsub.s32 0, %v1011
      %v1013 = vrot.slane %v1008, %v1012
      %v1014 = vlaneseq
      %v1015 = vshrl.u32 %v1014, 7
      %v1016 = vsub.s32 1, %v1015
      %v1017 = vrot.slane %v1008, %v1016
      %v1020 = vmul.f32 %v1006, %v1013
      %v1021 = vmul.f32 %v1005, %v1017
      %v1022 = vadd.f32 %v990, %v1020
      %v1023 = vadd.f32 %v992, %v1021
      %1024 = vrot.lane.b32.xlu0 %v972, 32
      %v1025 = vpop.permute.xlu0 %1024
      %1026 = vrot.lane.b32.xlu0 %v974, 32
      %v1027 = vpop.permute.xlu0 %1026
      %vm1028 = vcmp.lt.s32.totalorder %v497, 32
      %v1029 = vsel %vm1028, %v1025, %v1027
      %v1030 = vsel %vm1028, %v1027, %v1025
      %s1031 = scalar_lea.vmem %s8, 7
      %v1032 = vld [vmem:[%s1031] ss:$8 sm:$0x3]
      %v1034 = vlaneseq
      %v1035 = vshrl.u32 %v1034, 7
      %v1036 = vsub.s32 0, %v1035
      %v1037 = vrot.slane %v1032, %v1036
      %v1038 = vlaneseq
      %v1039 = vshrl.u32 %v1038, 7
      %v1040 = vsub.s32 1, %v1039
      %v1041 = vrot.slane %v1032, %v1040
      %v1044 = vmul.f32 %v1030, %v1037
      %v1045 = vmul.f32 %v1029, %v1041
      %v1046 = vadd.f32 %v1022, %v1044
      %v1047 = vadd.f32 %v1023, %v1045
      %1048 = vrot.lane.b32.xlu0 %v978, 31
      %v1049 = vpop.permute.xlu0 %1048
      %1050 = vrot.lane.b32.xlu0 %v980, 31
      %v1051 = vpop.permute.xlu0 %1050
      %vm1052 = vcmp.lt.s32.totalorder %v497, 31
      %v1053 = vsel %vm1052, %v1049, %v1051
      %v1054 = vsel %vm1052, %v1051, %v1049
      %s1055 = scalar_lea.vmem %s8, 16
      %v1056 = vld [vmem:[%s1055] ss:$8 sm:$0x3]
      %v1058 = vlaneseq
      %v1059 = vshrl.u32 %v1058, 7
      %v1060 = vsub.s32 0, %v1059
      %v1061 = vrot.slane %v1056, %v1060
      %v1062 = vlaneseq
      %v1063 = vshrl.u32 %v1062, 7
      %v1064 = vsub.s32 1, %v1063
      %v1065 = vrot.slane %v1056, %v1064
      %v1068 = vmul.f32 %v1054, %v1061
      %v1069 = vmul.f32 %v1053, %v1065
      %v1070 = vadd.f32 %v1046, %v1068
      %v1071 = vadd.f32 %v1047, %v1069
      %1072 = vrot.lane.b32.xlu0 %v984, 1
      %v1073 = vpop.permute.xlu0 %1072
      %1074 = vrot.lane.b32.xlu0 %v986, 1
      %v1075 = vpop.permute.xlu0 %1074
      %v1076 = vsel %vm569, %v1073, %v1075
      %v1077 = vsel %vm569, %v1075, %v1073
      %s1078 = scalar_lea.vmem %s8, 17
      %v1079 = vld [vmem:[%s1078] ss:$8 sm:$0x3]
      %v1081 = vlaneseq
      %v1082 = vshrl.u32 %v1081, 7
      %v1083 = vsub.s32 0, %v1082
      %v1084 = vrot.slane %v1079, %v1083
      %v1085 = vlaneseq
      %v1086 = vshrl.u32 %v1085, 7
      %v1087 = vsub.s32 1, %v1086
      %v1088 = vrot.slane %v1079, %v1087
      %v1091 = vmul.f32 %v1077, %v1084
      %v1092 = vmul.f32 %v1076, %v1088
      %v1093 = vadd.f32 %v1070, %v1091
      %v1094 = vadd.f32 %v1071, %v1092
      %1095 = vrot.lane.b32.xlu0 %v996, 127
      %v1096 = vpop.permute.xlu0 %1095
      %1097 = vrot.lane.b32.xlu0 %v998, 127
      %v1098 = vpop.permute.xlu0 %1097
      %v1099 = vsel %vm593, %v1096, %v1098
      %v1100 = vsel %vm593, %v1098, %v1096
      %s1101 = scalar_lea.vmem %s8, 19
      %v1102 = vld [vmem:[%s1101] ss:$8 sm:$0x3]
      %v1104 = vlaneseq
      %v1105 = vshrl.u32 %v1104, 7
      %v1106 = vsub.s32 0, %v1105
      %v1107 = vrot.slane %v1102, %v1106
      %v1108 = vlaneseq
      %v1109 = vshrl.u32 %v1108, 7
      %v1110 = vsub.s32 1, %v1109
      %v1111 = vrot.slane %v1102, %v1110
      %v1114 = vmul.f32 %v1099, %v1107
      %v1115 = vmul.f32 %v1100, %v1111
      %v1116 = vadd.f32 %v1093, %v1114
      %v1117 = vadd.f32 %v1094, %v1115
      %v1118 = vld [vmem:[%s9] sm:$0xff]
      %v1119 = vld [vmem:[%s9 + $0x8] sm:$0xff]
      %v1120 = vld [vmem:[%s9 + $0x10] sm:$0xff]
      %v1121 = vld [vmem:[%s9 + $0x18] sm:$0xff]
      %v1122 = vld [vmem:[%s9 + $0x20] sm:$0xff]
      %v1123 = vld [vmem:[%s9 + $0x28] sm:$0xff]
      %v1124 = vld [vmem:[%s9 + $0x30] sm:$0xff]
      %v1125 = vld [vmem:[%s9 + $0x38] sm:$0xff]
      %v1126 = vld [vmem:[%s9 + $0x40] sm:$0xff]
      %v1127 = vld [vmem:[%s9 + $0x48] sm:$0xff]
      %v1128 = vld [vmem:[%s9 + $0x50] sm:$0xff]
      %v1129 = vld [vmem:[%s9 + $0x58] sm:$0xff]
      %v1130 = vld [vmem:[%s9 + $0x60] sm:$0xff]
      %v1131 = vld [vmem:[%s9 + $0x68] sm:$0xff]
      %v1132 = vld [vmem:[%s9 + $0x70] sm:$0xff]
      %v1133 = vld [vmem:[%s9 + $0x78] sm:$0xff]
      %v1134 = vld [vmem:[%s9 + $0x80] sm:$0xff]
      %v1135 = vld [vmem:[%s9 + $0x88] sm:$0xff]
      %v1136 = vld [vmem:[%s9 + $0x90] sm:$0xff]
      %v1137 = vld [vmem:[%s9 + $0x98] sm:$0xff]
      %v1138 = vld [vmem:[%s9 + $0xa0] sm:$0xff]
      %v1139 = vld [vmem:[%s9 + $0xa8] sm:$0xff]
      %v1140 = vld [vmem:[%s9 + $0xb0] sm:$0xff]
      %v1141 = vld [vmem:[%s9 + $0xb8] sm:$0xff]
      %v1142 = vld [vmem:[%s9 + $0xc0] sm:$0xff]
      %v1143 = vld [vmem:[%s9 + $0xc8] sm:$0xff]
      %v1144 = vld [vmem:[%s9 + $0xd0] sm:$0xff]
      %v1145 = vld [vmem:[%s9 + $0xd8] sm:$0xff]
      %v1146 = vld [vmem:[%s9 + $0xe0] sm:$0xff]
      %v1147 = vld [vmem:[%s9 + $0xe8] sm:$0xff]
      %v1148 = vld [vmem:[%s9 + $0xf0] sm:$0xff]
      %v1149 = vld [vmem:[%s9 + $0xf8] sm:$0xff]
      %v1150 = vld [vmem:[%s9 + $0x100] sm:$0xff]
      %v1151 = vld [vmem:[%s9 + $0x108] sm:$0xff]
      %v1152 = vld [vmem:[%s9 + $0x110] sm:$0xff]
      %v1153 = vld [vmem:[%s9 + $0x118] sm:$0xff]
      %v1154 = vld [vmem:[%s9 + $0x120] sm:$0xff]
      %v1155 = vld [vmem:[%s9 + $0x128] sm:$0xff]
      %v1156 = vld [vmem:[%s9 + $0x130] sm:$0xff]
      %v1157 = vld [vmem:[%s9 + $0x138] sm:$0xff]
      %v1158 = vld [vmem:[%s9 + $0x140] sm:$0xff]
      %v1159 = vld [vmem:[%s9 + $0x148] sm:$0xff]
      %v1160 = vld [vmem:[%s9 + $0x150] sm:$0xff]
      %v1161 = vld [vmem:[%s9 + $0x158] sm:$0xff]
      %v1162 = vld [vmem:[%s9 + $0x160] sm:$0xff]
      %v1163 = vld [vmem:[%s9 + $0x168] sm:$0xff]
      %v1164 = vld [vmem:[%s9 + $0x170] sm:$0xff]
      %v1165 = vld [vmem:[%s9 + $0x178] sm:$0xff]
      %v1166 = vld [vmem:[%s9 + $0x180] sm:$0xff]
      %v1167 = vld [vmem:[%s9 + $0x188] sm:$0xff]
      %v1168 = vld [vmem:[%s9 + $0x190] sm:$0xff]
      %v1169 = vld [vmem:[%s9 + $0x198] sm:$0xff]
      %v1170 = vld [vmem:[%s9 + $0x1a0] sm:$0xff]
      %v1171 = vld [vmem:[%s9 + $0x1a8] sm:$0xff]
      %v1172 = vld [vmem:[%s9 + $0x1b0] sm:$0xff]
      %v1173 = vld [vmem:[%s9 + $0x1b8] sm:$0xff]
      %v1174 = vld [vmem:[%s9 + $0x1c0] sm:$0xff]
      %v1175 = vld [vmem:[%s9 + $0x1c8] sm:$0xff]
      %v1176 = vld [vmem:[%s9 + $0x1d0] sm:$0xff]
      %v1177 = vld [vmem:[%s9 + $0x1d8] sm:$0xff]
      %v1178 = vld [vmem:[%s9 + $0x1e0] sm:$0xff]
      %v1179 = vld [vmem:[%s9 + $0x1e8] sm:$0xff]
      %v1180 = vld [vmem:[%s9 + $0x1f0] sm:$0xff]
      %v1181 = vld [vmem:[%s9 + $0x1f8] sm:$0xff]
      %1182 = vmatprep.subr.mxu0 %v1149
      %1183 = vmatpush1.msra.mxu0 %v1148
      %1184 = vmatprep.subr.mxu0 %v1147
      %1185 = vmatpush1.msra.mxu0 %v1146
      %1186 = vmatprep.subr.mxu0 %v1145
      %1187 = vmatpush1.msra.mxu0 %v1144
      %1188 = vmatprep.subr.mxu0 %v1143
      %1189 = vmatpush1.msra.mxu0 %v1142
      %1190 = vmatprep.subr.mxu0 %v1141
      %1191 = vmatpush1.msra.mxu0 %v1140
      %1192 = vmatprep.subr.mxu0 %v1139
      %1193 = vmatpush1.msra.mxu0 %v1138
      %1194 = vmatprep.subr.mxu0 %v1137
      %1195 = vmatpush1.msra.mxu0 %v1136
      %1196 = vmatprep.subr.mxu0 %v1135
      %1197 = vmatpush1.msra.mxu0 %v1134
      %1198 = vmatprep.subr.mxu0 %v1133
      %1199 = vmatpush1.msra.mxu0 %v1132
      %1200 = vmatprep.subr.mxu0 %v1131
      %1201 = vmatpush1.msra.mxu0 %v1130
      %1202 = vmatprep.subr.mxu0 %v1129
      %1203 = vmatpush1.msra.mxu0 %v1128
      %1204 = vmatprep.subr.mxu0 %v1127
      %1205 = vmatpush1.msra.mxu0 %v1126
      %1206 = vmatprep.subr.mxu0 %v1125
      %1207 = vmatpush1.msra.mxu0 %v1124
      %1208 = vmatprep.subr.mxu0 %v1123
      %1209 = vmatpush1.msra.mxu0 %v1122
      %1210 = vmatprep.subr.mxu0 %v1121
      %1211 = vmatpush1.msra.mxu0 %v1120
      %1212 = vmatprep.subr.mxu0 %v1119
      %1213 = vmatpush1.msra.mxu0 %v1118
      %1214 = vmatprep.subr.mxu0 %v1181
      %1215 = vmatpush2.msra.mxu0 %v1180
      %1216 = vmatprep.subr.mxu0 %v1179
      %1217 = vmatpush2.msra.mxu0 %v1178
      %1218 = vmatprep.subr.mxu0 %v1177
      %1219 = vmatpush2.msra.mxu0 %v1176
      %1220 = vmatprep.subr.mxu0 %v1175
      %1221 = vmatpush2.msra.mxu0 %v1174
      %1222 = vmatprep.subr.mxu0 %v1173
      %1223 = vmatpush2.msra.mxu0 %v1172
      %1224 = vmatprep.subr.mxu0 %v1171
      %1225 = vmatpush2.msra.mxu0 %v1170
      %1226 = vmatprep.subr.mxu0 %v1169
      %1227 = vmatpush2.msra.mxu0 %v1168
      %1228 = vmatprep.subr.mxu0 %v1167
      %1229 = vmatpush2.msra.mxu0 %v1166
      %1230 = vmatprep.subr.mxu0 %v1165
      %1231 = vmatpush2.msra.mxu0 %v1164
      %1232 = vmatprep.subr.mxu0 %v1163
      %1233 = vmatpush2.msra.mxu0 %v1162
      %1234 = vmatprep.subr.mxu0 %v1161
      %1235 = vmatpush2.msra.mxu0 %v1160
      %1236 = vmatprep.subr.mxu0 %v1159
      %1237 = vmatpush2.msra.mxu0 %v1158
      %1238 = vmatprep.subr.mxu0 %v1157
      %1239 = vmatpush2.msra.mxu0 %v1156
      %1240 = vmatprep.subr.mxu0 %v1155
      %1241 = vmatpush2.msra.mxu0 %v1154
      %1242 = vmatprep.subr.mxu0 %v1153
      %1243 = vmatpush2.msra.mxu0 %v1152
      %1244 = vmatprep.subr.mxu0 %v1151
      %1245 = vmatpush2.msra.mxu0 %v1150
      %1246 = vmatprep.mubr.f32.mxu0 %v1117
      %1247 = vmatmul.mubr.f32.gmra.mxu0 %v1116
      %v1248 = vpop.f32.mrf.mxu0
      %v1249 = vadd.f32 0.0, %v1248
      %v1250 = vpop.f32.mrf.mxu0
      %v1251 = vadd.f32 0.0, %v1250
      %1252 = vdwg.mxu0
      %v1253 = vsub.f32 %v1116, %v1249
      %v1254 = vsub.f32 %v1117, %v1251
      %v1255 = vmul.f32 %v1253, %v1253
      %v1256 = vmul.f32 %v1254, %v1254
      %1257 = vmatprep.subr.mxu0 %v1149
      %1258 = vmatpush1.msra.mxu0 %v1148
      %1259 = vmatprep.subr.mxu0 %v1147
      %1260 = vmatpush1.msra.mxu0 %v1146
      %1261 = vmatprep.subr.mxu0 %v1145
      %1262 = vmatpush1.msra.mxu0 %v1144
      %1263 = vmatprep.subr.mxu0 %v1143
      %1264 = vmatpush1.msra.mxu0 %v1142
      %1265 = vmatprep.subr.mxu0 %v1141
      %1266 = vmatpush1.msra.mxu0 %v1140
      %1267 = vmatprep.subr.mxu0 %v1139
      %1268 = vmatpush1.msra.mxu0 %v1138
      %1269 = vmatprep.subr.mxu0 %v1137
      %1270 = vmatpush1.msra.mxu0 %v1136
      %1271 = vmatprep.subr.mxu0 %v1135
      %1272 = vmatpush1.msra.mxu0 %v1134
      %1273 = vmatprep.subr.mxu0 %v1133
      %1274 = vmatpush1.msra.mxu0 %v1132
      %1275 = vmatprep.subr.mxu0 %v1131
      %1276 = vmatpush1.msra.mxu0 %v1130
      %1277 = vmatprep.subr.mxu0 %v1129
      %1278 = vmatpush1.msra.mxu0 %v1128
      %1279 = vmatprep.subr.mxu0 %v1127
      %1280 = vmatpush1.msra.mxu0 %v1126
      %1281 = vmatprep.subr.mxu0 %v1125
      %1282 = vmatpush1.msra.mxu0 %v1124
      %1283 = vmatprep.subr.mxu0 %v1123
      %1284 = vmatpush1.msra.mxu0 %v1122
      %1285 = vmatprep.subr.mxu0 %v1121
      %1286 = vmatpush1.msra.mxu0 %v1120
      %1287 = vmatprep.subr.mxu0 %v1119
      %1288 = vmatpush1.msra.mxu0 %v1118
      %1289 = vmatprep.subr.mxu0 %v1181
      %1290 = vmatpush2.msra.mxu0 %v1180
      %1291 = vmatprep.subr.mxu0 %v1179
      %1292 = vmatpush2.msra.mxu0 %v1178
      %1293 = vmatprep.subr.mxu0 %v1177
      %1294 = vmatpush2.msra.mxu0 %v1176
      %1295 = vmatprep.subr.mxu0 %v1175
      %1296 = vmatpush2.msra.mxu0 %v1174
      %1297 = vmatprep.subr.mxu0 %v1173
      %1298 = vmatpush2.msra.mxu0 %v1172
      %1299 = vmatprep.subr.mxu0 %v1171
      %1300 = vmatpush2.msra.mxu0 %v1170
      %1301 = vmatprep.subr.mxu0 %v1169
      %1302 = vmatpush2.msra.mxu0 %v1168
      %1303 = vmatprep.subr.mxu0 %v1167
      %1304 = vmatpush2.msra.mxu0 %v1166
      %1305 = vmatprep.subr.mxu0 %v1165
      %1306 = vmatpush2.msra.mxu0 %v1164
      %1307 = vmatprep.subr.mxu0 %v1163
      %1308 = vmatpush2.msra.mxu0 %v1162
      %1309 = vmatprep.subr.mxu0 %v1161
      %1310 = vmatpush2.msra.mxu0 %v1160
      %1311 = vmatprep.subr.mxu0 %v1159
      %1312 = vmatpush2.msra.mxu0 %v1158
      %1313 = vmatprep.subr.mxu0 %v1157
      %1314 = vmatpush2.msra.mxu0 %v1156
      %1315 = vmatprep.subr.mxu0 %v1155
      %1316 = vmatpush2.msra.mxu0 %v1154
      %1317 = vmatprep.subr.mxu0 %v1153
      %1318 = vmatpush2.msra.mxu0 %v1152
      %1319 = vmatprep.subr.mxu0 %v1151
      %1320 = vmatpush2.msra.mxu0 %v1150
      %1321 = vmatprep.mubr.f32.mxu0 %v1256
      %1322 = vmatmul.mubr.f32.gmra.mxu0 %v1255
      %v1323 = vpop.f32.mrf.mxu0
      %v1324 = vadd.f32 1e-05, %v1323
      %v1325 = vpop.f32.mrf.mxu0
      %v1326 = vadd.f32 1e-05, %v1325
      %1327 = vdwg.mxu0
      %v1328 = vrsqrt.pop %v1324
      %v1329 = vrsqrt.pop %v1326
      %v1330 = vmul.f32 %v1253, %v1328
      %v1331 = vmul.f32 %v1254, %v1329
      %s1332 = scalar_lea.vmem %s7, 2
      %v1333 = vld [vmem:[%s1332] ss:$8 sm:$0x3]
      %v1335 = vlaneseq
      %v1336 = vshrl.u32 %v1335, 7
      %v1337 = vsub.s32 0, %v1336
      %v1338 = vrot.slane %v1333, %v1337
      %v1339 = vlaneseq
      %v1340 = vshrl.u32 %v1339, 7
      %v1341 = vsub.s32 1, %v1340
      %v1342 = vrot.slane %v1333, %v1341
      %v1345 = vmul.f32 %v1330, %v1338
      %v1346 = vmul.f32 %v1331, %v1342
      %s1347 = scalar_lea.vmem %s7, 3
      %v1348 = vld [vmem:[%s1347] ss:$8 sm:$0x3]
      %v1350 = vlaneseq
      %v1351 = vshrl.u32 %v1350, 7
      %v1352 = vsub.s32 0, %v1351
      %v1353 = vrot.slane %v1348, %v1352
      %v1354 = vlaneseq
      %v1355 = vshrl.u32 %v1354, 7
      %v1356 = vsub.s32 1, %v1355
      %v1357 = vrot.slane %v1348, %v1356
      %v1360 = vadd.f32 %v1345, %v1353
      %v1361 = vadd.f32 %v1346, %v1357
      %v1362 = vld [vmem:[%s6] sm:$0xff]
      %vm1363 = vcmp.gt.f32.partialorder %v1360, 0.0
      %vm1364 = vcmp.gt.f32.partialorder %v1361, 0.0
      %1366 = vset.pattern.permute.xlu0 1
      %1367 = vperm.xlu0 %1366, %v1362
      %v1368 = vpop.permute.xlu0 %1367
      %v1370 = vmul.f32 %v1368, %v1360
      %v1371 = vmul.f32 %v1368, %v1361
      %v1372 = vsel %vm1363, %v1360, %v1370
      %v1373 = vsel %vm1364, %v1361, %v1371
      %1374 = vst [vmem:[#allocation2 + $0x20] sm:$0xff] %v1372
      %1375 = vst [vmem:[#allocation2 + $0x28] sm:$0xff] %v1373
      %v1376 = vld [vmem:[#allocation2 + $0x20] sm:$0xff]
      %v1377 = vld [vmem:[#allocation2 + $0x28] sm:$0xff]
      %v1378 = vld [vmem:[#allocation2 + $0x30] sm:$0xff]
      %v1379 = vld [vmem:[#allocation2 + $0x38] sm:$0xff]
      %v1380 = vld [vmem:[#allocation2 + $0x40] sm:$0xff]
      %v1381 = vld [vmem:[#allocation2 + $0x48] sm:$0xff]
      %v1382 = vld [vmem:[%s3] sm:$0xff]
      %v1383 = vld [vmem:[%s3 + $0x8] sm:$0xff]
      %v1384 = vld [vmem:[%s3 + $0x10] sm:$0xff]
      %v1385 = vld [vmem:[%s3 + $0x18] sm:$0xff]
      %v1386 = vld [vmem:[%s3 + $0x20] sm:$0xff]
      %v1387 = vld [vmem:[%s3 + $0x28] sm:$0xff]
      %vm1388 = vcmask 195584
      %v1390 = vsel %vm1388, %v1382, 0
      %v1393 = vsel %vm1388, %v1383, 0
      %v1396 = vsel %vm1388, %v1384, 0
      %v1399 = vsel %vm1388, %v1385, 0
      %v1402 = vsel %vm1388, %v1386, 0
      %v1405 = vsel %vm1388, %v1387, 0
      %1407 = vmatprep.subr.mxu0 0.0
      %1408 = vmatpush1.msra.mxu0 0.0
      %1409 = vmatprep.subr.mxu0 0.0
      %1410 = vmatpush1.msra.mxu0 0.0
      %1411 = vmatprep.subr.mxu0 0.0
      %1412 = vmatpush1.msra.mxu0 0.0
      %1413 = vmatprep.subr.mxu0 0.0
      %1414 = vmatpush1.msra.mxu0 0.0
      %1415 = vmatprep.subr.mxu0 0.0
      %1416 = vmatpush1.msra.mxu0 0.0
      %1417 = vmatprep.subr.mxu0 0.0
      %1418 = vmatpush1.msra.mxu0 0.0
      %1419 = vmatprep.subr.mxu0 0.0
      %1420 = vmatpush1.msra.mxu0 0.0
      %1421 = vmatprep.subr.mxu0 0.0
      %1422 = vmatpush1.msra.mxu0 0.0
      %1423 = vmatprep.subr.mxu0 0.0
      %1424 = vmatpush1.msra.mxu0 0.0
      %1425 = vmatprep.subr.mxu0 0.0
      %1426 = vmatpush1.msra.mxu0 0.0
      %1427 = vmatprep.subr.mxu0 0.0
      %1428 = vmatpush1.msra.mxu0 0.0
      %1429 = vmatprep.subr.mxu0 0.0
      %1430 = vmatpush1.msra.mxu0 0.0
      %1431 = vmatprep.subr.mxu0 0.0
      %1432 = vmatpush1.msra.mxu0 0.0
      %1433 = vmatprep.subr.mxu0 %v1381
      %1434 = vmatpush1.msra.mxu0 %v1380
      %1435 = vmatprep.subr.mxu0 %v1379
      %1436 = vmatpush1.msra.mxu0 %v1378
      %1437 = vmatprep.subr.mxu0 %v1377
      %1438 = vmatpush1.msra.mxu0 %v1376
      %1439 = vmatprep.subr.mxu0 0.0
      %1440 = vmatpush2.msra.mxu0 0.0
      %1441 = vmatprep.subr.mxu0 0.0
      %1442 = vmatpush2.msra.mxu0 0.0
      %1443 = vmatprep.subr.mxu0 0.0
      %1444 = vmatpush2.msra.mxu0 0.0
      %1445 = vmatprep.subr.mxu0 0.0
      %1446 = vmatpush2.msra.mxu0 0.0
      %1447 = vmatprep.subr.mxu0 0.0
      %1448 = vmatpush2.msra.mxu0 0.0
      %1449 = vmatprep.subr.mxu0 0.0
      %1450 = vmatpush2.msra.mxu0 0.0
      %1451 = vmatprep.subr.mxu0 0.0
      %1452 = vmatpush2.msra.mxu0 0.0
      %1453 = vmatprep.subr.mxu0 0.0
      %1454 = vmatpush2.msra.mxu0 0.0
      %1455 = vmatprep.subr.mxu0 0.0
      %1456 = vmatpush2.msra.mxu0 0.0
      %1457 = vmatprep.subr.mxu0 0.0
      %1458 = vmatpush2.msra.mxu0 0.0
      %1459 = vmatprep.subr.mxu0 0.0
      %1460 = vmatpush2.msra.mxu0 0.0
      %1461 = vmatprep.subr.mxu0 0.0
      %1462 = vmatpush2.msra.mxu0 0.0
      %1463 = vmatprep.subr.mxu0 0.0
      %1464 = vmatpush2.msra.mxu0 0.0
      %1465 = vmatprep.subr.mxu0 0.0
      %1466 = vmatpush2.msra.mxu0 0.0
      %1467 = vmatprep.subr.mxu0 0.0
      %1468 = vmatpush2.msra.mxu0 0.0
      %1469 = vmatprep.subr.mxu0 0.0
      %1470 = vmatpush2.msra.mxu0 0.0
      %1471 = vmatprep.mubr.f32.mxu0 0.0
      %1472 = vmatmul.mubr.f32.gmra.mxu0 %v1390
      %v1473 = vpop.f32.mrf.mxu0
      %v1474 = vadd.f32 0.0, %v1473
      %v1475 = vpop.f32.mrf.mxu0
      %v1476 = vadd.f32 0.0, %v1475
      %1477 = vmatprep.mubr.f32.mxu0 0.0
      %1478 = vmatmul.mubr.f32.gmra.mxu0 %v1393
      %v1479 = vpop.f32.mrf.mxu0
      %v1480 = vadd.f32 0.0, %v1479
      %v1481 = vpop.f32.mrf.mxu0
      %v1482 = vadd.f32 0.0, %v1481
      %1483 = vmatprep.mubr.f32.mxu0 0.0
      %1484 = vmatmul.mubr.f32.gmra.mxu0 %v1396
      %v1485 = vpop.f32.mrf.mxu0
      %v1486 = vadd.f32 0.0, %v1485
      %v1487 = vpop.f32.mrf.mxu0
      %v1488 = vadd.f32 0.0, %v1487
      %1489 = vmatprep.mubr.f32.mxu0 0.0
      %1490 = vmatmul.mubr.f32.gmra.mxu0 %v1399
      %v1491 = vpop.f32.mrf.mxu0
      %v1492 = vadd.f32 0.0, %v1491
      %v1493 = vpop.f32.mrf.mxu0
      %v1494 = vadd.f32 0.0, %v1493
      %1495 = vmatprep.mubr.f32.mxu0 0.0
      %1496 = vmatmul.mubr.f32.gmra.mxu0 %v1402
      %v1497 = vpop.f32.mrf.mxu0
      %v1498 = vadd.f32 0.0, %v1497
      %v1499 = vpop.f32.mrf.mxu0
      %v1500 = vadd.f32 0.0, %v1499
      %1501 = vmatprep.mubr.f32.mxu0 0.0
      %1502 = vmatmul.mubr.f32.gmra.mxu0 %v1405
      %v1503 = vpop.f32.mrf.mxu0
      %v1504 = vadd.f32 0.0, %v1503
      %v1505 = vpop.f32.mrf.mxu0
      %v1506 = vadd.f32 0.0, %v1505
      %1507 = vdwg.mxu0
      %1508 = vrot.lane.b32.xlu0 %v1474, 65
      %v1509 = vpop.permute.xlu0 %1508
      %1510 = vrot.lane.b32.xlu0 %v1476, 65
      %v1511 = vpop.permute.xlu0 %1510
      %vm1512 = vcmp.lt.s32.totalorder %v497, 65
      %v1513 = vsel %vm1512, %v1509, %v1511
      %v1514 = vsel %vm1512, %v1511, %v1509
      %s1515 = scalar_lea.vmem %s8, 20
      %v1516 = vld [vmem:[%s1515] ss:$8 sm:$0x3]
      %v1518 = vlaneseq
      %v1519 = vshrl.u32 %v1518, 7
      %v1520 = vsub.s32 0, %v1519
      %v1521 = vrot.slane %v1516, %v1520
      %v1522 = vlaneseq
      %v1523 = vshrl.u32 %v1522, 7
      %v1524 = vsub.s32 1, %v1523
      %v1525 = vrot.slane %v1516, %v1524
      %v1528 = vmul.f32 %v1514, %v1521
      %v1529 = vmul.f32 %v1513, %v1525
      %v1530 = vadd.f32 %v1498, %v1528
      %v1531 = vadd.f32 %v1500, %v1529
      %1532 = vrot.lane.b32.xlu0 %v1480, 64
      %v1533 = vpop.permute.xlu0 %1532
      %1534 = vrot.lane.b32.xlu0 %v1482, 64
      %v1535 = vpop.permute.xlu0 %1534
      %vm1536 = vcmp.lt.s32.totalorder %v497, 64
      %v1537 = vsel %vm1536, %v1533, %v1535
      %v1538 = vsel %vm1536, %v1535, %v1533
      %s1539 = scalar_lea.vmem %s8, 21
      %v1540 = vld [vmem:[%s1539] ss:$8 sm:$0x3]
      %v1542 = vlaneseq
      %v1543 = vshrl.u32 %v1542, 7
      %v1544 = vsub.s32 0, %v1543
      %v1545 = vrot.slane %v1540, %v1544
      %v1546 = vlaneseq
      %v1547 = vshrl.u32 %v1546, 7
      %v1548 = vsub.s32 1, %v1547
      %v1549 = vrot.slane %v1540, %v1548
      %v1552 = vmul.f32 %v1538, %v1545
      %v1553 = vmul.f32 %v1537, %v1549
      %v1554 = vadd.f32 %v1530, %v1552
      %v1555 = vadd.f32 %v1531, %v1553
      %1556 = vrot.lane.b32.xlu0 %v1486, 63
      %v1557 = vpop.permute.xlu0 %1556
      %1558 = vrot.lane.b32.xlu0 %v1488, 63
      %v1559 = vpop.permute.xlu0 %1558
      %vm1560 = vcmp.lt.s32.totalorder %v497, 63
      %v1561 = vsel %vm1560, %v1557, %v1559
      %v1562 = vsel %vm1560, %v1559, %v1557
      %s1563 = scalar_lea.vmem %s8, 22
      %v1564 = vld [vmem:[%s1563] ss:$8 sm:$0x3]
      %v1566 = vlaneseq
      %v1567 = vshrl.u32 %v1566, 7
      %v1568 = vsub.s32 0, %v1567
      %v1569 = vrot.slane %v1564, %v1568
      %v1570 = vlaneseq
      %v1571 = vshrl.u32 %v1570, 7
      %v1572 = vsub.s32 1, %v1571
      %v1573 = vrot.slane %v1564, %v1572
      %v1576 = vmul.f32 %v1562, %v1569
      %v1577 = vmul.f32 %v1561, %v1573
      %v1578 = vadd.f32 %v1554, %v1576
      %v1579 = vadd.f32 %v1555, %v1577
      %1580 = vrot.lane.b32.xlu0 %v1492, 1
      %v1581 = vpop.permute.xlu0 %1580
      %1582 = vrot.lane.b32.xlu0 %v1494, 1
      %v1583 = vpop.permute.xlu0 %1582
      %v1584 = vsel %vm569, %v1581, %v1583
      %v1585 = vsel %vm569, %v1583, %v1581
      %s1586 = scalar_lea.vmem %s8, 23
      %v1587 = vld [vmem:[%s1586] ss:$8 sm:$0x3]
      %v1589 = vlaneseq
      %v1590 = vshrl.u32 %v1589, 7
      %v1591 = vsub.s32 0, %v1590
      %v1592 = vrot.slane %v1587, %v1591
      %v1593 = vlaneseq
      %v1594 = vshrl.u32 %v1593, 7
      %v1595 = vsub.s32 1, %v1594
      %v1596 = vrot.slane %v1587, %v1595
      %v1599 = vmul.f32 %v1585, %v1592
      %v1600 = vmul.f32 %v1584, %v1596
      %v1601 = vadd.f32 %v1578, %v1599
      %v1602 = vadd.f32 %v1579, %v1600
      %1603 = vrot.lane.b32.xlu0 %v1504, 127
      %v1604 = vpop.permute.xlu0 %1603
      %1605 = vrot.lane.b32.xlu0 %v1506, 127
      %v1606 = vpop.permute.xlu0 %1605
      %v1607 = vsel %vm593, %v1604, %v1606
      %v1608 = vsel %vm593, %v1606, %v1604
      %s1609 = scalar_lea.vmem %s8, 33
      %v1610 = vld [vmem:[%s1609] ss:$8 sm:$0x3]
      %v1612 = vlaneseq
      %v1613 = vshrl.u32 %v1612, 7
      %v1614 = vsub.s32 0, %v1613
      %v1615 = vrot.slane %v1610, %v1614
      %v1616 = vlaneseq
      %v1617 = vshrl.u32 %v1616, 7
      %v1618 = vsub.s32 1, %v1617
      %v1619 = vrot.slane %v1610, %v1618
      %v1622 = vmul.f32 %v1607, %v1615
      %v1623 = vmul.f32 %v1608, %v1619
      %v1624 = vadd.f32 %v1601, %v1622
      %v1625 = vadd.f32 %v1602, %v1623
      %v1626 = vld [vmem:[%s9] sm:$0xff]
      %v1627 = vld [vmem:[%s9 + $0x8] sm:$0xff]
      %v1628 = vld [vmem:[%s9 + $0x10] sm:$0xff]
      %v1629 = vld [vmem:[%s9 + $0x18] sm:$0xff]
      %v1630 = vld [vmem:[%s9 + $0x20] sm:$0xff]
      %v1631 = vld [vmem:[%s9 + $0x28] sm:$0xff]
      %v1632 = vld [vmem:[%s9 + $0x30] sm:$0xff]
      %v1633 = vld [vmem:[%s9 + $0x38] sm:$0xff]
      %v1634 = vld [vmem:[%s9 + $0x40] sm:$0xff]
      %v1635 = vld [vmem:[%s9 + $0x48] sm:$0xff]
      %v1636 = vld [vmem:[%s9 + $0x50] sm:$0xff]
      %v1637 = vld [vmem:[%s9 + $0x58] sm:$0xff]
      %v1638 = vld [vmem:[%s9 + $0x60] sm:$0xff]
      %v1639 = vld [vmem:[%s9 + $0x68] sm:$0xff]
      %v1640 = vld [vmem:[%s9 + $0x70] sm:$0xff]
      %v1641 = vld [vmem:[%s9 + $0x78] sm:$0xff]
      %v1642 = vld [vmem:[%s9 + $0x80] sm:$0xff]
      %v1643 = vld [vmem:[%s9 + $0x88] sm:$0xff]
      %v1644 = vld [vmem:[%s9 + $0x90] sm:$0xff]
      %v1645 = vld [vmem:[%s9 + $0x98] sm:$0xff]
      %v1646 = vld [vmem:[%s9 + $0xa0] sm:$0xff]
      %v1647 = vld [vmem:[%s9 + $0xa8] sm:$0xff]
      %v1648 = vld [vmem:[%s9 + $0xb0] sm:$0xff]
      %v1649 = vld [vmem:[%s9 + $0xb8] sm:$0xff]
      %v1650 = vld [vmem:[%s9 + $0xc0] sm:$0xff]
      %v1651 = vld [vmem:[%s9 + $0xc8] sm:$0xff]
      %v1652 = vld [vmem:[%s9 + $0xd0] sm:$0xff]
      %v1653 = vld [vmem:[%s9 + $0xd8] sm:$0xff]
      %v1654 = vld [vmem:[%s9 + $0xe0] sm:$0xff]
      %v1655 = vld [vmem:[%s9 + $0xe8] sm:$0xff]
      %v1656 = vld [vmem:[%s9 + $0xf0] sm:$0xff]
      %v1657 = vld [vmem:[%s9 + $0xf8] sm:$0xff]
      %v1658 = vld [vmem:[%s9 + $0x100] sm:$0xff]
      %v1659 = vld [vmem:[%s9 + $0x108] sm:$0xff]
      %v1660 = vld [vmem:[%s9 + $0x110] sm:$0xff]
      %v1661 = vld [vmem:[%s9 + $0x118] sm:$0xff]
      %v1662 = vld [vmem:[%s9 + $0x120] sm:$0xff]
      %v1663 = vld [vmem:[%s9 + $0x128] sm:$0xff]
      %v1664 = vld [vmem:[%s9 + $0x130] sm:$0xff]
      %v1665 = vld [vmem:[%s9 + $0x138] sm:$0xff]
      %v1666 = vld [vmem:[%s9 + $0x140] sm:$0xff]
      %v1667 = vld [vmem:[%s9 + $0x148] sm:$0xff]
      %v1668 = vld [vmem:[%s9 + $0x150] sm:$0xff]
      %v1669 = vld [vmem:[%s9 + $0x158] sm:$0xff]
      %v1670 = vld [vmem:[%s9 + $0x160] sm:$0xff]
      %v1671 = vld [vmem:[%s9 + $0x168] sm:$0xff]
      %v1672 = vld [vmem:[%s9 + $0x170] sm:$0xff]
      %v1673 = vld [vmem:[%s9 + $0x178] sm:$0xff]
      %v1674 = vld [vmem:[%s9 + $0x180] sm:$0xff]
      %v1675 = vld [vmem:[%s9 + $0x188] sm:$0xff]
      %v1676 = vld [vmem:[%s9 + $0x190] sm:$0xff]
      %v1677 = vld [vmem:[%s9 + $0x198] sm:$0xff]
      %v1678 = vld [vmem:[%s9 + $0x1a0] sm:$0xff]
      %v1679 = vld [vmem:[%s9 + $0x1a8] sm:$0xff]
      %v1680 = vld [vmem:[%s9 + $0x1b0] sm:$0xff]
      %v1681 = vld [vmem:[%s9 + $0x1b8] sm:$0xff]
      %v1682 = vld [vmem:[%s9 + $0x1c0] sm:$0xff]
      %v1683 = vld [vmem:[%s9 + $0x1c8] sm:$0xff]
      %v1684 = vld [vmem:[%s9 + $0x1d0] sm:$0xff]
      %v1685 = vld [vmem:[%s9 + $0x1d8] sm:$0xff]
      %v1686 = vld [vmem:[%s9 + $0x1e0] sm:$0xff]
      %v1687 = vld [vmem:[%s9 + $0x1e8] sm:$0xff]
      %v1688 = vld [vmem:[%s9 + $0x1f0] sm:$0xff]
      %v1689 = vld [vmem:[%s9 + $0x1f8] sm:$0xff]
      %1690 = vmatprep.subr.mxu0 %v1657
      %1691 = vmatpush1.msra.mxu0 %v1656
      %1692 = vmatprep.subr.mxu0 %v1655
      %1693 = vmatpush1.msra.mxu0 %v1654
      %1694 = vmatprep.subr.mxu0 %v1653
      %1695 = vmatpush1.msra.mxu0 %v1652
      %1696 = vmatprep.subr.mxu0 %v1651
      %1697 = vmatpush1.msra.mxu0 %v1650
      %1698 = vmatprep.subr.mxu0 %v1649
      %1699 = vmatpush1.msra.mxu0 %v1648
      %1700 = vmatprep.subr.mxu0 %v1647
      %1701 = vmatpush1.msra.mxu0 %v1646
      %1702 = vmatprep.subr.mxu0 %v1645
      %1703 = vmatpush1.msra.mxu0 %v1644
      %1704 = vmatprep.subr.mxu0 %v1643
      %1705 = vmatpush1.msra.mxu0 %v1642
      %1706 = vmatprep.subr.mxu0 %v1641
      %1707 = vmatpush1.msra.mxu0 %v1640
      %1708 = vmatprep.subr.mxu0 %v1639
      %1709 = vmatpush1.msra.mxu0 %v1638
      %1710 = vmatprep.subr.mxu0 %v1637
      %1711 = vmatpush1.msra.mxu0 %v1636
      %1712 = vmatprep.subr.mxu0 %v1635
      %1713 = vmatpush1.msra.mxu0 %v1634
      %1714 = vmatprep.subr.mxu0 %v1633
      %1715 = vmatpush1.msra.mxu0 %v1632
      %1716 = vmatprep.subr.mxu0 %v1631
      %1717 = vmatpush1.msra.mxu0 %v1630
      %1718 = vmatprep.subr.mxu0 %v1629
      %1719 = vmatpush1.msra.mxu0 %v1628
      %1720 = vmatprep.subr.mxu0 %v1627
      %1721 = vmatpush1.msra.mxu0 %v1626
      %1722 = vmatprep.subr.mxu0 %v1689
      %1723 = vmatpush2.msra.mxu0 %v1688
      %1724 = vmatprep.subr.mxu0 %v1687
      %1725 = vmatpush2.msra.mxu0 %v1686
      %1726 = vmatprep.subr.mxu0 %v1685
      %1727 = vmatpush2.msra.mxu0 %v1684
      %1728 = vmatprep.subr.mxu0 %v1683
      %1729 = vmatpush2.msra.mxu0 %v1682
      %1730 = vmatprep.subr.mxu0 %v1681
      %1731 = vmatpush2.msra.mxu0 %v1680
      %1732 = vmatprep.subr.mxu0 %v1679
      %1733 = vmatpush2.msra.mxu0 %v1678
      %1734 = vmatprep.subr.mxu0 %v1677
      %1735 = vmatpush2.msra.mxu0 %v1676
      %1736 = vmatprep.subr.mxu0 %v1675
      %1737 = vmatpush2.msra.mxu0 %v1674
      %1738 = vmatprep.subr.mxu0 %v1673
      %1739 = vmatpush2.msra.mxu0 %v1672
      %1740 = vmatprep.subr.mxu0 %v1671
      %1741 = vmatpush2.msra.mxu0 %v1670
      %1742 = vmatprep.subr.mxu0 %v1669
      %1743 = vmatpush2.msra.mxu0 %v1668
      %1744 = vmatprep.subr.mxu0 %v1667
      %1745 = vmatpush2.msra.mxu0 %v1666
      %1746 = vmatprep.subr.mxu0 %v1665
      %1747 = vmatpush2.msra.mxu0 %v1664
      %1748 = vmatprep.subr.mxu0 %v1663
      %1749 = vmatpush2.msra.mxu0 %v1662
      %1750 = vmatprep.subr.mxu0 %v1661
      %1751 = vmatpush2.msra.mxu0 %v1660
      %1752 = vmatprep.subr.mxu0 %v1659
      %1753 = vmatpush2.msra.mxu0 %v1658
      %1754 = vmatprep.mubr.f32.mxu0 %v1625
      %1755 = vmatmul.mubr.f32.gmra.mxu0 %v1624
      %v1756 = vpop.f32.mrf.mxu0
      %v1757 = vadd.f32 0.0, %v1756
      %v1758 = vpop.f32.mrf.mxu0
      %v1759 = vadd.f32 0.0, %v1758
      %1760 = vdwg.mxu0
      %v1761 = vsub.f32 %v1624, %v1757
      %v1762 = vsub.f32 %v1625, %v1759
      %v1763 = vmul.f32 %v1761, %v1761
      %v1764 = vmul.f32 %v1762, %v1762
      %1765 = vmatprep.subr.mxu0 %v1657
      %1766 = vmatpush1.msra.mxu0 %v1656
      %1767 = vmatprep.subr.mxu0 %v1655
      %1768 = vmatpush1.msra.mxu0 %v1654
      %1769 = vmatprep.subr.mxu0 %v1653
      %1770 = vmatpush1.msra.mxu0 %v1652
      %1771 = vmatprep.subr.mxu0 %v1651
      %1772 = vmatpush1.msra.mxu0 %v1650
      %1773 = vmatprep.subr.mxu0 %v1649
      %1774 = vmatpush1.msra.mxu0 %v1648
      %1775 = vmatprep.subr.mxu0 %v1647
      %1776 = vmatpush1.msra.mxu0 %v1646
      %1777 = vmatprep.subr.mxu0 %v1645
      %1778 = vmatpush1.msra.mxu0 %v1644
      %1779 = vmatprep.subr.mxu0 %v1643
      %1780 = vmatpush1.msra.mxu0 %v1642
      %1781 = vmatprep.subr.mxu0 %v1641
      %1782 = vmatpush1.msra.mxu0 %v1640
      %1783 = vmatprep.subr.mxu0 %v1639
      %1784 = vmatpush1.msra.mxu0 %v1638
      %1785 = vmatprep.subr.mxu0 %v1637
      %1786 = vmatpush1.msra.mxu0 %v1636
      %1787 = vmatprep.subr.mxu0 %v1635
      %1788 = vmatpush1.msra.mxu0 %v1634
      %1789 = vmatprep.subr.mxu0 %v1633
      %1790 = vmatpush1.msra.mxu0 %v1632
      %1791 = vmatprep.subr.mxu0 %v1631
      %1792 = vmatpush1.msra.mxu0 %v1630
      %1793 = vmatprep.subr.mxu0 %v1629
      %1794 = vmatpush1.msra.mxu0 %v1628
      %1795 = vmatprep.subr.mxu0 %v1627
      %1796 = vmatpush1.msra.mxu0 %v1626
      %1797 = vmatprep.subr.mxu0 %v1689
      %1798 = vmatpush2.msra.mxu0 %v1688
      %1799 = vmatprep.subr.mxu0 %v1687
      %1800 = vmatpush2.msra.mxu0 %v1686
      %1801 = vmatprep.subr.mxu0 %v1685
      %1802 = vmatpush2.msra.mxu0 %v1684
      %1803 = vmatprep.subr.mxu0 %v1683
      %1804 = vmatpush2.msra.mxu0 %v1682
      %1805 = vmatprep.subr.mxu0 %v1681
      %1806 = vmatpush2.msra.mxu0 %v1680
      %1807 = vmatprep.subr.mxu0 %v1679
      %1808 = vmatpush2.msra.mxu0 %v1678
      %1809 = vmatprep.subr.mxu0 %v1677
      %1810 = vmatpush2.msra.mxu0 %v1676
      %1811 = vmatprep.subr.mxu0 %v1675
      %1812 = vmatpush2.msra.mxu0 %v1674
      %1813 = vmatprep.subr.mxu0 %v1673
      %1814 = vmatpush2.msra.mxu0 %v1672
      %1815 = vmatprep.subr.mxu0 %v1671
      %1816 = vmatpush2.msra.mxu0 %v1670
      %1817 = vmatprep.subr.mxu0 %v1669
      %1818 = vmatpush2.msra.mxu0 %v1668
      %1819 = vmatprep.subr.mxu0 %v1667
      %1820 = vmatpush2.msra.mxu0 %v1666
      %1821 = vmatprep.subr.mxu0 %v1665
      %1822 = vmatpush2.msra.mxu0 %v1664
      %1823 = vmatprep.subr.mxu0 %v1663
      %1824 = vmatpush2.msra.mxu0 %v1662
      %1825 = vmatprep.subr.mxu0 %v1661
      %1826 = vmatpush2.msra.mxu0 %v1660
      %1827 = vmatprep.subr.mxu0 %v1659
      %1828 = vmatpush2.msra.mxu0 %v1658
      %1829 = vmatprep.mubr.f32.mxu0 %v1764
      %1830 = vmatmul.mubr.f32.gmra.mxu0 %v1763
      %v1831 = vpop.f32.mrf.mxu0
      %v1832 = vadd.f32 1e-05, %v1831
      %v1833 = vpop.f32.mrf.mxu0
      %v1834 = vadd.f32 1e-05, %v1833
      %1835 = vdwg.mxu0
      %v1836 = vrsqrt.pop %v1832
      %v1837 = vrsqrt.pop %v1834
      %v1838 = vmul.f32 %v1761, %v1836
      %v1839 = vmul.f32 %v1762, %v1837
      %s1840 = scalar_lea.vmem %s7, 4
      %v1841 = vld [vmem:[%s1840] ss:$8 sm:$0x3]
      %v1843 = vlaneseq
      %v1844 = vshrl.u32 %v1843, 7
      %v1845 = vsub.s32 0, %v1844
      %v1846 = vrot.slane %v1841, %v1845
      %v1847 = vlaneseq
      %v1848 = vshrl.u32 %v1847, 7
      %v1849 = vsub.s32 1, %v1848
      %v1850 = vrot.slane %v1841, %v1849
      %v1853 = vmul.f32 %v1838, %v1846
      %v1854 = vmul.f32 %v1839, %v1850
      %s1855 = scalar_lea.vmem %s7, 5
      %v1856 = vld [vmem:[%s1855] ss:$8 sm:$0x3]
      %v1858 = vlaneseq
      %v1859 = vshrl.u32 %v1858, 7
      %v1860 = vsub.s32 0, %v1859
      %v1861 = vrot.slane %v1856, %v1860
      %v1862 = vlaneseq
      %v1863 = vshrl.u32 %v1862, 7
      %v1864 = vsub.s32 1, %v1863
      %v1865 = vrot.slane %v1856, %v1864
      %v1868 = vadd.f32 %v1853, %v1861
      %v1869 = vadd.f32 %v1854, %v1865
      %v1870 = vld [vmem:[%s6] sm:$0xff]
      %vm1871 = vcmp.gt.f32.partialorder %v1868, 0.0
      %vm1872 = vcmp.gt.f32.partialorder %v1869, 0.0
      %1874 = vset.pattern.permute.xlu0 2
      %1875 = vperm.xlu0 %1874, %v1870
      %v1876 = vpop.permute.xlu0 %1875
      %v1878 = vmul.f32 %v1876, %v1868
      %v1879 = vmul.f32 %v1876, %v1869
      %v1880 = vsel %vm1871, %v1868, %v1878
      %v1881 = vsel %vm1872, %v1869, %v1879
      %1882 = vst [vmem:[#allocation2 + $0x10] sm:$0xff] %v1880
      %1883 = vst [vmem:[#allocation2 + $0x18] sm:$0xff] %v1881
      %v1884 = vld [vmem:[#allocation2 + $0x10] sm:$0xff]
      %v1885 = vld [vmem:[#allocation2 + $0x18] sm:$0xff]
      %v1886 = vld [vmem:[#allocation2 + $0x20] sm:$0xff]
      %v1887 = vld [vmem:[#allocation2 + $0x28] sm:$0xff]
      %v1888 = vld [vmem:[#allocation2 + $0x30] sm:$0xff]
      %v1889 = vld [vmem:[#allocation2 + $0x38] sm:$0xff]
      %v1890 = vld [vmem:[#allocation2 + $0x40] sm:$0xff]
      %v1891 = vld [vmem:[#allocation2 + $0x48] sm:$0xff]
      %v1892 = vld [vmem:[%s4] sm:$0xff]
      %v1893 = vld [vmem:[%s4 + $0x8] sm:$0xff]
      %v1894 = vld [vmem:[%s4 + $0x10] sm:$0xff]
      %v1895 = vld [vmem:[%s4 + $0x18] sm:$0xff]
      %v1896 = vld [vmem:[%s4 + $0x20] sm:$0xff]
      %v1897 = vld [vmem:[%s4 + $0x28] sm:$0xff]
      %vm1898 = vcmask 261120
      %v1900 = vsel %vm1898, %v1892, 0
      %v1903 = vsel %vm1898, %v1893, 0
      %v1906 = vsel %vm1898, %v1894, 0
      %v1909 = vsel %vm1898, %v1895, 0
      %v1912 = vsel %vm1898, %v1896, 0
      %v1915 = vsel %vm1898, %v1897, 0
      %1917 = vmatprep.subr.mxu0 0.0
      %1918 = vmatpush1.msra.mxu0 0.0
      %1919 = vmatprep.subr.mxu0 0.0
      %1920 = vmatpush1.msra.mxu0 0.0
      %1921 = vmatprep.subr.mxu0 0.0
      %1922 = vmatpush1.msra.mxu0 0.0
      %1923 = vmatprep.subr.mxu0 0.0
      %1924 = vmatpush1.msra.mxu0 0.0
      %1925 = vmatprep.subr.mxu0 0.0
      %1926 = vmatpush1.msra.mxu0 0.0
      %1927 = vmatprep.subr.mxu0 0.0
      %1928 = vmatpush1.msra.mxu0 0.0
      %1929 = vmatprep.subr.mxu0 0.0
      %1930 = vmatpush1.msra.mxu0 0.0
      %1931 = vmatprep.subr.mxu0 0.0
      %1932 = vmatpush1.msra.mxu0 0.0
      %1933 = vmatprep.subr.mxu0 0.0
      %1934 = vmatpush1.msra.mxu0 0.0
      %1935 = vmatprep.subr.mxu0 0.0
      %1936 = vmatpush1.msra.mxu0 0.0
      %1937 = vmatprep.subr.mxu0 0.0
      %1938 = vmatpush1.msra.mxu0 0.0
      %1939 = vmatprep.subr.mxu0 0.0
      %1940 = vmatpush1.msra.mxu0 0.0
      %1941 = vmatprep.subr.mxu0 %v1891
      %1942 = vmatpush1.msra.mxu0 %v1890
      %1943 = vmatprep.subr.mxu0 %v1889
      %1944 = vmatpush1.msra.mxu0 %v1888
      %1945 = vmatprep.subr.mxu0 %v1887
      %1946 = vmatpush1.msra.mxu0 %v1886
      %1947 = vmatprep.subr.mxu0 %v1885
      %1948 = vmatpush1.msra.mxu0 %v1884
      %1949 = vmatprep.subr.mxu0 0.0
      %1950 = vmatpush2.msra.mxu0 0.0
      %1951 = vmatprep.subr.mxu0 0.0
      %1952 = vmatpush2.msra.mxu0 0.0
      %1953 = vmatprep.subr.mxu0 0.0
      %1954 = vmatpush2.msra.mxu0 0.0
      %1955 = vmatprep.subr.mxu0 0.0
      %1956 = vmatpush2.msra.mxu0 0.0
      %1957 = vmatprep.subr.mxu0 0.0
      %1958 = vmatpush2.msra.mxu0 0.0
      %1959 = vmatprep.subr.mxu0 0.0
      %1960 = vmatpush2.msra.mxu0 0.0
      %1961 = vmatprep.subr.mxu0 0.0
      %1962 = vmatpush2.msra.mxu0 0.0
      %1963 = vmatprep.subr.mxu0 0.0
      %1964 = vmatpush2.msra.mxu0 0.0
      %1965 = vmatprep.subr.mxu0 0.0
      %1966 = vmatpush2.msra.mxu0 0.0
      %1967 = vmatprep.subr.mxu0 0.0
      %1968 = vmatpush2.msra.mxu0 0.0
      %1969 = vmatprep.subr.mxu0 0.0
      %1970 = vmatpush2.msra.mxu0 0.0
      %1971 = vmatprep.subr.mxu0 0.0
      %1972 = vmatpush2.msra.mxu0 0.0
      %1973 = vmatprep.subr.mxu0 0.0
      %1974 = vmatpush2.msra.mxu0 0.0
      %1975 = vmatprep.subr.mxu0 0.0
      %1976 = vmatpush2.msra.mxu0 0.0
      %1977 = vmatprep.subr.mxu0 0.0
      %1978 = vmatpush2.msra.mxu0 0.0
      %1979 = vmatprep.subr.mxu0 0.0
      %1980 = vmatpush2.msra.mxu0 0.0
      %1981 = vmatprep.mubr.f32.mxu0 0.0
      %1982 = vmatmul.mubr.f32.gmra.mxu0 %v1900
      %v1983 = vpop.f32.mrf.mxu0
      %v1984 = vadd.f32 0.0, %v1983
      %v1985 = vpop.f32.mrf.mxu0
      %v1986 = vadd.f32 0.0, %v1985
      %1987 = vmatprep.mubr.f32.mxu0 0.0
      %1988 = vmatmul.mubr.f32.gmra.mxu0 %v1903
      %v1989 = vpop.f32.mrf.mxu0
      %v1990 = vadd.f32 0.0, %v1989
      %v1991 = vpop.f32.mrf.mxu0
      %v1992 = vadd.f32 0.0, %v1991
      %1993 = vmatprep.mubr.f32.mxu0 0.0
      %1994 = vmatmul.mubr.f32.gmra.mxu0 %v1906
      %v1995 = vpop.f32.mrf.mxu0
      %v1996 = vadd.f32 0.0, %v1995
      %v1997 = vpop.f32.mrf.mxu0
      %v1998 = vadd.f32 0.0, %v1997
      %1999 = vmatprep.mubr.f32.mxu0 0.0
      %2000 = vmatmul.mubr.f32.gmra.mxu0 %v1909
      %v2001 = vpop.f32.mrf.mxu0
      %v2002 = vadd.f32 0.0, %v2001
      %v2003 = vpop.f32.mrf.mxu0
      %v2004 = vadd.f32 0.0, %v2003
      %2005 = vmatprep.mubr.f32.mxu0 0.0
      %2006 = vmatmul.mubr.f32.gmra.mxu0 %v1912
      %v2007 = vpop.f32.mrf.mxu0
      %v2008 = vadd.f32 0.0, %v2007
      %v2009 = vpop.f32.mrf.mxu0
      %v2010 = vadd.f32 0.0, %v2009
      %2011 = vmatprep.mubr.f32.mxu0 0.0
      %2012 = vmatmul.mubr.f32.gmra.mxu0 %v1915
      %v2013 = vpop.f32.mrf.mxu0
      %v2014 = vadd.f32 0.0, %v2013
      %v2015 = vpop.f32.mrf.mxu0
      %v2016 = vadd.f32 0.0, %v2015
      %2017 = vdwg.mxu0
      %2018 = vrot.lane.b32.xlu0 %v1984, 1
      %v2019 = vpop.permute.xlu0 %2018
      %2020 = vrot.lane.b32.xlu0 %v1986, 1
      %v2021 = vpop.permute.xlu0 %2020
      %v2022 = vsel %vm569, %v2019, %v2021
      %v2023 = vsel %vm569, %v2021, %v2019
      %s2024 = scalar_lea.vmem %s8, 34
      %v2025 = vld [vmem:[%s2024] ss:$8 sm:$0x3]
      %v2027 = vlaneseq
      %v2028 = vshrl.u32 %v2027, 7
      %v2029 = vsub.s32 0, %v2028
      %v2030 = vrot.slane %v2025, %v2029
      %v2031 = vlaneseq
      %v2032 = vshrl.u32 %v2031, 7
      %v2033 = vsub.s32 1, %v2032
      %v2034 = vrot.slane %v2025, %v2033
      %v2037 = vmul.f32 %v2022, %v2030
      %v2038 = vmul.f32 %v2023, %v2034
      %v2039 = vadd.f32 %v2008, %v2037
      %v2040 = vadd.f32 %v2010, %v2038
      %s2041 = scalar_lea.vmem %s8, 35
      %v2042 = vld [vmem:[%s2041] ss:$8 sm:$0x3]
      %v2044 = vlaneseq
      %v2045 = vshrl.u32 %v2044, 7
      %v2046 = vsub.s32 0, %v2045
      %v2047 = vrot.slane %v2042, %v2046
      %v2048 = vlaneseq
      %v2049 = vshrl.u32 %v2048, 7
      %v2050 = vsub.s32 1, %v2049
      %v2051 = vrot.slane %v2042, %v2050
      %v2054 = vmul.f32 %v1992, %v2047
      %v2055 = vmul.f32 %v1990, %v2051
      %v2056 = vadd.f32 %v2039, %v2054
      %v2057 = vadd.f32 %v2040, %v2055
      %2058 = vrot.lane.b32.xlu0 %v1996, 127
      %v2059 = vpop.permute.xlu0 %2058
      %2060 = vrot.lane.b32.xlu0 %v1998, 127
      %v2061 = vpop.permute.xlu0 %2060
      %v2062 = vsel %vm593, %v2059, %v2061
      %v2063 = vsel %vm593, %v2061, %v2059
      %s2064 = scalar_lea.vmem %s8, 36
      %v2065 = vld [vmem:[%s2064] ss:$8 sm:$0x3]
      %v2067 = vlaneseq
      %v2068 = vshrl.u32 %v2067, 7
      %v2069 = vsub.s32 0, %v2068
      %v2070 = vrot.slane %v2065, %v2069
      %v2071 = vlaneseq
      %v2072 = vshrl.u32 %v2071, 7
      %v2073 = vsub.s32 1, %v2072
      %v2074 = vrot.slane %v2065, %v2073
      %v2077 = vmul.f32 %v2063, %v2070
      %v2078 = vmul.f32 %v2062, %v2074
      %v2079 = vadd.f32 %v2056, %v2077
      %v2080 = vadd.f32 %v2057, %v2078
      %2081 = vrot.lane.b32.xlu0 %v2002, 1
      %v2082 = vpop.permute.xlu0 %2081
      %2083 = vrot.lane.b32.xlu0 %v2004, 1
      %v2084 = vpop.permute.xlu0 %2083
      %v2085 = vsel %vm569, %v2082, %v2084
      %v2086 = vsel %vm569, %v2084, %v2082
      %s2087 = scalar_lea.vmem %s8, 37
      %v2088 = vld [vmem:[%s2087] ss:$8 sm:$0x3]
      %v2090 = vlaneseq
      %v2091 = vshrl.u32 %v2090, 7
      %v2092 = vsub.s32 0, %v2091
      %v2093 = vrot.slane %v2088, %v2092
      %v2094 = vlaneseq
      %v2095 = vshrl.u32 %v2094, 7
      %v2096 = vsub.s32 1, %v2095
      %v2097 = vrot.slane %v2088, %v2096
      %v2100 = vmul.f32 %v2086, %v2093
      %v2101 = vmul.f32 %v2085, %v2097
      %v2102 = vadd.f32 %v2079, %v2100
      %v2103 = vadd.f32 %v2080, %v2101
      %2104 = vrot.lane.b32.xlu0 %v2014, 127
      %v2105 = vpop.permute.xlu0 %2104
      %2106 = vrot.lane.b32.xlu0 %v2016, 127
      %v2107 = vpop.permute.xlu0 %2106
      %v2108 = vsel %vm593, %v2105, %v2107
      %v2109 = vsel %vm593, %v2107, %v2105
      %s2110 = scalar_lea.vmem %s8, 39
      %v2111 = vld [vmem:[%s2110] ss:$8 sm:$0x3]
      %v2113 = vlaneseq
      %v2114 = vshrl.u32 %v2113, 7
      %v2115 = vsub.s32 0, %v2114
      %v2116 = vrot.slane %v2111, %v2115
      %v2117 = vlaneseq
      %v2118 = vshrl.u32 %v2117, 7
      %v2119 = vsub.s32 1, %v2118
      %v2120 = vrot.slane %v2111, %v2119
      %v2123 = vmul.f32 %v2108, %v2116
      %v2124 = vmul.f32 %v2109, %v2120
      %v2125 = vadd.f32 %v2102, %v2123
      %v2126 = vadd.f32 %v2103, %v2124
      %v2127 = vld [vmem:[%s9] sm:$0xff]
      %v2128 = vld [vmem:[%s9 + $0x8] sm:$0xff]
      %v2129 = vld [vmem:[%s9 + $0x10] sm:$0xff]
      %v2130 = vld [vmem:[%s9 + $0x18] sm:$0xff]
      %v2131 = vld [vmem:[%s9 + $0x20] sm:$0xff]
      %v2132 = vld [vmem:[%s9 + $0x28] sm:$0xff]
      %v2133 = vld [vmem:[%s9 + $0x30] sm:$0xff]
      %v2134 = vld [vmem:[%s9 + $0x38] sm:$0xff]
      %v2135 = vld [vmem:[%s9 + $0x40] sm:$0xff]
      %v2136 = vld [vmem:[%s9 + $0x48] sm:$0xff]
      %v2137 = vld [vmem:[%s9 + $0x50] sm:$0xff]
      %v2138 = vld [vmem:[%s9 + $0x58] sm:$0xff]
      %v2139 = vld [vmem:[%s9 + $0x60] sm:$0xff]
      %v2140 = vld [vmem:[%s9 + $0x68] sm:$0xff]
      %v2141 = vld [vmem:[%s9 + $0x70] sm:$0xff]
      %v2142 = vld [vmem:[%s9 + $0x78] sm:$0xff]
      %v2143 = vld [vmem:[%s9 + $0x80] sm:$0xff]
      %v2144 = vld [vmem:[%s9 + $0x88] sm:$0xff]
      %v2145 = vld [vmem:[%s9 + $0x90] sm:$0xff]
      %v2146 = vld [vmem:[%s9 + $0x98] sm:$0xff]
      %v2147 = vld [vmem:[%s9 + $0xa0] sm:$0xff]
      %v2148 = vld [vmem:[%s9 + $0xa8] sm:$0xff]
      %v2149 = vld [vmem:[%s9 + $0xb0] sm:$0xff]
      %v2150 = vld [vmem:[%s9 + $0xb8] sm:$0xff]
      %v2151 = vld [vmem:[%s9 + $0xc0] sm:$0xff]
      %v2152 = vld [vmem:[%s9 + $0xc8] sm:$0xff]
      %v2153 = vld [vmem:[%s9 + $0xd0] sm:$0xff]
      %v2154 = vld [vmem:[%s9 + $0xd8] sm:$0xff]
      %v2155 = vld [vmem:[%s9 + $0xe0] sm:$0xff]
      %v2156 = vld [vmem:[%s9 + $0xe8] sm:$0xff]
      %v2157 = vld [vmem:[%s9 + $0xf0] sm:$0xff]
      %v2158 = vld [vmem:[%s9 + $0xf8] sm:$0xff]
      %v2159 = vld [vmem:[%s9 + $0x100] sm:$0xff]
      %v2160 = vld [vmem:[%s9 + $0x108] sm:$0xff]
      %v2161 = vld [vmem:[%s9 + $0x110] sm:$0xff]
      %v2162 = vld [vmem:[%s9 + $0x118] sm:$0xff]
      %v2163 = vld [vmem:[%s9 + $0x120] sm:$0xff]
      %v2164 = vld [vmem:[%s9 + $0x128] sm:$0xff]
      %v2165 = vld [vmem:[%s9 + $0x130] sm:$0xff]
      %v2166 = vld [vmem:[%s9 + $0x138] sm:$0xff]
      %v2167 = vld [vmem:[%s9 + $0x140] sm:$0xff]
      %v2168 = vld [vmem:[%s9 + $0x148] sm:$0xff]
      %v2169 = vld [vmem:[%s9 + $0x150] sm:$0xff]
      %v2170 = vld [vmem:[%s9 + $0x158] sm:$0xff]
      %v2171 = vld [vmem:[%s9 + $0x160] sm:$0xff]
      %v2172 = vld [vmem:[%s9 + $0x168] sm:$0xff]
      %v2173 = vld [vmem:[%s9 + $0x170] sm:$0xff]
      %v2174 = vld [vmem:[%s9 + $0x178] sm:$0xff]
      %v2175 = vld [vmem:[%s9 + $0x180] sm:$0xff]
      %v2176 = vld [vmem:[%s9 + $0x188] sm:$0xff]
      %v2177 = vld [vmem:[%s9 + $0x190] sm:$0xff]
      %v2178 = vld [vmem:[%s9 + $0x198] sm:$0xff]
      %v2179 = vld [vmem:[%s9 + $0x1a0] sm:$0xff]
      %v2180 = vld [vmem:[%s9 + $0x1a8] sm:$0xff]
      %v2181 = vld [vmem:[%s9 + $0x1b0] sm:$0xff]
      %v2182 = vld [vmem:[%s9 + $0x1b8] sm:$0xff]
      %v2183 = vld [vmem:[%s9 + $0x1c0] sm:$0xff]
      %v2184 = vld [vmem:[%s9 + $0x1c8] sm:$0xff]
      %v2185 = vld [vmem:[%s9 + $0x1d0] sm:$0xff]
      %v2186 = vld [vmem:[%s9 + $0x1d8] sm:$0xff]
      %v2187 = vld [vmem:[%s9 + $0x1e0] sm:$0xff]
      %v2188 = vld [vmem:[%s9 + $0x1e8] sm:$0xff]
      %v2189 = vld [vmem:[%s9 + $0x1f0] sm:$0xff]
      %v2190 = vld [vmem:[%s9 + $0x1f8] sm:$0xff]
      %2191 = vmatprep.subr.mxu0 %v2158
      %2192 = vmatpush1.msra.mxu0 %v2157
      %2193 = vmatprep.subr.mxu0 %v2156
      %2194 = vmatpush1.msra.mxu0 %v2155
      %2195 = vmatprep.subr.mxu0 %v2154
      %2196 = vmatpush1.msra.mxu0 %v2153
      %2197 = vmatprep.subr.mxu0 %v2152
      %2198 = vmatpush1.msra.mxu0 %v2151
      %2199 = vmatprep.subr.mxu0 %v2150
      %2200 = vmatpush1.msra.mxu0 %v2149
      %2201 = vmatprep.subr.mxu0 %v2148
      %2202 = vmatpush1.msra.mxu0 %v2147
      %2203 = vmatprep.subr.mxu0 %v2146
      %2204 = vmatpush1.msra.mxu0 %v2145
      %2205 = vmatprep.subr.mxu0 %v2144
      %2206 = vmatpush1.msra.mxu0 %v2143
      %2207 = vmatprep.subr.mxu0 %v2142
      %2208 = vmatpush1.msra.mxu0 %v2141
      %2209 = vmatprep.subr.mxu0 %v2140
      %2210 = vmatpush1.msra.mxu0 %v2139
      %2211 = vmatprep.subr.mxu0 %v2138
      %2212 = vmatpush1.msra.mxu0 %v2137
      %2213 = vmatprep.subr.mxu0 %v2136
      %2214 = vmatpush1.msra.mxu0 %v2135
      %2215 = vmatprep.subr.mxu0 %v2134
      %2216 = vmatpush1.msra.mxu0 %v2133
      %2217 = vmatprep.subr.mxu0 %v2132
      %2218 = vmatpush1.msra.mxu0 %v2131
      %2219 = vmatprep.subr.mxu0 %v2130
      %2220 = vmatpush1.msra.mxu0 %v2129
      %2221 = vmatprep.subr.mxu0 %v2128
      %2222 = vmatpush1.msra.mxu0 %v2127
      %2223 = vmatprep.subr.mxu0 %v2190
      %2224 = vmatpush2.msra.mxu0 %v2189
      %2225 = vmatprep.subr.mxu0 %v2188
      %2226 = vmatpush2.msra.mxu0 %v2187
      %2227 = vmatprep.subr.mxu0 %v2186
      %2228 = vmatpush2.msra.mxu0 %v2185
      %2229 = vmatprep.subr.mxu0 %v2184
      %2230 = vmatpush2.msra.mxu0 %v2183
      %2231 = vmatprep.subr.mxu0 %v2182
      %2232 = vmatpush2.msra.mxu0 %v2181
      %2233 = vmatprep.subr.mxu0 %v2180
      %2234 = vmatpush2.msra.mxu0 %v2179
      %2235 = vmatprep.subr.mxu0 %v2178
      %2236 = vmatpush2.msra.mxu0 %v2177
      %2237 = vmatprep.subr.mxu0 %v2176
      %2238 = vmatpush2.msra.mxu0 %v2175
      %2239 = vmatprep.subr.mxu0 %v2174
      %2240 = vmatpush2.msra.mxu0 %v2173
      %2241 = vmatprep.subr.mxu0 %v2172
      %2242 = vmatpush2.msra.mxu0 %v2171
      %2243 = vmatprep.subr.mxu0 %v2170
      %2244 = vmatpush2.msra.mxu0 %v2169
      %2245 = vmatprep.subr.mxu0 %v2168
      %2246 = vmatpush2.msra.mxu0 %v2167
      %2247 = vmatprep.subr.mxu0 %v2166
      %2248 = vmatpush2.msra.mxu0 %v2165
      %2249 = vmatprep.subr.mxu0 %v2164
      %2250 = vmatpush2.msra.mxu0 %v2163
      %2251 = vmatprep.subr.mxu0 %v2162
      %2252 = vmatpush2.msra.mxu0 %v2161
      %2253 = vmatprep.subr.mxu0 %v2160
      %2254 = vmatpush2.msra.mxu0 %v2159
      %2255 = vmatprep.mubr.f32.mxu0 %v2126
      %2256 = vmatmul.mubr.f32.gmra.mxu0 %v2125
      %v2257 = vpop.f32.mrf.mxu0
      %v2258 = vadd.f32 0.0, %v2257
      %v2259 = vpop.f32.mrf.mxu0
      %v2260 = vadd.f32 0.0, %v2259
      %2261 = vdwg.mxu0
      %v2262 = vsub.f32 %v2125, %v2258
      %v2263 = vsub.f32 %v2126, %v2260
      %v2264 = vmul.f32 %v2262, %v2262
      %v2265 = vmul.f32 %v2263, %v2263
      %2266 = vmatprep.subr.mxu0 %v2158
      %2267 = vmatpush1.msra.mxu0 %v2157
      %2268 = vmatprep.subr.mxu0 %v2156
      %2269 = vmatpush1.msra.mxu0 %v2155
      %2270 = vmatprep.subr.mxu0 %v2154
      %2271 = vmatpush1.msra.mxu0 %v2153
      %2272 = vmatprep.subr.mxu0 %v2152
      %2273 = vmatpush1.msra.mxu0 %v2151
      %2274 = vmatprep.subr.mxu0 %v2150
      %2275 = vmatpush1.msra.mxu0 %v2149
      %2276 = vmatprep.subr.mxu0 %v2148
      %2277 = vmatpush1.msra.mxu0 %v2147
      %2278 = vmatprep.subr.mxu0 %v2146
      %2279 = vmatpush1.msra.mxu0 %v2145
      %2280 = vmatprep.subr.mxu0 %v2144
      %2281 = vmatpush1.msra.mxu0 %v2143
      %2282 = vmatprep.subr.mxu0 %v2142
      %2283 = vmatpush1.msra.mxu0 %v2141
      %2284 = vmatprep.subr.mxu0 %v2140
      %2285 = vmatpush1.msra.mxu0 %v2139
      %2286 = vmatprep.subr.mxu0 %v2138
      %2287 = vmatpush1.msra.mxu0 %v2137
      %2288 = vmatprep.subr.mxu0 %v2136
      %2289 = vmatpush1.msra.mxu0 %v2135
      %2290 = vmatprep.subr.mxu0 %v2134
      %2291 = vmatpush1.msra.mxu0 %v2133
      %2292 = vmatprep.subr.mxu0 %v2132
      %2293 = vmatpush1.msra.mxu0 %v2131
      %2294 = vmatprep.subr.mxu0 %v2130
      %2295 = vmatpush1.msra.mxu0 %v2129
      %2296 = vmatprep.subr.mxu0 %v2128
      %2297 = vmatpush1.msra.mxu0 %v2127
      %2298 = vmatprep.subr.mxu0 %v2190
      %2299 = vmatpush2.msra.mxu0 %v2189
      %2300 = vmatprep.subr.mxu0 %v2188
      %2301 = vmatpush2.msra.mxu0 %v2187
      %2302 = vmatprep.subr.mxu0 %v2186
      %2303 = vmatpush2.msra.mxu0 %v2185
      %2304 = vmatprep.subr.mxu0 %v2184
      %2305 = vmatpush2.msra.mxu0 %v2183
      %2306 = vmatprep.subr.mxu0 %v2182
      %2307 = vmatpush2.msra.mxu0 %v2181
      %2308 = vmatprep.subr.mxu0 %v2180
      %2309 = vmatpush2.msra.mxu0 %v2179
      %2310 = vmatprep.subr.mxu0 %v2178
      %2311 = vmatpush2.msra.mxu0 %v2177
      %2312 = vmatprep.subr.mxu0 %v2176
      %2313 = vmatpush2.msra.mxu0 %v2175
      %2314 = vmatprep.subr.mxu0 %v2174
      %2315 = vmatpush2.msra.mxu0 %v2173
      %2316 = vmatprep.subr.mxu0 %v2172
      %2317 = vmatpush2.msra.mxu0 %v2171
      %2318 = vmatprep.subr.mxu0 %v2170
      %2319 = vmatpush2.msra.mxu0 %v2169
      %2320 = vmatprep.subr.mxu0 %v2168
      %2321 = vmatpush2.msra.mxu0 %v2167
      %2322 = vmatprep.subr.mxu0 %v2166
      %2323 = vmatpush2.msra.mxu0 %v2165
      %2324 = vmatprep.subr.mxu0 %v2164
      %2325 = vmatpush2.msra.mxu0 %v2163
      %2326 = vmatprep.subr.mxu0 %v2162
      %2327 = vmatpush2.msra.mxu0 %v2161
      %2328 = vmatprep.subr.mxu0 %v2160
      %2329 = vmatpush2.msra.mxu0 %v2159
      %2330 = vmatprep.mubr.f32.mxu0 %v2265
      %2331 = vmatmul.mubr.f32.gmra.mxu0 %v2264
      %v2332 = vpop.f32.mrf.mxu0
      %v2333 = vadd.f32 1e-05, %v2332
      %v2334 = vpop.f32.mrf.mxu0
      %v2335 = vadd.f32 1e-05, %v2334
      %2336 = vdwg.mxu0
      %v2337 = vrsqrt.pop %v2333
      %v2338 = vrsqrt.pop %v2335
      %v2339 = vmul.f32 %v2262, %v2337
      %v2340 = vmul.f32 %v2263, %v2338
      %s2341 = scalar_lea.vmem %s7, 6
      %v2342 = vld [vmem:[%s2341] ss:$8 sm:$0x3]
      %v2344 = vlaneseq
      %v2345 = vshrl.u32 %v2344, 7
      %v2346 = vsub.s32 0, %v2345
      %v2347 = vrot.slane %v2342, %v2346
      %v2348 = vlaneseq
      %v2349 = vshrl.u32 %v2348, 7
      %v2350 = vsub.s32 1, %v2349
      %v2351 = vrot.slane %v2342, %v2350
      %v2354 = vmul.f32 %v2339, %v2347
      %v2355 = vmul.f32 %v2340, %v2351
      %s2356 = scalar_lea.vmem %s7, 7
      %v2357 = vld [vmem:[%s2356] ss:$8 sm:$0x3]
      %v2359 = vlaneseq
      %v2360 = vshrl.u32 %v2359, 7
      %v2361 = vsub.s32 0, %v2360
      %v2362 = vrot.slane %v2357, %v2361
      %v2363 = vlaneseq
      %v2364 = vshrl.u32 %v2363, 7
      %v2365 = vsub.s32 1, %v2364
      %v2366 = vrot.slane %v2357, %v2365
      %v2369 = vadd.f32 %v2354, %v2362
      %v2370 = vadd.f32 %v2355, %v2366
      %v2371 = vld [vmem:[%s6] sm:$0xff]
      %vm2372 = vcmp.gt.f32.partialorder %v2369, 0.0
      %vm2373 = vcmp.gt.f32.partialorder %v2370, 0.0
      %2375 = vset.pattern.permute.xlu0 3
      %2376 = vperm.xlu0 %2375, %v2371
      %v2377 = vpop.permute.xlu0 %2376
      %v2379 = vmul.f32 %v2377, %v2369
      %v2380 = vmul.f32 %v2377, %v2370
      %v2381 = vsel %vm2372, %v2369, %v2379
      %v2382 = vsel %vm2373, %v2370, %v2380
      %2383 = vst [vmem:[#allocation2] sm:$0xff] %v2381
      %2384 = vst [vmem:[#allocation2 + $0x8] sm:$0xff] %v2382
      %v2385 = vld [vmem:[#allocation2] sm:$0xff]
      %v2386 = vld [vmem:[#allocation2 + $0x8] sm:$0xff]
      %v2387 = vld [vmem:[#allocation2 + $0x10] sm:$0xff]
      %v2388 = vld [vmem:[#allocation2 + $0x18] sm:$0xff]
      %v2389 = vld [vmem:[#allocation2 + $0x20] sm:$0xff]
      %v2390 = vld [vmem:[#allocation2 + $0x28] sm:$0xff]
      %v2391 = vld [vmem:[#allocation2 + $0x30] sm:$0xff]
      %v2392 = vld [vmem:[#allocation2 + $0x38] sm:$0xff]
      %v2393 = vld [vmem:[#allocation2 + $0x40] sm:$0xff]
      %v2394 = vld [vmem:[#allocation2 + $0x48] sm:$0xff]
      %v2395 = vld [vmem:[%s5] sm:$0xff]
      %v2396 = vld [vmem:[%s5 + $0x8] sm:$0xff]
      %v2397 = vld [vmem:[%s5 + $0x10] sm:$0xff]
      %v2398 = vld [vmem:[%s5 + $0x18] sm:$0xff]
      %v2399 = vld [vmem:[%s5 + $0x20] sm:$0xff]
      %v2400 = vld [vmem:[%s5 + $0x28] sm:$0xff]
      %vm2401 = vcmask 326656
      %v2403 = vsel %vm2401, %v2395, 0
      %v2406 = vsel %vm2401, %v2396, 0
      %v2409 = vsel %vm2401, %v2397, 0
      %v2412 = vsel %vm2401, %v2398, 0
      %v2415 = vsel %vm2401, %v2399, 0
      %v2418 = vsel %vm2401, %v2400, 0
      %2420 = vmatprep.subr.mxu0 0.0
      %2421 = vmatpush1.msra.mxu0 0.0
      %2422 = vmatprep.subr.mxu0 0.0
      %2423 = vmatpush1.msra.mxu0 0.0
      %2424 = vmatprep.subr.mxu0 0.0
      %2425 = vmatpush1.msra.mxu0 0.0
      %2426 = vmatprep.subr.mxu0 0.0
      %2427 = vmatpush1.msra.mxu0 0.0
      %2428 = vmatprep.subr.mxu0 0.0
      %2429 = vmatpush1.msra.mxu0 0.0
      %2430 = vmatprep.subr.mxu0 0.0
      %2431 = vmatpush1.msra.mxu0 0.0
      %2432 = vmatprep.subr.mxu0 0.0
      %2433 = vmatpush1.msra.mxu0 0.0
      %2434 = vmatprep.subr.mxu0 0.0
      %2435 = vmatpush1.msra.mxu0 0.0
      %2436 = vmatprep.subr.mxu0 0.0
      %2437 = vmatpush1.msra.mxu0 0.0
      %2438 = vmatprep.subr.mxu0 0.0
      %2439 = vmatpush1.msra.mxu0 0.0
      %2440 = vmatprep.subr.mxu0 0.0
      %2441 = vmatpush1.msra.mxu0 0.0
      %2442 = vmatprep.subr.mxu0 %v2394
      %2443 = vmatpush1.msra.mxu0 %v2393
      %2444 = vmatprep.subr.mxu0 %v2392
      %2445 = vmatpush1.msra.mxu0 %v2391
      %2446 = vmatprep.subr.mxu0 %v2390
      %2447 = vmatpush1.msra.mxu0 %v2389
      %2448 = vmatprep.subr.mxu0 %v2388
      %2449 = vmatpush1.msra.mxu0 %v2387
      %2450 = vmatprep.subr.mxu0 %v2386
      %2451 = vmatpush1.msra.mxu0 %v2385
      %2452 = vmatprep.subr.mxu0 0.0
      %2453 = vmatpush2.msra.mxu0 0.0
      %2454 = vmatprep.subr.mxu0 0.0
      %2455 = vmatpush2.msra.mxu0 0.0
      %2456 = vmatprep.subr.mxu0 0.0
      %2457 = vmatpush2.msra.mxu0 0.0
      %2458 = vmatprep.subr.mxu0 0.0
      %2459 = vmatpush2.msra.mxu0 0.0
      %2460 = vmatprep.subr.mxu0 0.0
      %2461 = vmatpush2.msra.mxu0 0.0
      %2462 = vmatprep.subr.mxu0 0.0
      %2463 = vmatpush2.msra.mxu0 0.0
      %2464 = vmatprep.subr.mxu0 0.0
      %2465 = vmatpush2.msra.mxu0 0.0
      %2466 = vmatprep.subr.mxu0 0.0
      %2467 = vmatpush2.msra.mxu0 0.0
      %2468 = vmatprep.subr.mxu0 0.0
      %2469 = vmatpush2.msra.mxu0 0.0
      %2470 = vmatprep.subr.mxu0 0.0
      %2471 = vmatpush2.msra.mxu0 0.0
      %2472 = vmatprep.subr.mxu0 0.0
      %2473 = vmatpush2.msra.mxu0 0.0
      %2474 = vmatprep.subr.mxu0 0.0
      %2475 = vmatpush2.msra.mxu0 0.0
      %2476 = vmatprep.subr.mxu0 0.0
      %2477 = vmatpush2.msra.mxu0 0.0
      %2478 = vmatprep.subr.mxu0 0.0
      %2479 = vmatpush2.msra.mxu0 0.0
      %2480 = vmatprep.subr.mxu0 0.0
      %2481 = vmatpush2.msra.mxu0 0.0
      %2482 = vmatprep.subr.mxu0 0.0
      %2483 = vmatpush2.msra.mxu0 0.0
      %2484 = vmatprep.mubr.f32.mxu0 0.0
      %2485 = vmatmul.mubr.f32.gmra.mxu0 %v2403
      %v2486 = vpop.f32.mrf.mxu0
      %v2487 = vadd.f32 0.0, %v2486
      %v2488 = vpop.f32.mrf.mxu0
      %v2489 = vadd.f32 0.0, %v2488
      %2490 = vmatprep.mubr.f32.mxu0 0.0
      %2491 = vmatmul.mubr.f32.gmra.mxu0 %v2406
      %v2492 = vpop.f32.mrf.mxu0
      %v2493 = vadd.f32 0.0, %v2492
      %v2494 = vpop.f32.mrf.mxu0
      %v2495 = vadd.f32 0.0, %v2494
      %2496 = vmatprep.mubr.f32.mxu0 0.0
      %2497 = vmatmul.mubr.f32.gmra.mxu0 %v2409
      %v2498 = vpop.f32.mrf.mxu0
      %v2499 = vadd.f32 0.0, %v2498
      %v2500 = vpop.f32.mrf.mxu0
      %v2501 = vadd.f32 0.0, %v2500
      %2502 = vmatprep.mubr.f32.mxu0 0.0
      %2503 = vmatmul.mubr.f32.gmra.mxu0 %v2412
      %v2504 = vpop.f32.mrf.mxu0
      %v2505 = vadd.f32 0.0, %v2504
      %v2506 = vpop.f32.mrf.mxu0
      %v2507 = vadd.f32 0.0, %v2506
      %2508 = vmatprep.mubr.f32.mxu0 0.0
      %2509 = vmatmul.mubr.f32.gmra.mxu0 %v2415
      %v2510 = vpop.f32.mrf.mxu0
      %v2511 = vadd.f32 0.0, %v2510
      %v2512 = vpop.f32.mrf.mxu0
      %v2513 = vadd.f32 0.0, %v2512
      %2514 = vmatprep.mubr.f32.mxu0 0.0
      %2515 = vmatmul.mubr.f32.gmra.mxu0 %v2418
      %v2516 = vpop.f32.mrf.mxu0
      %v2517 = vadd.f32 0.0, %v2516
      %v2518 = vpop.f32.mrf.mxu0
      %v2519 = vadd.f32 0.0, %v2518
      %2520 = vdwg.mxu0
      %2521 = vrot.lane.b32.xlu0 %v2487, 1
      %v2522 = vpop.permute.xlu0 %2521
      %2523 = vrot.lane.b32.xlu0 %v2489, 1
      %v2524 = vpop.permute.xlu0 %2523
      %v2525 = vsel %vm569, %v2522, %v2524
      %v2526 = vsel %vm569, %v2524, %v2522
      %s2527 = scalar_lea.vmem %s8, 48
      %v2528 = vld [vmem:[%s2527] ss:$8 sm:$0x3]
      %v2530 = vlaneseq
      %v2531 = vshrl.u32 %v2530, 7
      %v2532 = vsub.s32 0, %v2531
      %v2533 = vrot.slane %v2528, %v2532
      %v2534 = vlaneseq
      %v2535 = vshrl.u32 %v2534, 7
      %v2536 = vsub.s32 1, %v2535
      %v2537 = vrot.slane %v2528, %v2536
      %v2540 = vmul.f32 %v2526, %v2533
      %v2541 = vmul.f32 %v2525, %v2537
      %v2542 = vadd.f32 %v2511, %v2540
      %v2543 = vadd.f32 %v2513, %v2541
      %s2544 = scalar_lea.vmem %s8, 49
      %v2545 = vld [vmem:[%s2544] ss:$8 sm:$0x3]
      %v2547 = vlaneseq
      %v2548 = vshrl.u32 %v2547, 7
      %v2549 = vsub.s32 0, %v2548
      %v2550 = vrot.slane %v2545, %v2549
      %v2551 = vlaneseq
      %v2552 = vshrl.u32 %v2551, 7
      %v2553 = vsub.s32 1, %v2552
      %v2554 = vrot.slane %v2545, %v2553
      %v2557 = vmul.f32 %v2493, %v2550
      %v2558 = vmul.f32 %v2495, %v2554
      %v2559 = vadd.f32 %v2542, %v2557
      %v2560 = vadd.f32 %v2543, %v2558
      %2561 = vrot.lane.b32.xlu0 %v2499, 127
      %v2562 = vpop.permute.xlu0 %2561
      %2563 = vrot.lane.b32.xlu0 %v2501, 127
      %v2564 = vpop.permute.xlu0 %2563
      %v2565 = vsel %vm593, %v2562, %v2564
      %v2566 = vsel %vm593, %v2564, %v2562
      %s2567 = scalar_lea.vmem %s8, 50
      %v2568 = vld [vmem:[%s2567] ss:$8 sm:$0x3]
      %v2570 = vlaneseq
      %v2571 = vshrl.u32 %v2570, 7
      %v2572 = vsub.s32 0, %v2571
      %v2573 = vrot.slane %v2568, %v2572
      %v2574 = vlaneseq
      %v2575 = vshrl.u32 %v2574, 7
      %v2576 = vsub.s32 1, %v2575
      %v2577 = vrot.slane %v2568, %v2576
      %v2580 = vmul.f32 %v2565, %v2573
      %v2581 = vmul.f32 %v2566, %v2577
      %v2582 = vadd.f32 %v2559, %v2580
      %v2583 = vadd.f32 %v2560, %v2581
      %2584 = vrot.lane.b32.xlu0 %v2505, 1
      %v2585 = vpop.permute.xlu0 %2584
      %2586 = vrot.lane.b32.xlu0 %v2507, 1
      %v2587 = vpop.permute.xlu0 %2586
      %v2588 = vsel %vm569, %v2585, %v2587
      %v2589 = vsel %vm569, %v2587, %v2585
      %s2590 = scalar_lea.vmem %s8, 51
      %v2591 = vld [vmem:[%s2590] ss:$8 sm:$0x3]
      %v2593 = vlaneseq
      %v2594 = vshrl.u32 %v2593, 7
      %v2595 = vsub.s32 0, %v2594
      %v2596 = vrot.slane %v2591, %v2595
      %v2597 = vlaneseq
      %v2598 = vshrl.u32 %v2597, 7
      %v2599 = vsub.s32 1, %v2598
      %v2600 = vrot.slane %v2591, %v2599
      %v2603 = vmul.f32 %v2589, %v2596
      %v2604 = vmul.f32 %v2588, %v2600
      %v2605 = vadd.f32 %v2582, %v2603
      %v2606 = vadd.f32 %v2583, %v2604
      %2607 = vrot.lane.b32.xlu0 %v2517, 127
      %v2608 = vpop.permute.xlu0 %2607
      %2609 = vrot.lane.b32.xlu0 %v2519, 127
      %v2610 = vpop.permute.xlu0 %2609
      %v2611 = vsel %vm593, %v2608, %v2610
      %v2612 = vsel %vm593, %v2610, %v2608
      %s2613 = scalar_lea.vmem %s8, 53
      %v2614 = vld [vmem:[%s2613] ss:$8 sm:$0x3]
      %v2616 = vlaneseq
      %v2617 = vshrl.u32 %v2616, 7
      %v2618 = vsub.s32 0, %v2617
      %v2619 = vrot.slane %v2614, %v2618
      %v2620 = vlaneseq
      %v2621 = vshrl.u32 %v2620, 7
      %v2622 = vsub.s32 1, %v2621
      %v2623 = vrot.slane %v2614, %v2622
      %v2626 = vmul.f32 %v2611, %v2619
      %v2627 = vmul.f32 %v2612, %v2623
      %v2628 = vadd.f32 %v2605, %v2626
      %v2629 = vadd.f32 %v2606, %v2627
      %v2630 = vld [vmem:[%s9] sm:$0xff]
      %v2631 = vld [vmem:[%s9 + $0x8] sm:$0xff]
      %v2632 = vld [vmem:[%s9 + $0x10] sm:$0xff]
      %v2633 = vld [vmem:[%s9 + $0x18] sm:$0xff]
      %v2634 = vld [vmem:[%s9 + $0x20] sm:$0xff]
      %v2635 = vld [vmem:[%s9 + $0x28] sm:$0xff]
      %v2636 = vld [vmem:[%s9 + $0x30] sm:$0xff]
      %v2637 = vld [vmem:[%s9 + $0x38] sm:$0xff]
      %v2638 = vld [vmem:[%s9 + $0x40] sm:$0xff]
      %v2639 = vld [vmem:[%s9 + $0x48] sm:$0xff]
      %v2640 = vld [vmem:[%s9 + $0x50] sm:$0xff]
      %v2641 = vld [vmem:[%s9 + $0x58] sm:$0xff]
      %v2642 = vld [vmem:[%s9 + $0x60] sm:$0xff]
      %v2643 = vld [vmem:[%s9 + $0x68] sm:$0xff]
      %v2644 = vld [vmem:[%s9 + $0x70] sm:$0xff]
      %v2645 = vld [vmem:[%s9 + $0x78] sm:$0xff]
      %v2646 = vld [vmem:[%s9 + $0x80] sm:$0xff]
      %v2647 = vld [vmem:[%s9 + $0x88] sm:$0xff]
      %v2648 = vld [vmem:[%s9 + $0x90] sm:$0xff]
      %v2649 = vld [vmem:[%s9 + $0x98] sm:$0xff]
      %v2650 = vld [vmem:[%s9 + $0xa0] sm:$0xff]
      %v2651 = vld [vmem:[%s9 + $0xa8] sm:$0xff]
      %v2652 = vld [vmem:[%s9 + $0xb0] sm:$0xff]
      %v2653 = vld [vmem:[%s9 + $0xb8] sm:$0xff]
      %v2654 = vld [vmem:[%s9 + $0xc0] sm:$0xff]
      %v2655 = vld [vmem:[%s9 + $0xc8] sm:$0xff]
      %v2656 = vld [vmem:[%s9 + $0xd0] sm:$0xff]
      %v2657 = vld [vmem:[%s9 + $0xd8] sm:$0xff]
      %v2658 = vld [vmem:[%s9 + $0xe0] sm:$0xff]
      %v2659 = vld [vmem:[%s9 + $0xe8] sm:$0xff]
      %v2660 = vld [vmem:[%s9 + $0xf0] sm:$0xff]
      %v2661 = vld [vmem:[%s9 + $0xf8] sm:$0xff]
      %v2662 = vld [vmem:[%s9 + $0x100] sm:$0xff]
      %v2663 = vld [vmem:[%s9 + $0x108] sm:$0xff]
      %v2664 = vld [vmem:[%s9 + $0x110] sm:$0xff]
      %v2665 = vld [vmem:[%s9 + $0x118] sm:$0xff]
      %v2666 = vld [vmem:[%s9 + $0x120] sm:$0xff]
      %v2667 = vld [vmem:[%s9 + $0x128] sm:$0xff]
      %v2668 = vld [vmem:[%s9 + $0x130] sm:$0xff]
      %v2669 = vld [vmem:[%s9 + $0x138] sm:$0xff]
      %v2670 = vld [vmem:[%s9 + $0x140] sm:$0xff]
      %v2671 = vld [vmem:[%s9 + $0x148] sm:$0xff]
      %v2672 = vld [vmem:[%s9 + $0x150] sm:$0xff]
      %v2673 = vld [vmem:[%s9 + $0x158] sm:$0xff]
      %v2674 = vld [vmem:[%s9 + $0x160] sm:$0xff]
      %v2675 = vld [vmem:[%s9 + $0x168] sm:$0xff]
      %v2676 = vld [vmem:[%s9 + $0x170] sm:$0xff]
      %v2677 = vld [vmem:[%s9 + $0x178] sm:$0xff]
      %v2678 = vld [vmem:[%s9 + $0x180] sm:$0xff]
      %v2679 = vld [vmem:[%s9 + $0x188] sm:$0xff]
      %v2680 = vld [vmem:[%s9 + $0x190] sm:$0xff]
      %v2681 = vld [vmem:[%s9 + $0x198] sm:$0xff]
      %v2682 = vld [vmem:[%s9 + $0x1a0] sm:$0xff]
      %v2683 = vld [vmem:[%s9 + $0x1a8] sm:$0xff]
      %v2684 = vld [vmem:[%s9 + $0x1b0] sm:$0xff]
      %v2685 = vld [vmem:[%s9 + $0x1b8] sm:$0xff]
      %v2686 = vld [vmem:[%s9 + $0x1c0] sm:$0xff]
      %v2687 = vld [vmem:[%s9 + $0x1c8] sm:$0xff]
      %v2688 = vld [vmem:[%s9 + $0x1d0] sm:$0xff]
      %v2689 = vld [vmem:[%s9 + $0x1d8] sm:$0xff]
      %v2690 = vld [vmem:[%s9 + $0x1e0] sm:$0xff]
      %v2691 = vld [vmem:[%s9 + $0x1e8] sm:$0xff]
      %v2692 = vld [vmem:[%s9 + $0x1f0] sm:$0xff]
      %v2693 = vld [vmem:[%s9 + $0x1f8] sm:$0xff]
      %2694 = vmatprep.subr.mxu0 %v2661
      %2695 = vmatpush1.msra.mxu0 %v2660
      %2696 = vmatprep.subr.mxu0 %v2659
      %2697 = vmatpush1.msra.mxu0 %v2658
      %2698 = vmatprep.subr.mxu0 %v2657
      %2699 = vmatpush1.msra.mxu0 %v2656
      %2700 = vmatprep.subr.mxu0 %v2655
      %2701 = vmatpush1.msra.mxu0 %v2654
      %2702 = vmatprep.subr.mxu0 %v2653
      %2703 = vmatpush1.msra.mxu0 %v2652
      %2704 = vmatprep.subr.mxu0 %v2651
      %2705 = vmatpush1.msra.mxu0 %v2650
      %2706 = vmatprep.subr.mxu0 %v2649
      %2707 = vmatpush1.msra.mxu0 %v2648
      %2708 = vmatprep.subr.mxu0 %v2647
      %2709 = vmatpush1.msra.mxu0 %v2646
      %2710 = vmatprep.subr.mxu0 %v2645
      %2711 = vmatpush1.msra.mxu0 %v2644
      %2712 = vmatprep.subr.mxu0 %v2643
      %2713 = vmatpush1.msra.mxu0 %v2642
      %2714 = vmatprep.subr.mxu0 %v2641
      %2715 = vmatpush1.msra.mxu0 %v2640
      %2716 = vmatprep.subr.mxu0 %v2639
      %2717 = vmatpush1.msra.mxu0 %v2638
      %2718 = vmatprep.subr.mxu0 %v2637
      %2719 = vmatpush1.msra.mxu0 %v2636
      %2720 = vmatprep.subr.mxu0 %v2635
      %2721 = vmatpush1.msra.mxu0 %v2634
      %2722 = vmatprep.subr.mxu0 %v2633
      %2723 = vmatpush1.msra.mxu0 %v2632
      %2724 = vmatprep.subr.mxu0 %v2631
      %2725 = vmatpush1.msra.mxu0 %v2630
      %2726 = vmatprep.subr.mxu0 %v2693
      %2727 = vmatpush2.msra.mxu0 %v2692
      %2728 = vmatprep.subr.mxu0 %v2691
      %2729 = vmatpush2.msra.mxu0 %v2690
      %2730 = vmatprep.subr.mxu0 %v2689
      %2731 = vmatpush2.msra.mxu0 %v2688
      %2732 = vmatprep.subr.mxu0 %v2687
      %2733 = vmatpush2.msra.mxu0 %v2686
      %2734 = vmatprep.subr.mxu0 %v2685
      %2735 = vmatpush2.msra.mxu0 %v2684
      %2736 = vmatprep.subr.mxu0 %v2683
      %2737 = vmatpush2.msra.mxu0 %v2682
      %2738 = vmatprep.subr.mxu0 %v2681
      %2739 = vmatpush2.msra.mxu0 %v2680
      %2740 = vmatprep.subr.mxu0 %v2679
      %2741 = vmatpush2.msra.mxu0 %v2678
      %2742 = vmatprep.subr.mxu0 %v2677
      %2743 = vmatpush2.msra.mxu0 %v2676
      %2744 = vmatprep.subr.mxu0 %v2675
      %2745 = vmatpush2.msra.mxu0 %v2674
      %2746 = vmatprep.subr.mxu0 %v2673
      %2747 = vmatpush2.msra.mxu0 %v2672
      %2748 = vmatprep.subr.mxu0 %v2671
      %2749 = vmatpush2.msra.mxu0 %v2670
      %2750 = vmatprep.subr.mxu0 %v2669
      %2751 = vmatpush2.msra.mxu0 %v2668
      %2752 = vmatprep.subr.mxu0 %v2667
      %2753 = vmatpush2.msra.mxu0 %v2666
      %2754 = vmatprep.subr.mxu0 %v2665
      %2755 = vmatpush2.msra.mxu0 %v2664
      %2756 = vmatprep.subr.mxu0 %v2663
      %2757 = vmatpush2.msra.mxu0 %v2662
      %2758 = vmatprep.mubr.f32.mxu0 %v2629
      %2759 = vmatmul.mubr.f32.gmra.mxu0 %v2628
      %v2760 = vpop.f32.mrf.mxu0
      %v2761 = vadd.f32 0.0, %v2760
      %v2762 = vpop.f32.mrf.mxu0
      %v2763 = vadd.f32 0.0, %v2762
      %2764 = vdwg.mxu0
      %v2765 = vsub.f32 %v2628, %v2761
      %v2766 = vsub.f32 %v2629, %v2763
      %v2767 = vmul.f32 %v2765, %v2765
      %v2768 = vmul.f32 %v2766, %v2766
      %2769 = vmatprep.subr.mxu0 %v2661
      %2770 = vmatpush1.msra.mxu0 %v2660
      %2771 = vmatprep.subr.mxu0 %v2659
      %2772 = vmatpush1.msra.mxu0 %v2658
      %2773 = vmatprep.subr.mxu0 %v2657
      %2774 = vmatpush1.msra.mxu0 %v2656
      %2775 = vmatprep.subr.mxu0 %v2655
      %2776 = vmatpush1.msra.mxu0 %v2654
      %2777 = vmatprep.subr.mxu0 %v2653
      %2778 = vmatpush1.msra.mxu0 %v2652
      %2779 = vmatprep.subr.mxu0 %v2651
      %2780 = vmatpush1.msra.mxu0 %v2650
      %2781 = vmatprep.subr.mxu0 %v2649
      %2782 = vmatpush1.msra.mxu0 %v2648
      %2783 = vmatprep.subr.mxu0 %v2647
      %2784 = vmatpush1.msra.mxu0 %v2646
      %2785 = vmatprep.subr.mxu0 %v2645
      %2786 = vmatpush1.msra.mxu0 %v2644
      %2787 = vmatprep.subr.mxu0 %v2643
      %2788 = vmatpush1.msra.mxu0 %v2642
      %2789 = vmatprep.subr.mxu0 %v2641
      %2790 = vmatpush1.msra.mxu0 %v2640
      %2791 = vmatprep.subr.mxu0 %v2639
      %2792 = vmatpush1.msra.mxu0 %v2638
      %2793 = vmatprep.subr.mxu0 %v2637
      %2794 = vmatpush1.msra.mxu0 %v2636
      %2795 = vmatprep.subr.mxu0 %v2635
      %2796 = vmatpush1.msra.mxu0 %v2634
      %2797 = vmatprep.subr.mxu0 %v2633
      %2798 = vmatpush1.msra.mxu0 %v2632
      %2799 = vmatprep.subr.mxu0 %v2631
      %2800 = vmatpush1.msra.mxu0 %v2630
      %2801 = vmatprep.subr.mxu0 %v2693
      %2802 = vmatpush2.msra.mxu0 %v2692
      %2803 = vmatprep.subr.mxu0 %v2691
      %2804 = vmatpush2.msra.mxu0 %v2690
      %2805 = vmatprep.subr.mxu0 %v2689
      %2806 = vmatpush2.msra.mxu0 %v2688
      %2807 = vmatprep.subr.mxu0 %v2687
      %2808 = vmatpush2.msra.mxu0 %v2686
      %2809 = vmatprep.subr.mxu0 %v2685
      %2810 = vmatpush2.msra.mxu0 %v2684
      %2811 = vmatprep.subr.mxu0 %v2683
      %2812 = vmatpush2.msra.mxu0 %v2682
      %2813 = vmatprep.subr.mxu0 %v2681
      %2814 = vmatpush2.msra.mxu0 %v2680
      %2815 = vmatprep.subr.mxu0 %v2679
      %2816 = vmatpush2.msra.mxu0 %v2678
      %2817 = vmatprep.subr.mxu0 %v2677
      %2818 = vmatpush2.msra.mxu0 %v2676
      %2819 = vmatprep.subr.mxu0 %v2675
      %2820 = vmatpush2.msra.mxu0 %v2674
      %2821 = vmatprep.subr.mxu0 %v2673
      %2822 = vmatpush2.msra.mxu0 %v2672
      %2823 = vmatprep.subr.mxu0 %v2671
      %2824 = vmatpush2.msra.mxu0 %v2670
      %2825 = vmatprep.subr.mxu0 %v2669
      %2826 = vmatpush2.msra.mxu0 %v2668
      %2827 = vmatprep.subr.mxu0 %v2667
      %2828 = vmatpush2.msra.mxu0 %v2666
      %2829 = vmatprep.subr.mxu0 %v2665
      %2830 = vmatpush2.msra.mxu0 %v2664
      %2831 = vmatprep.subr.mxu0 %v2663
      %2832 = vmatpush2.msra.mxu0 %v2662
      %2833 = vmatprep.mubr.f32.mxu0 %v2768
      %2834 = vmatmul.mubr.f32.gmra.mxu0 %v2767
      %v2835 = vpop.f32.mrf.mxu0
      %v2836 = vadd.f32 1e-05, %v2835
      %v2837 = vpop.f32.mrf.mxu0
      %v2838 = vadd.f32 1e-05, %v2837
      %2839 = vdwg.mxu0
      %v2840 = vrsqrt.pop %v2836
      %v2841 = vrsqrt.pop %v2838
      %v2842 = vmul.f32 %v2765, %v2840
      %v2843 = vmul.f32 %v2766, %v2841
      %s2844 = scalar_lea.vmem %s7, 16
      %v2845 = vld [vmem:[%s2844] ss:$8 sm:$0x3]
      %v2847 = vlaneseq
      %v2848 = vshrl.u32 %v2847, 7
      %v2849 = vsub.s32 0, %v2848
      %v2850 = vrot.slane %v2845, %v2849
      %v2851 = vlaneseq
      %v2852 = vshrl.u32 %v2851, 7
      %v2853 = vsub.s32 1, %v2852
      %v2854 = vrot.slane %v2845, %v2853
      %v2857 = vmul.f32 %v2842, %v2850
      %v2858 = vmul.f32 %v2843, %v2854
      %s2859 = scalar_lea.vmem %s7, 17
      %v2860 = vld [vmem:[%s2859] ss:$8 sm:$0x3]
      %v2862 = vlaneseq
      %v2863 = vshrl.u32 %v2862, 7
      %v2864 = vsub.s32 0, %v2863
      %v2865 = vrot.slane %v2860, %v2864
      %v2866 = vlaneseq
      %v2867 = vshrl.u32 %v2866, 7
      %v2868 = vsub.s32 1, %v2867
      %v2869 = vrot.slane %v2860, %v2868
      %v2872 = vadd.f32 %v2857, %v2865
      %v2873 = vadd.f32 %v2858, %v2869
      %v2874 = vld [vmem:[%s6] sm:$0xff]
      %vm2875 = vcmp.gt.f32.partialorder %v2872, 0.0
      %vm2876 = vcmp.gt.f32.partialorder %v2873, 0.0
      %2878 = vset.pattern.permute.xlu0 4
      %2879 = vperm.xlu0 %2878, %v2874
      %v2880 = vpop.permute.xlu0 %2879
      %v2882 = vmul.f32 %v2880, %v2872
      %v2883 = vmul.f32 %v2880, %v2873
      %v2884 = vsel %vm2875, %v2872, %v2882
      %v2885 = vsel %vm2876, %v2873, %v2883
      %2886 = vst [vmem:[%s359] sm:$0xff] %v2884
      %2887 = vst [vmem:[%s359 + $0x8] sm:$0xff] %v2885
      %p2888 = scmp.lt.s32.totalorder %s21, 1
      %s2889 = scalar_select %p2888, %s21, 1
      %s2890 = smul.addr %s2889, 2
      %s2891 = smul.addr %s2890, 8
      %s2892 = scalar_lea.vmem %s10, %s2891
      // Predicated region
      $region61: #{dense_block_forward.1} parent=59 // pred_check
        %p2893 = pneg %p254
      $region62: #{dense_block_forward.1} parent=59 // pred_check_branch
        %2895 = sbr.rel (%p2893) target = $region64
      $region63: #{dense_block_forward.1} parent=59 // pred_region
        _
      $region64: #{dense_block_forward.1} parent=59 // pred_fallthru
        _
    $region60: #{dense_block_forward.1} parent=5 // pred_fallthru
      _
    %p2896 = scmp.le.s32.totalorder 2, %s16
    // Predicated region
    $region65: #{dense_block_forward.1} parent=5 // pred_check
      %p2897 = pneg %p2896
    $region66: #{dense_block_forward.1} parent=5 // pred_check_branch
      %2899 = sbr.rel (%p2897) target = $region68
    $region67: #{dense_block_forward.1} parent=5 // pred_region
      %s2900 = ssub.s32 %s16, 2
      // Predicated region
      $region69: #{dense_block_forward.1} parent=67 // pred_check
        %p2901 = pneg %p260
      $region70: #{dense_block_forward.1} parent=67 // pred_check_branch
        %2903 = sbr.rel (%p2901) target = $region72
      $region71: #{dense_block_forward.1} parent=67 // pred_region
        %p2904 = scmp.lt.s32.totalorder %s22, 1
        %s2905 = scalar_select %p2904, %s22, 1
        %s2906 = smul.addr %s2905, 2
        %s2907 = smul.addr %s2906, 8
        %s2908 = scalar_lea.vmem %s10, %s2907
      $region72: #{dense_block_forward.1} parent=67 // pred_fallthru
        _
    $region68: #{dense_block_forward.1} parent=5 // pred_fallthru
      _
  $region6: #{dense_block_forward.1} parent=0 // loop_footer
    %s20 = sadd.s32 1, %s16
  $region7: #{dense_block_forward.1} parent=0 // loop_footer_branch
    %15 = sbr.rel target = $region3
  $region8: #{dense_block_forward.1} parent=0 // loop_exit
    _

</llo_original>
